<compile_context>
chip_gen: v7x
topology: tpu7x:2x2x1
jax: 0.10.0
libtpu: 0.0.40
codegen_flags: <defaults>
</compile_context>

<pallas_src>
import functools

import jax
import jax.numpy as jnp
from jax.experimental import pallas as pl
from jax.experimental.pallas import tpu as pltpu  # noqa: F401 (kept for parity)

# ----------------------------- small config ---------------------------------
HIDDEN = 128          # hidden_size
INTERMEDIATE = 256    # intermediate_size
NUM_LAYERS = 2        # num_hidden_layers
NUM_HEADS = 4         # num_attention_heads
HEAD_DIM = HIDDEN // NUM_HEADS                     # 32
NUM_CHANNELS = 3
IMAGE_SIZE = 32
PATCH_SIZE = 8
NUM_PATCHES = (IMAGE_SIZE // PATCH_SIZE) ** 2      # 16
PATCH_K = NUM_CHANNELS * PATCH_SIZE * PATCH_SIZE   # 192
EPS = 1e-6
SCALE = HEAD_DIM ** -0.5


# ------------------------------ kernel helpers --------------------------------
def _layer_norm(v, g, b):
    mu = jnp.mean(v, axis=-1, keepdims=True)
    var = jnp.mean(jnp.square(v - mu), axis=-1, keepdims=True)
    return (v - mu) * jax.lax.rsqrt(var + EPS) * g + b


def _split_heads(t, batch):
    # (B*N, D) -> (H*B, N, HD). One lane slice per head + leading-axis stack.
    # The (B*N, HD) -> (B, N, HD) reshape only splits the leading dim at a
    # sublane-tile boundary (N = 16 rows), so it is layout-free.
    heads = [
        t[:, h * HEAD_DIM:(h + 1) * HEAD_DIM].reshape(batch, NUM_PATCHES, HEAD_DIM)
        for h in range(NUM_HEADS)
    ]
    return jnp.concatenate(heads, axis=0)


def _merge_heads(t, batch):
    # (H*B, N, HD) -> (B*N, D): one lane-concatenate per layer; result is fed
    # straight into the out-projection matmul (no VMEM scratch round-trip).
    heads = [
        t[h * batch:(h + 1) * batch].reshape(batch * NUM_PATCHES, HEAD_DIM)
        for h in range(NUM_HEADS)
    ]
    return jnp.concatenate(heads, axis=-1)


# ------------------------------ fused kernel ----------------------------------
def fused_siglip_kernel(patches_ref, pos_ref, pew_ref, peb_ref,
                        ln1g_ref, ln1b_ref, wqv_ref, bqv_ref,
                        wo_ref, bo_ref, ln2g_ref, ln2b_ref,
                        w1_ref, b1_ref, w2_ref, b2_ref,
                        postg_ref, postb_ref,
                        o_ref, *, batch):
    N, D = NUM_PATCHES, HIDDEN

    # ---- patch embedding: (B*N, K)bf16 @ (K, D)bf16 + conv_bias + pos_emb ----
    x = jnp.dot(patches_ref[...], pew_ref[...], preferred_element_type=jnp.float32)
    x = x + peb_ref[...]
    # broadcast add of the position embedding (no jnp.tile / concatenate):
    x = (x.reshape(batch, N, D) + pos_ref[...]).reshape(batch * N, D)   # f32

    for l in range(NUM_LAYERS):                                         # static unroll
        # ---- layer_norm1 + self-attention ----
        h = _layer_norm(x, ln1g_ref[l], ln1b_ref[l])
        hb = h.astype(jnp.bfloat16)
        # Fused Q/V projection: one (B*N, D) @ (D, 2D) matmul, then lane-aligned
        # 128-wide slices (free). NOTE: reference forward uses q_proj for BOTH
        # query and key, so K == Q and k_proj is omitted.
        qv = jnp.dot(hb, wqv_ref[l], preferred_element_type=jnp.float32) + bqv_ref[l]
        qvb = qv.astype(jnp.bfloat16)
        qh = _split_heads(qvb[:, :D], batch)        # (H*B, N, HD) bf16, also keys
        vh = _split_heads(qvb[:, D:], batch)        # (H*B, N, HD) bf16

        # one batched scores matmul + ONE softmax over all (batch, head) pairs
        s = jnp.einsum('bqd,bkd->bqk', qh, qh,
                       preferred_element_type=jnp.float32) * SCALE      # (H*B,N,N)
        s = s - jnp.max(s, axis=-1, keepdims=True)
        p = jnp.exp(s)
        p = p * pl.reciprocal(jnp.sum(p, axis=-1, keepdims=True), approx=True)
        o = jnp.einsum('bqk,bkd->bqd', p.astype(jnp.bfloat16), vh,
                       preferred_element_type=jnp.float32)              # (H*B,N,HD)

        attn = _merge_heads(o, batch)                                   # (B*N, D) f32
        attn = jnp.dot(attn.astype(jnp.bfloat16), wo_ref[l],
                       preferred_element_type=jnp.float32) + bo_ref[l]
        x = x + attn                                                    # residual add

        # ---- layer_norm2 + MLP ----
        h2 = _layer_norm(x, ln2g_ref[l], ln2b_ref[l])
        m = jnp.dot(h2.astype(jnp.bfloat16), w1_ref[l],
                    preferred_element_type=jnp.float32) + b1_ref[l]
        m = jax.nn.gelu(m, approximate=True)    # == torch gelu(approximate='tanh')
        m = jnp.dot(m.astype(jnp.bfloat16), w2_ref[l],
                    preferred_element_type=jnp.float32) + b2_ref[l]
        x = x + m

    # ---- post layernorm ----
    o_ref[...] = _layer_norm(x, postg_ref[...], postb_ref[...])


# ------------------------------ wrapper ---------------------------------------
def _extract_patches(pixel_values):
    # NCHW -> (B*N, C*P*P), patch pixels flattened in (C, P, P) order to match
    # the flattened Conv2d weight (D, C, P, P). Tiny plain-JAX glue. Cast to
    # bf16 here so the kernel's HBM->VMEM DMA is half the bytes and there is no
    # in-kernel pack of the (B*N, 192) tile.
    B, C, Himg, Wimg = pixel_values.shape
    P = PATCH_SIZE
    Hp, Wp = Himg // P, Wimg // P
    x = pixel_values.reshape(B, C, Hp, P, Wp, P)
    x = x.transpose(0, 2, 4, 1, 3, 5)              # (B, Hp, Wp, C, P, P)
    return x.reshape(B * Hp * Wp, C * P * P).astype(jnp.bfloat16)


@jax.jit
def siglip_vision_transformer(pixel_values, params):
    B = pixel_values.shape[0]
    patches = _extract_patches(pixel_values)       # (B*N, K) bf16
    bn = B * NUM_PATCHES
    # Single fused kernel, no grid: the whole batch is one (B*N, D) block and all
    # weights stay VMEM-resident for the entire forward pass.
    # NOTE (v7x / large batch): with 2 TensorCores (v7x) or to fill the 256-wide
    # MXU (v6e/v7x), a leading "parallel" grid axis over >=128-row batch chunks
    # would shard/fill better; at B=2 (32 token rows) the per-grid-step overhead
    # outweighs it, so we keep one block (single-TC v5e/v6e unaffected).
    flat = pl.pallas_call(
        functools.partial(fused_siglip_kernel, batch=B),
        out_shape=jax.ShapeDtypeStruct((bn, HIDDEN), jnp.float32),
    )(patches, params["pos_emb"], params["patch_w"], params["patch_b"],
      params["ln1_g"], params["ln1_b"],
      params["wqv"], params["bqv"],
      params["wo"], params["bo"],
      params["ln2_g"], params["ln2_b"],
      params["w1"], params["b1"], params["w2"], params["b2"],
      params["post_g"], params["post_b"])
    return flat.reshape(B, NUM_PATCHES, HIDDEN)


# --------------------------- deterministic params ------------------------------
def init_params(key):
    D, I, K, N, L = HIDDEN, INTERMEDIATE, PATCH_K, NUM_PATCHES, NUM_LAYERS

    def nrm(k, shape, dtype=jnp.float32, scale=0.02):
        return (scale * jax.random.normal(k, shape, jnp.float32)).astype(dtype)

    ks = iter(jax.random.split(key, 16))
    # Per-layer params stacked along a leading layer axis (static index in the
    # fused kernel). Matmul weights are bf16, stored transposed vs. torch Linear
    # (out,in) -> (in,out) so the kernel does x @ W. q_proj and v_proj are fused
    # column-wise into one (D, 2D) weight (q in cols [:D], v in cols [D:]).
    # k_proj exists in the module but is unused by the reference forward.
    return {
        # Conv2d weight (D, C, P, P) flattened -> (K, D) so kernel does x @ W.
        "patch_w": nrm(next(ks), (K, D), jnp.bfloat16),
        "patch_b": nrm(next(ks), (1, D)),
        "pos_emb": nrm(next(ks), (N, D)),
        "ln1_g": jnp.ones((L, 1, D), jnp.float32),
        "ln1_b": jnp.zeros((L, 1, D), jnp.float32),
        "wqv": nrm(next(ks), (L, D, 2 * D), jnp.bfloat16),
        "bqv": nrm(next(ks), (L, 1, 2 * D)),
        "wo": nrm(next(ks), (L, D, D), jnp.bfloat16), "bo": nrm(next(ks), (L, 1, D)),
        "ln2_g": jnp.ones((L, 1, D), jnp.float32),
        "ln2_b": jnp.zeros((L, 1, D), jnp.float32),
        "w1": nrm(next(ks), (L, D, I), jnp.bfloat16), "b1": nrm(next(ks), (L, 1, I)),
        "w2": nrm(next(ks), (L, I, D), jnp.bfloat16), "b2": nrm(next(ks), (L, 1, D)),
        "post_g": jnp.ones((1, D), jnp.float32),
        "post_b": jnp.zeros((1, D), jnp.float32),
    }


if __name__ == "__main__":
    key = jax.random.PRNGKey(0)
    kp, kx = jax.random.split(key)
    params = init_params(kp)

    pixel_values = jax.random.normal(
        kx, (2, NUM_CHANNELS, IMAGE_SIZE, IMAGE_SIZE), jnp.float32)

    out = siglip_vision_transformer(pixel_values, params)
    out = jax.block_until_ready(out)

    assert out.shape == (2, NUM_PATCHES, HIDDEN), out.shape
    assert jnp.all(jnp.isfinite(out))
    print("KERNEL_OK")
</pallas_src>

<mosaic_0001>
module attributes {stable_mosaic.version = 11 : i64} {
  func.func @fused_siglip_kernel(%arg0: memref<32x192xbf16, #tpu.memory_space<vmem>>, %arg1: memref<16x128xf32, #tpu.memory_space<vmem>>, %arg2: memref<192x128xbf16, #tpu.memory_space<vmem>>, %arg3: memref<1x128xf32, #tpu.memory_space<vmem>>, %arg4: memref<2x1x128xf32, #tpu.memory_space<vmem>>, %arg5: memref<2x1x128xf32, #tpu.memory_space<vmem>>, %arg6: memref<2x128x256xbf16, #tpu.memory_space<vmem>>, %arg7: memref<2x1x256xf32, #tpu.memory_space<vmem>>, %arg8: memref<2x128x128xbf16, #tpu.memory_space<vmem>>, %arg9: memref<2x1x128xf32, #tpu.memory_space<vmem>>, %arg10: memref<2x1x128xf32, #tpu.memory_space<vmem>>, %arg11: memref<2x1x128xf32, #tpu.memory_space<vmem>>, %arg12: memref<2x128x256xbf16, #tpu.memory_space<vmem>>, %arg13: memref<2x1x256xf32, #tpu.memory_space<vmem>>, %arg14: memref<2x256x128xbf16, #tpu.memory_space<vmem>>, %arg15: memref<2x1x128xf32, #tpu.memory_space<vmem>>, %arg16: memref<1x128xf32, #tpu.memory_space<vmem>>, %arg17: memref<1x128xf32, #tpu.memory_space<vmem>>, %arg18: memref<32x128xf32, #tpu.memory_space<vmem>>) attributes {dimension_semantics = [], scalar_prefetch = 0 : i64, scratch_operands = 0 : i64, tpu.core_type = #tpu.core_type<tc>} {
    %c0 = arith.constant 0 : index
    %c0_0 = arith.constant 0 : index
    %0 = vector.load %arg0[%c0, %c0_0] : memref<32x192xbf16, #tpu.memory_space<vmem>>, vector<32x192xbf16>
    %c0_1 = arith.constant 0 : index
    %c0_2 = arith.constant 0 : index
    %1 = vector.load %arg2[%c0_1, %c0_2] : memref<192x128xbf16, #tpu.memory_space<vmem>>, vector<192x128xbf16>
    %cst = arith.constant dense<0.000000e+00> : vector<32x128xf32>
    %2 = tpu.matmul %0, %1, %cst {dimension_numbers = #tpu.dot_dimension_numbers<[1], [0], [0], [1], [0, 0, 1, 1], [], []>} : vector<32x192xbf16>, vector<192x128xbf16>, vector<32x128xf32> -> vector<32x128xf32>
    %c0_3 = arith.constant 0 : index
    %c0_4 = arith.constant 0 : index
    %3 = vector.load %arg3[%c0_3, %c0_4] : memref<1x128xf32, #tpu.memory_space<vmem>>, vector<1x128xf32>
    %4 = vector.broadcast %3 : vector<1x128xf32> to vector<32x128xf32>
    %5 = arith.addf %2, %4 : vector<32x128xf32>
    %6 = vector.shape_cast %5 : vector<32x128xf32> to vector<2x16x128xf32>
    %c0_5 = arith.constant 0 : index
    %c0_6 = arith.constant 0 : index
    %7 = vector.load %arg1[%c0_5, %c0_6] : memref<16x128xf32, #tpu.memory_space<vmem>>, vector<16x128xf32>
    %8 = vector.shape_cast %7 : vector<16x128xf32> to vector<1x16x128xf32>
    %9 = vector.broadcast %8 : vector<1x16x128xf32> to vector<2x16x128xf32>
    %10 = arith.addf %6, %9 : vector<2x16x128xf32>
    %11 = vector.shape_cast %10 : vector<2x16x128xf32> to vector<32x128xf32>
    %c0_7 = arith.constant 0 : index
    %c0_8 = arith.constant 0 : index
    %c0_9 = arith.constant 0 : index
    %12 = vector.load %arg4[%c0_7, %c0_8, %c0_9] : memref<2x1x128xf32, #tpu.memory_space<vmem>>, vector<1x1x128xf32>
    %13 = vector.shape_cast %12 : vector<1x1x128xf32> to vector<1x128xf32>
    %c0_10 = arith.constant 0 : index
    %c0_11 = arith.constant 0 : index
    %c0_12 = arith.constant 0 : index
    %14 = vector.load %arg5[%c0_10, %c0_11, %c0_12] : memref<2x1x128xf32, #tpu.memory_space<vmem>>, vector<1x1x128xf32>
    %15 = vector.shape_cast %14 : vector<1x1x128xf32> to vector<1x128xf32>
    %cst_13 = arith.constant dense<0.000000e+00> : vector<32xf32>
    %16 = vector.multi_reduction <add>, %11, %cst_13 [1] : vector<32x128xf32> to vector<32xf32>
    %17 = vector.shape_cast %16 : vector<32xf32> to vector<32x1xf32>
    %cst_14 = arith.constant 1.280000e+02 : f32
    %18 = vector.broadcast %cst_14 : f32 to vector<32x1xf32>
    %19 = arith.divf %17, %18 : vector<32x1xf32>
    %20 = vector.broadcast %19 : vector<32x1xf32> to vector<32x128xf32>
    %21 = arith.subf %11, %20 : vector<32x128xf32>
    %22 = arith.mulf %21, %21 : vector<32x128xf32>
    %cst_15 = arith.constant dense<0.000000e+00> : vector<32xf32>
    %23 = vector.multi_reduction <add>, %22, %cst_15 [1] : vector<32x128xf32> to vector<32xf32>
    %24 = vector.shape_cast %23 : vector<32xf32> to vector<32x1xf32>
    %cst_16 = arith.constant 1.280000e+02 : f32
    %25 = vector.broadcast %cst_16 : f32 to vector<32x1xf32>
    %26 = arith.divf %24, %25 : vector<32x1xf32>
    %27 = vector.broadcast %19 : vector<32x1xf32> to vector<32x128xf32>
    %28 = arith.subf %11, %27 : vector<32x128xf32>
    %cst_17 = arith.constant 9.99999997E-7 : f32
    %29 = vector.broadcast %cst_17 : f32 to vector<32x1xf32>
    %30 = arith.addf %26, %29 : vector<32x1xf32>
    %31 = math.rsqrt %30 : vector<32x1xf32>
    %32 = vector.broadcast %31 : vector<32x1xf32> to vector<32x128xf32>
    %33 = arith.mulf %28, %32 : vector<32x128xf32>
    %34 = vector.broadcast %13 : vector<1x128xf32> to vector<32x128xf32>
    %35 = arith.mulf %33, %34 : vector<32x128xf32>
    %36 = vector.broadcast %15 : vector<1x128xf32> to vector<32x128xf32>
    %37 = arith.addf %35, %36 : vector<32x128xf32>
    %38 = arith.truncf %37 : vector<32x128xf32> to vector<32x128xbf16>
    %c0_18 = arith.constant 0 : index
    %c0_19 = arith.constant 0 : index
    %c0_20 = arith.constant 0 : index
    %39 = vector.load %arg6[%c0_18, %c0_19, %c0_20] : memref<2x128x256xbf16, #tpu.memory_space<vmem>>, vector<1x128x256xbf16>
    %40 = vector.shape_cast %39 : vector<1x128x256xbf16> to vector<128x256xbf16>
    %cst_21 = arith.constant dense<0.000000e+00> : vector<32x256xf32>
    %41 = tpu.matmul %38, %40, %cst_21 {dimension_numbers = #tpu.dot_dimension_numbers<[1], [0], [0], [1], [0, 0, 1, 1], [], []>} : vector<32x128xbf16>, vector<128x256xbf16>, vector<32x256xf32> -> vector<32x256xf32>
    %c0_22 = arith.constant 0 : index
    %c0_23 = arith.constant 0 : index
    %c0_24 = arith.constant 0 : index
    %42 = vector.load %arg7[%c0_22, %c0_23, %c0_24] : memref<2x1x256xf32, #tpu.memory_space<vmem>>, vector<1x1x256xf32>
    %43 = vector.shape_cast %42 : vector<1x1x256xf32> to vector<1x256xf32>
    %44 = vector.broadcast %43 : vector<1x256xf32> to vector<32x256xf32>
    %45 = arith.addf %41, %44 : vector<32x256xf32>
    %46 = arith.truncf %45 : vector<32x256xf32> to vector<32x256xbf16>
    %47 = vector.extract_strided_slice %46 {offsets = [0, 0], sizes = [32, 128], strides = [1, 1]} : vector<32x256xbf16> to vector<32x128xbf16>
    %48 = vector.extract_strided_slice %47 {offsets = [0, 0], sizes = [32, 32], strides = [1, 1]} : vector<32x128xbf16> to vector<32x32xbf16>
    %49 = vector.shape_cast %48 : vector<32x32xbf16> to vector<2x16x32xbf16>
    %50 = vector.extract_strided_slice %47 {offsets = [0, 32], sizes = [32, 32], strides = [1, 1]} : vector<32x128xbf16> to vector<32x32xbf16>
    %51 = vector.shape_cast %50 : vector<32x32xbf16> to vector<2x16x32xbf16>
    %52 = vector.extract_strided_slice %47 {offsets = [0, 64], sizes = [32, 32], strides = [1, 1]} : vector<32x128xbf16> to vector<32x32xbf16>
    %53 = vector.shape_cast %52 : vector<32x32xbf16> to vector<2x16x32xbf16>
    %54 = vector.extract_strided_slice %47 {offsets = [0, 96], sizes = [32, 32], strides = [1, 1]} : vector<32x128xbf16> to vector<32x32xbf16>
    %55 = vector.shape_cast %54 : vector<32x32xbf16> to vector<2x16x32xbf16>
    %56 = tpu.concatenate %49, %51, %53, %55 in 0 : vector<2x16x32xbf16>, vector<2x16x32xbf16>, vector<2x16x32xbf16>, vector<2x16x32xbf16> -> vector<8x16x32xbf16>
    %57 = vector.extract_strided_slice %46 {offsets = [0, 128], sizes = [32, 128], strides = [1, 1]} : vector<32x256xbf16> to vector<32x128xbf16>
    %58 = vector.extract_strided_slice %57 {offsets = [0, 0], sizes = [32, 32], strides = [1, 1]} : vector<32x128xbf16> to vector<32x32xbf16>
    %59 = vector.shape_cast %58 : vector<32x32xbf16> to vector<2x16x32xbf16>
    %60 = vector.extract_strided_slice %57 {offsets = [0, 32], sizes = [32, 32], strides = [1, 1]} : vector<32x128xbf16> to vector<32x32xbf16>
    %61 = vector.shape_cast %60 : vector<32x32xbf16> to vector<2x16x32xbf16>
    %62 = vector.extract_strided_slice %57 {offsets = [0, 64], sizes = [32, 32], strides = [1, 1]} : vector<32x128xbf16> to vector<32x32xbf16>
    %63 = vector.shape_cast %62 : vector<32x32xbf16> to vector<2x16x32xbf16>
    %64 = vector.extract_strided_slice %57 {offsets = [0, 96], sizes = [32, 32], strides = [1, 1]} : vector<32x128xbf16> to vector<32x32xbf16>
    %65 = vector.shape_cast %64 : vector<32x32xbf16> to vector<2x16x32xbf16>
    %66 = tpu.concatenate %59, %61, %63, %65 in 0 : vector<2x16x32xbf16>, vector<2x16x32xbf16>, vector<2x16x32xbf16>, vector<2x16x32xbf16> -> vector<8x16x32xbf16>
    "tpu.trace_start"() <{level = 10 : i32, message = "bqd,bkd->bqk"}> : () -> ()
    %cst_25 = arith.constant dense<0.000000e+00> : vector<8x16x16xf32>
    %67 = tpu.matmul %56, %56, %cst_25 {dimension_numbers = #tpu.dot_dimension_numbers<[2], [2], [1], [1], [0, 0, 0, 1, 1, 1], [0], [0]>} : vector<8x16x32xbf16>, vector<8x16x32xbf16>, vector<8x16x16xf32> -> vector<8x16x16xf32>
    "tpu.trace_stop"() : () -> ()
    %cst_26 = arith.constant 0.176776692 : f32
    %68 = vector.broadcast %cst_26 : f32 to vector<8x16x16xf32>
    %69 = arith.mulf %67, %68 : vector<8x16x16xf32>
    %cst_27 = arith.constant dense<0xFF800000> : vector<8x16xf32>
    %70 = vector.multi_reduction <maximumf>, %69, %cst_27 [2] : vector<8x16x16xf32> to vector<8x16xf32>
    %71 = vector.shape_cast %70 : vector<8x16xf32> to vector<8x16x1xf32>
    %72 = vector.broadcast %71 : vector<8x16x1xf32> to vector<8x16x16xf32>
    %73 = arith.subf %69, %72 : vector<8x16x16xf32>
    %74 = math.exp %73 : vector<8x16x16xf32>
    %cst_28 = arith.constant dense<0.000000e+00> : vector<8x16xf32>
    %75 = vector.multi_reduction <add>, %74, %cst_28 [2] : vector<8x16x16xf32> to vector<8x16xf32>
    %76 = vector.shape_cast %75 : vector<8x16xf32> to vector<8x16x1xf32>
    %77 = tpu.reciprocal %76 {approx = true} : vector<8x16x1xf32> -> vector<8x16x1xf32>
    %78 = vector.broadcast %77 : vector<8x16x1xf32> to vector<8x16x16xf32>
    %79 = arith.mulf %74, %78 : vector<8x16x16xf32>
    %80 = arith.truncf %79 : vector<8x16x16xf32> to vector<8x16x16xbf16>
    "tpu.trace_start"() <{level = 10 : i32, message = "bqk,bkd->bqd"}> : () -> ()
    %cst_29 = arith.constant dense<0.000000e+00> : vector<8x16x32xf32>
    %81 = tpu.matmul %80, %66, %cst_29 {dimension_numbers = #tpu.dot_dimension_numbers<[2], [1], [1], [2], [0, 0, 0, 1, 1, 2], [0], [0]>} : vector<8x16x16xbf16>, vector<8x16x32xbf16>, vector<8x16x32xf32> -> vector<8x16x32xf32>
    "tpu.trace_stop"() : () -> ()
    %82 = vector.extract_strided_slice %81 {offsets = [0, 0, 0], sizes = [2, 16, 32], strides = [1, 1, 1]} : vector<8x16x32xf32> to vector<2x16x32xf32>
    %83 = vector.shape_cast %82 : vector<2x16x32xf32> to vector<32x32xf32>
    %84 = vector.extract_strided_slice %81 {offsets = [2, 0, 0], sizes = [2, 16, 32], strides = [1, 1, 1]} : vector<8x16x32xf32> to vector<2x16x32xf32>
    %85 = vector.shape_cast %84 : vector<2x16x32xf32> to vector<32x32xf32>
    %86 = vector.extract_strided_slice %81 {offsets = [4, 0, 0], sizes = [2, 16, 32], strides = [1, 1, 1]} : vector<8x16x32xf32> to vector<2x16x32xf32>
    %87 = vector.shape_cast %86 : vector<2x16x32xf32> to vector<32x32xf32>
    %88 = vector.extract_strided_slice %81 {offsets = [6, 0, 0], sizes = [2, 16, 32], strides = [1, 1, 1]} : vector<8x16x32xf32> to vector<2x16x32xf32>
    %89 = vector.shape_cast %88 : vector<2x16x32xf32> to vector<32x32xf32>
    %90 = tpu.concatenate %83, %85, %87, %89 in 1 : vector<32x32xf32>, vector<32x32xf32>, vector<32x32xf32>, vector<32x32xf32> -> vector<32x128xf32>
    %91 = arith.truncf %90 : vector<32x128xf32> to vector<32x128xbf16>
    %c0_30 = arith.constant 0 : index
    %c0_31 = arith.constant 0 : index
    %c0_32 = arith.constant 0 : index
    %92 = vector.load %arg8[%c0_30, %c0_31, %c0_32] : memref<2x128x128xbf16, #tpu.memory_space<vmem>>, vector<1x128x128xbf16>
    %93 = vector.shape_cast %92 : vector<1x128x128xbf16> to vector<128x128xbf16>
    %cst_33 = arith.constant dense<0.000000e+00> : vector<32x128xf32>
    %94 = tpu.matmul %91, %93, %cst_33 {dimension_numbers = #tpu.dot_dimension_numbers<[1], [0], [0], [1], [0, 0, 1, 1], [], []>} : vector<32x128xbf16>, vector<128x128xbf16>, vector<32x128xf32> -> vector<32x128xf32>
    %c0_34 = arith.constant 0 : index
    %c0_35 = arith.constant 0 : index
    %c0_36 = arith.constant 0 : index
    %95 = vector.load %arg9[%c0_34, %c0_35, %c0_36] : memref<2x1x128xf32, #tpu.memory_space<vmem>>, vector<1x1x128xf32>
    %96 = vector.shape_cast %95 : vector<1x1x128xf32> to vector<1x128xf32>
    %97 = vector.broadcast %96 : vector<1x128xf32> to vector<32x128xf32>
    %98 = arith.addf %94, %97 : vector<32x128xf32>
    %99 = arith.addf %11, %98 : vector<32x128xf32>
    %c0_37 = arith.constant 0 : index
    %c0_38 = arith.constant 0 : index
    %c0_39 = arith.constant 0 : index
    %100 = vector.load %arg10[%c0_37, %c0_38, %c0_39] : memref<2x1x128xf32, #tpu.memory_space<vmem>>, vector<1x1x128xf32>
    %101 = vector.shape_cast %100 : vector<1x1x128xf32> to vector<1x128xf32>
    %c0_40 = arith.constant 0 : index
    %c0_41 = arith.constant 0 : index
    %c0_42 = arith.constant 0 : index
    %102 = vector.load %arg11[%c0_40, %c0_41, %c0_42] : memref<2x1x128xf32, #tpu.memory_space<vmem>>, vector<1x1x128xf32>
    %103 = vector.shape_cast %102 : vector<1x1x128xf32> to vector<1x128xf32>
    %cst_43 = arith.constant dense<0.000000e+00> : vector<32xf32>
    %104 = vector.multi_reduction <add>, %99, %cst_43 [1] : vector<32x128xf32> to vector<32xf32>
    %105 = vector.shape_cast %104 : vector<32xf32> to vector<32x1xf32>
    %cst_44 = arith.constant 1.280000e+02 : f32
    %106 = vector.broadcast %cst_44 : f32 to vector<32x1xf32>
    %107 = arith.divf %105, %106 : vector<32x1xf32>
    %108 = vector.broadcast %107 : vector<32x1xf32> to vector<32x128xf32>
    %109 = arith.subf %99, %108 : vector<32x128xf32>
    %110 = arith.mulf %109, %109 : vector<32x128xf32>
    %cst_45 = arith.constant dense<0.000000e+00> : vector<32xf32>
    %111 = vector.multi_reduction <add>, %110, %cst_45 [1] : vector<32x128xf32> to vector<32xf32>
    %112 = vector.shape_cast %111 : vector<32xf32> to vector<32x1xf32>
    %cst_46 = arith.constant 1.280000e+02 : f32
    %113 = vector.broadcast %cst_46 : f32 to vector<32x1xf32>
    %114 = arith.divf %112, %113 : vector<32x1xf32>
    %115 = vector.broadcast %107 : vector<32x1xf32> to vector<32x128xf32>
    %116 = arith.subf %99, %115 : vector<32x128xf32>
    %cst_47 = arith.constant 9.99999997E-7 : f32
    %117 = vector.broadcast %cst_47 : f32 to vector<32x1xf32>
    %118 = arith.addf %114, %117 : vector<32x1xf32>
    %119 = math.rsqrt %118 : vector<32x1xf32>
    %120 = vector.broadcast %119 : vector<32x1xf32> to vector<32x128xf32>
    %121 = arith.mulf %116, %120 : vector<32x128xf32>
    %122 = vector.broadcast %101 : vector<1x128xf32> to vector<32x128xf32>
    %123 = arith.mulf %121, %122 : vector<32x128xf32>
    %124 = vector.broadcast %103 : vector<1x128xf32> to vector<32x128xf32>
    %125 = arith.addf %123, %124 : vector<32x128xf32>
    %126 = arith.truncf %125 : vector<32x128xf32> to vector<32x128xbf16>
    %c0_48 = arith.constant 0 : index
    %c0_49 = arith.constant 0 : index
    %c0_50 = arith.constant 0 : index
    %127 = vector.load %arg12[%c0_48, %c0_49, %c0_50] : memref<2x128x256xbf16, #tpu.memory_space<vmem>>, vector<1x128x256xbf16>
    %128 = vector.shape_cast %127 : vector<1x128x256xbf16> to vector<128x256xbf16>
    %cst_51 = arith.constant dense<0.000000e+00> : vector<32x256xf32>
    %129 = tpu.matmul %126, %128, %cst_51 {dimension_numbers = #tpu.dot_dimension_numbers<[1], [0], [0], [1], [0, 0, 1, 1], [], []>} : vector<32x128xbf16>, vector<128x256xbf16>, vector<32x256xf32> -> vector<32x256xf32>
    %c0_52 = arith.constant 0 : index
    %c0_53 = arith.constant 0 : index
    %c0_54 = arith.constant 0 : index
    %130 = vector.load %arg13[%c0_52, %c0_53, %c0_54] : memref<2x1x256xf32, #tpu.memory_space<vmem>>, vector<1x1x256xf32>
    %131 = vector.shape_cast %130 : vector<1x1x256xf32> to vector<1x256xf32>
    %132 = vector.broadcast %131 : vector<1x256xf32> to vector<32x256xf32>
    %133 = arith.addf %129, %132 : vector<32x256xf32>
    %134 = arith.mulf %133, %133 : vector<32x256xf32>
    %135 = arith.mulf %133, %134 : vector<32x256xf32>
    %cst_55 = arith.constant 4.471500e-02 : f32
    %136 = vector.broadcast %cst_55 : f32 to vector<32x256xf32>
    %137 = arith.mulf %136, %135 : vector<32x256xf32>
    %138 = arith.addf %133, %137 : vector<32x256xf32>
    %cst_56 = arith.constant 0.797884583 : f32
    %139 = vector.broadcast %cst_56 : f32 to vector<32x256xf32>
    %140 = arith.mulf %139, %138 : vector<32x256xf32>
    %141 = math.tanh %140 : vector<32x256xf32>
    %cst_57 = arith.constant 1.000000e+00 : f32
    %142 = vector.broadcast %cst_57 : f32 to vector<32x256xf32>
    %143 = arith.addf %142, %141 : vector<32x256xf32>
    %cst_58 = arith.constant 5.000000e-01 : f32
    %144 = vector.broadcast %cst_58 : f32 to vector<32x256xf32>
    %145 = arith.mulf %144, %143 : vector<32x256xf32>
    %146 = arith.mulf %133, %145 : vector<32x256xf32>
    %147 = arith.truncf %146 : vector<32x256xf32> to vector<32x256xbf16>
    %c0_59 = arith.constant 0 : index
    %c0_60 = arith.constant 0 : index
    %c0_61 = arith.constant 0 : index
    %148 = vector.load %arg14[%c0_59, %c0_60, %c0_61] : memref<2x256x128xbf16, #tpu.memory_space<vmem>>, vector<1x256x128xbf16>
    %149 = vector.shape_cast %148 : vector<1x256x128xbf16> to vector<256x128xbf16>
    %cst_62 = arith.constant dense<0.000000e+00> : vector<32x128xf32>
    %150 = tpu.matmul %147, %149, %cst_62 {dimension_numbers = #tpu.dot_dimension_numbers<[1], [0], [0], [1], [0, 0, 1, 1], [], []>} : vector<32x256xbf16>, vector<256x128xbf16>, vector<32x128xf32> -> vector<32x128xf32>
    %c0_63 = arith.constant 0 : index
    %c0_64 = arith.constant 0 : index
    %c0_65 = arith.constant 0 : index
    %151 = vector.load %arg15[%c0_63, %c0_64, %c0_65] : memref<2x1x128xf32, #tpu.memory_space<vmem>>, vector<1x1x128xf32>
    %152 = vector.shape_cast %151 : vector<1x1x128xf32> to vector<1x128xf32>
    %153 = vector.broadcast %152 : vector<1x128xf32> to vector<32x128xf32>
    %154 = arith.addf %150, %153 : vector<32x128xf32>
    %155 = arith.addf %99, %154 : vector<32x128xf32>
    %c1 = arith.constant 1 : index
    %c0_66 = arith.constant 0 : index
    %c0_67 = arith.constant 0 : index
    %156 = vector.load %arg4[%c1, %c0_66, %c0_67] : memref<2x1x128xf32, #tpu.memory_space<vmem>>, vector<1x1x128xf32>
    %157 = vector.shape_cast %156 : vector<1x1x128xf32> to vector<1x128xf32>
    %c1_68 = arith.constant 1 : index
    %c0_69 = arith.constant 0 : index
    %c0_70 = arith.constant 0 : index
    %158 = vector.load %arg5[%c1_68, %c0_69, %c0_70] : memref<2x1x128xf32, #tpu.memory_space<vmem>>, vector<1x1x128xf32>
    %159 = vector.shape_cast %158 : vector<1x1x128xf32> to vector<1x128xf32>
    %cst_71 = arith.constant dense<0.000000e+00> : vector<32xf32>
    %160 = vector.multi_reduction <add>, %155, %cst_71 [1] : vector<32x128xf32> to vector<32xf32>
    %161 = vector.shape_cast %160 : vector<32xf32> to vector<32x1xf32>
    %cst_72 = arith.constant 1.280000e+02 : f32
    %162 = vector.broadcast %cst_72 : f32 to vector<32x1xf32>
    %163 = arith.divf %161, %162 : vector<32x1xf32>
    %164 = vector.broadcast %163 : vector<32x1xf32> to vector<32x128xf32>
    %165 = arith.subf %155, %164 : vector<32x128xf32>
    %166 = arith.mulf %165, %165 : vector<32x128xf32>
    %cst_73 = arith.constant dense<0.000000e+00> : vector<32xf32>
    %167 = vector.multi_reduction <add>, %166, %cst_73 [1] : vector<32x128xf32> to vector<32xf32>
    %168 = vector.shape_cast %167 : vector<32xf32> to vector<32x1xf32>
    %cst_74 = arith.constant 1.280000e+02 : f32
    %169 = vector.broadcast %cst_74 : f32 to vector<32x1xf32>
    %170 = arith.divf %168, %169 : vector<32x1xf32>
    %171 = vector.broadcast %163 : vector<32x1xf32> to vector<32x128xf32>
    %172 = arith.subf %155, %171 : vector<32x128xf32>
    %cst_75 = arith.constant 9.99999997E-7 : f32
    %173 = vector.broadcast %cst_75 : f32 to vector<32x1xf32>
    %174 = arith.addf %170, %173 : vector<32x1xf32>
    %175 = math.rsqrt %174 : vector<32x1xf32>
    %176 = vector.broadcast %175 : vector<32x1xf32> to vector<32x128xf32>
    %177 = arith.mulf %172, %176 : vector<32x128xf32>
    %178 = vector.broadcast %157 : vector<1x128xf32> to vector<32x128xf32>
    %179 = arith.mulf %177, %178 : vector<32x128xf32>
    %180 = vector.broadcast %159 : vector<1x128xf32> to vector<32x128xf32>
    %181 = arith.addf %179, %180 : vector<32x128xf32>
    %182 = arith.truncf %181 : vector<32x128xf32> to vector<32x128xbf16>
    %c1_76 = arith.constant 1 : index
    %c0_77 = arith.constant 0 : index
    %c0_78 = arith.constant 0 : index
    %183 = vector.load %arg6[%c1_76, %c0_77, %c0_78] : memref<2x128x256xbf16, #tpu.memory_space<vmem>>, vector<1x128x256xbf16>
    %184 = vector.shape_cast %183 : vector<1x128x256xbf16> to vector<128x256xbf16>
    %cst_79 = arith.constant dense<0.000000e+00> : vector<32x256xf32>
    %185 = tpu.matmul %182, %184, %cst_79 {dimension_numbers = #tpu.dot_dimension_numbers<[1], [0], [0], [1], [0, 0, 1, 1], [], []>} : vector<32x128xbf16>, vector<128x256xbf16>, vector<32x256xf32> -> vector<32x256xf32>
    %c1_80 = arith.constant 1 : index
    %c0_81 = arith.constant 0 : index
    %c0_82 = arith.constant 0 : index
    %186 = vector.load %arg7[%c1_80, %c0_81, %c0_82] : memref<2x1x256xf32, #tpu.memory_space<vmem>>, vector<1x1x256xf32>
    %187 = vector.shape_cast %186 : vector<1x1x256xf32> to vector<1x256xf32>
    %188 = vector.broadcast %187 : vector<1x256xf32> to vector<32x256xf32>
    %189 = arith.addf %185, %188 : vector<32x256xf32>
    %190 = arith.truncf %189 : vector<32x256xf32> to vector<32x256xbf16>
    %191 = vector.extract_strided_slice %190 {offsets = [0, 0], sizes = [32, 128], strides = [1, 1]} : vector<32x256xbf16> to vector<32x128xbf16>
    %192 = vector.extract_strided_slice %191 {offsets = [0, 0], sizes = [32, 32], strides = [1, 1]} : vector<32x128xbf16> to vector<32x32xbf16>
    %193 = vector.shape_cast %192 : vector<32x32xbf16> to vector<2x16x32xbf16>
    %194 = vector.extract_strided_slice %191 {offsets = [0, 32], sizes = [32, 32], strides = [1, 1]} : vector<32x128xbf16> to vector<32x32xbf16>
    %195 = vector.shape_cast %194 : vector<32x32xbf16> to vector<2x16x32xbf16>
    %196 = vector.extract_strided_slice %191 {offsets = [0, 64], sizes = [32, 32], strides = [1, 1]} : vector<32x128xbf16> to vector<32x32xbf16>
    %197 = vector.shape_cast %196 : vector<32x32xbf16> to vector<2x16x32xbf16>
    %198 = vector.extract_strided_slice %191 {offsets = [0, 96], sizes = [32, 32], strides = [1, 1]} : vector<32x128xbf16> to vector<32x32xbf16>
    %199 = vector.shape_cast %198 : vector<32x32xbf16> to vector<2x16x32xbf16>
    %200 = tpu.concatenate %193, %195, %197, %199 in 0 : vector<2x16x32xbf16>, vector<2x16x32xbf16>, vector<2x16x32xbf16>, vector<2x16x32xbf16> -> vector<8x16x32xbf16>
    %201 = vector.extract_strided_slice %190 {offsets = [0, 128], sizes = [32, 128], strides = [1, 1]} : vector<32x256xbf16> to vector<32x128xbf16>
    %202 = vector.extract_strided_slice %201 {offsets = [0, 0], sizes = [32, 32], strides = [1, 1]} : vector<32x128xbf16> to vector<32x32xbf16>
    %203 = vector.shape_cast %202 : vector<32x32xbf16> to vector<2x16x32xbf16>
    %204 = vector.extract_strided_slice %201 {offsets = [0, 32], sizes = [32, 32], strides = [1, 1]} : vector<32x128xbf16> to vector<32x32xbf16>
    %205 = vector.shape_cast %204 : vector<32x32xbf16> to vector<2x16x32xbf16>
    %206 = vector.extract_strided_slice %201 {offsets = [0, 64], sizes = [32, 32], strides = [1, 1]} : vector<32x128xbf16> to vector<32x32xbf16>
    %207 = vector.shape_cast %206 : vector<32x32xbf16> to vector<2x16x32xbf16>
    %208 = vector.extract_strided_slice %201 {offsets = [0, 96], sizes = [32, 32], strides = [1, 1]} : vector<32x128xbf16> to vector<32x32xbf16>
    %209 = vector.shape_cast %208 : vector<32x32xbf16> to vector<2x16x32xbf16>
    %210 = tpu.concatenate %203, %205, %207, %209 in 0 : vector<2x16x32xbf16>, vector<2x16x32xbf16>, vector<2x16x32xbf16>, vector<2x16x32xbf16> -> vector<8x16x32xbf16>
    "tpu.trace_start"() <{level = 10 : i32, message = "bqd,bkd->bqk"}> : () -> ()
    %cst_83 = arith.constant dense<0.000000e+00> : vector<8x16x16xf32>
    %211 = tpu.matmul %200, %200, %cst_83 {dimension_numbers = #tpu.dot_dimension_numbers<[2], [2], [1], [1], [0, 0, 0, 1, 1, 1], [0], [0]>} : vector<8x16x32xbf16>, vector<8x16x32xbf16>, vector<8x16x16xf32> -> vector<8x16x16xf32>
    "tpu.trace_stop"() : () -> ()
    %cst_84 = arith.constant 0.176776692 : f32
    %212 = vector.broadcast %cst_84 : f32 to vector<8x16x16xf32>
    %213 = arith.mulf %211, %212 : vector<8x16x16xf32>
    %cst_85 = arith.constant dense<0xFF800000> : vector<8x16xf32>
    %214 = vector.multi_reduction <maximumf>, %213, %cst_85 [2] : vector<8x16x16xf32> to vector<8x16xf32>
    %215 = vector.shape_cast %214 : vector<8x16xf32> to vector<8x16x1xf32>
    %216 = vector.broadcast %215 : vector<8x16x1xf32> to vector<8x16x16xf32>
    %217 = arith.subf %213, %216 : vector<8x16x16xf32>
    %218 = math.exp %217 : vector<8x16x16xf32>
    %cst_86 = arith.constant dense<0.000000e+00> : vector<8x16xf32>
    %219 = vector.multi_reduction <add>, %218, %cst_86 [2] : vector<8x16x16xf32> to vector<8x16xf32>
    %220 = vector.shape_cast %219 : vector<8x16xf32> to vector<8x16x1xf32>
    %221 = tpu.reciprocal %220 {approx = true} : vector<8x16x1xf32> -> vector<8x16x1xf32>
    %222 = vector.broadcast %221 : vector<8x16x1xf32> to vector<8x16x16xf32>
    %223 = arith.mulf %218, %222 : vector<8x16x16xf32>
    %224 = arith.truncf %223 : vector<8x16x16xf32> to vector<8x16x16xbf16>
    "tpu.trace_start"() <{level = 10 : i32, message = "bqk,bkd->bqd"}> : () -> ()
    %cst_87 = arith.constant dense<0.000000e+00> : vector<8x16x32xf32>
    %225 = tpu.matmul %224, %210, %cst_87 {dimension_numbers = #tpu.dot_dimension_numbers<[2], [1], [1], [2], [0, 0, 0, 1, 1, 2], [0], [0]>} : vector<8x16x16xbf16>, vector<8x16x32xbf16>, vector<8x16x32xf32> -> vector<8x16x32xf32>
    "tpu.trace_stop"() : () -> ()
    %226 = vector.extract_strided_slice %225 {offsets = [0, 0, 0], sizes = [2, 16, 32], strides = [1, 1, 1]} : vector<8x16x32xf32> to vector<2x16x32xf32>
    %227 = vector.shape_cast %226 : vector<2x16x32xf32> to vector<32x32xf32>
    %228 = vector.extract_strided_slice %225 {offsets = [2, 0, 0], sizes = [2, 16, 32], strides = [1, 1, 1]} : vector<8x16x32xf32> to vector<2x16x32xf32>
    %229 = vector.shape_cast %228 : vector<2x16x32xf32> to vector<32x32xf32>
    %230 = vector.extract_strided_slice %225 {offsets = [4, 0, 0], sizes = [2, 16, 32], strides = [1, 1, 1]} : vector<8x16x32xf32> to vector<2x16x32xf32>
    %231 = vector.shape_cast %230 : vector<2x16x32xf32> to vector<32x32xf32>
    %232 = vector.extract_strided_slice %225 {offsets = [6, 0, 0], sizes = [2, 16, 32], strides = [1, 1, 1]} : vector<8x16x32xf32> to vector<2x16x32xf32>
    %233 = vector.shape_cast %232 : vector<2x16x32xf32> to vector<32x32xf32>
    %234 = tpu.concatenate %227, %229, %231, %233 in 1 : vector<32x32xf32>, vector<32x32xf32>, vector<32x32xf32>, vector<32x32xf32> -> vector<32x128xf32>
    %235 = arith.truncf %234 : vector<32x128xf32> to vector<32x128xbf16>
    %c1_88 = arith.constant 1 : index
    %c0_89 = arith.constant 0 : index
    %c0_90 = arith.constant 0 : index
    %236 = vector.load %arg8[%c1_88, %c0_89, %c0_90] : memref<2x128x128xbf16, #tpu.memory_space<vmem>>, vector<1x128x128xbf16>
    %237 = vector.shape_cast %236 : vector<1x128x128xbf16> to vector<128x128xbf16>
    %cst_91 = arith.constant dense<0.000000e+00> : vector<32x128xf32>
    %238 = tpu.matmul %235, %237, %cst_91 {dimension_numbers = #tpu.dot_dimension_numbers<[1], [0], [0], [1], [0, 0, 1, 1], [], []>} : vector<32x128xbf16>, vector<128x128xbf16>, vector<32x128xf32> -> vector<32x128xf32>
    %c1_92 = arith.constant 1 : index
    %c0_93 = arith.constant 0 : index
    %c0_94 = arith.constant 0 : index
    %239 = vector.load %arg9[%c1_92, %c0_93, %c0_94] : memref<2x1x128xf32, #tpu.memory_space<vmem>>, vector<1x1x128xf32>
    %240 = vector.shape_cast %239 : vector<1x1x128xf32> to vector<1x128xf32>
    %241 = vector.broadcast %240 : vector<1x128xf32> to vector<32x128xf32>
    %242 = arith.addf %238, %241 : vector<32x128xf32>
    %243 = arith.addf %155, %242 : vector<32x128xf32>
    %c1_95 = arith.constant 1 : index
    %c0_96 = arith.constant 0 : index
    %c0_97 = arith.constant 0 : index
    %244 = vector.load %arg10[%c1_95, %c0_96, %c0_97] : memref<2x1x128xf32, #tpu.memory_space<vmem>>, vector<1x1x128xf32>
    %245 = vector.shape_cast %244 : vector<1x1x128xf32> to vector<1x128xf32>
    %c1_98 = arith.constant 1 : index
    %c0_99 = arith.constant 0 : index
    %c0_100 = arith.constant 0 : index
    %246 = vector.load %arg11[%c1_98, %c0_99, %c0_100] : memref<2x1x128xf32, #tpu.memory_space<vmem>>, vector<1x1x128xf32>
    %247 = vector.shape_cast %246 : vector<1x1x128xf32> to vector<1x128xf32>
    %cst_101 = arith.constant dense<0.000000e+00> : vector<32xf32>
    %248 = vector.multi_reduction <add>, %243, %cst_101 [1] : vector<32x128xf32> to vector<32xf32>
    %249 = vector.shape_cast %248 : vector<32xf32> to vector<32x1xf32>
    %cst_102 = arith.constant 1.280000e+02 : f32
    %250 = vector.broadcast %cst_102 : f32 to vector<32x1xf32>
    %251 = arith.divf %249, %250 : vector<32x1xf32>
    %252 = vector.broadcast %251 : vector<32x1xf32> to vector<32x128xf32>
    %253 = arith.subf %243, %252 : vector<32x128xf32>
    %254 = arith.mulf %253, %253 : vector<32x128xf32>
    %cst_103 = arith.constant dense<0.000000e+00> : vector<32xf32>
    %255 = vector.multi_reduction <add>, %254, %cst_103 [1] : vector<32x128xf32> to vector<32xf32>
    %256 = vector.shape_cast %255 : vector<32xf32> to vector<32x1xf32>
    %cst_104 = arith.constant 1.280000e+02 : f32
    %257 = vector.broadcast %cst_104 : f32 to vector<32x1xf32>
    %258 = arith.divf %256, %257 : vector<32x1xf32>
    %259 = vector.broadcast %251 : vector<32x1xf32> to vector<32x128xf32>
    %260 = arith.subf %243, %259 : vector<32x128xf32>
    %cst_105 = arith.constant 9.99999997E-7 : f32
    %261 = vector.broadcast %cst_105 : f32 to vector<32x1xf32>
    %262 = arith.addf %258, %261 : vector<32x1xf32>
    %263 = math.rsqrt %262 : vector<32x1xf32>
    %264 = vector.broadcast %263 : vector<32x1xf32> to vector<32x128xf32>
    %265 = arith.mulf %260, %264 : vector<32x128xf32>
    %266 = vector.broadcast %245 : vector<1x128xf32> to vector<32x128xf32>
    %267 = arith.mulf %265, %266 : vector<32x128xf32>
    %268 = vector.broadcast %247 : vector<1x128xf32> to vector<32x128xf32>
    %269 = arith.addf %267, %268 : vector<32x128xf32>
    %270 = arith.truncf %269 : vector<32x128xf32> to vector<32x128xbf16>
    %c1_106 = arith.constant 1 : index
    %c0_107 = arith.constant 0 : index
    %c0_108 = arith.constant 0 : index
    %271 = vector.load %arg12[%c1_106, %c0_107, %c0_108] : memref<2x128x256xbf16, #tpu.memory_space<vmem>>, vector<1x128x256xbf16>
    %272 = vector.shape_cast %271 : vector<1x128x256xbf16> to vector<128x256xbf16>
    %cst_109 = arith.constant dense<0.000000e+00> : vector<32x256xf32>
    %273 = tpu.matmul %270, %272, %cst_109 {dimension_numbers = #tpu.dot_dimension_numbers<[1], [0], [0], [1], [0, 0, 1, 1], [], []>} : vector<32x128xbf16>, vector<128x256xbf16>, vector<32x256xf32> -> vector<32x256xf32>
    %c1_110 = arith.constant 1 : index
    %c0_111 = arith.constant 0 : index
    %c0_112 = arith.constant 0 : index
    %274 = vector.load %arg13[%c1_110, %c0_111, %c0_112] : memref<2x1x256xf32, #tpu.memory_space<vmem>>, vector<1x1x256xf32>
    %275 = vector.shape_cast %274 : vector<1x1x256xf32> to vector<1x256xf32>
    %276 = vector.broadcast %275 : vector<1x256xf32> to vector<32x256xf32>
    %277 = arith.addf %273, %276 : vector<32x256xf32>
    %278 = arith.mulf %277, %277 : vector<32x256xf32>
    %279 = arith.mulf %277, %278 : vector<32x256xf32>
    %cst_113 = arith.constant 4.471500e-02 : f32
    %280 = vector.broadcast %cst_113 : f32 to vector<32x256xf32>
    %281 = arith.mulf %280, %279 : vector<32x256xf32>
    %282 = arith.addf %277, %281 : vector<32x256xf32>
    %cst_114 = arith.constant 0.797884583 : f32
    %283 = vector.broadcast %cst_114 : f32 to vector<32x256xf32>
    %284 = arith.mulf %283, %282 : vector<32x256xf32>
    %285 = math.tanh %284 : vector<32x256xf32>
    %cst_115 = arith.constant 1.000000e+00 : f32
    %286 = vector.broadcast %cst_115 : f32 to vector<32x256xf32>
    %287 = arith.addf %286, %285 : vector<32x256xf32>
    %cst_116 = arith.constant 5.000000e-01 : f32
    %288 = vector.broadcast %cst_116 : f32 to vector<32x256xf32>
    %289 = arith.mulf %288, %287 : vector<32x256xf32>
    %290 = arith.mulf %277, %289 : vector<32x256xf32>
    %291 = arith.truncf %290 : vector<32x256xf32> to vector<32x256xbf16>
    %c1_117 = arith.constant 1 : index
    %c0_118 = arith.constant 0 : index
    %c0_119 = arith.constant 0 : index
    %292 = vector.load %arg14[%c1_117, %c0_118, %c0_119] : memref<2x256x128xbf16, #tpu.memory_space<vmem>>, vector<1x256x128xbf16>
    %293 = vector.shape_cast %292 : vector<1x256x128xbf16> to vector<256x128xbf16>
    %cst_120 = arith.constant dense<0.000000e+00> : vector<32x128xf32>
    %294 = tpu.matmul %291, %293, %cst_120 {dimension_numbers = #tpu.dot_dimension_numbers<[1], [0], [0], [1], [0, 0, 1, 1], [], []>} : vector<32x256xbf16>, vector<256x128xbf16>, vector<32x128xf32> -> vector<32x128xf32>
    %c1_121 = arith.constant 1 : index
    %c0_122 = arith.constant 0 : index
    %c0_123 = arith.constant 0 : index
    %295 = vector.load %arg15[%c1_121, %c0_122, %c0_123] : memref<2x1x128xf32, #tpu.memory_space<vmem>>, vector<1x1x128xf32>
    %296 = vector.shape_cast %295 : vector<1x1x128xf32> to vector<1x128xf32>
    %297 = vector.broadcast %296 : vector<1x128xf32> to vector<32x128xf32>
    %298 = arith.addf %294, %297 : vector<32x128xf32>
    %299 = arith.addf %243, %298 : vector<32x128xf32>
    %c0_124 = arith.constant 0 : index
    %c0_125 = arith.constant 0 : index
    %300 = vector.load %arg16[%c0_124, %c0_125] : memref<1x128xf32, #tpu.memory_space<vmem>>, vector<1x128xf32>
    %c0_126 = arith.constant 0 : index
    %c0_127 = arith.constant 0 : index
    %301 = vector.load %arg17[%c0_126, %c0_127] : memref<1x128xf32, #tpu.memory_space<vmem>>, vector<1x128xf32>
    %cst_128 = arith.constant dense<0.000000e+00> : vector<32xf32>
    %302 = vector.multi_reduction <add>, %299, %cst_128 [1] : vector<32x128xf32> to vector<32xf32>
    %303 = vector.shape_cast %302 : vector<32xf32> to vector<32x1xf32>
    %cst_129 = arith.constant 1.280000e+02 : f32
    %304 = vector.broadcast %cst_129 : f32 to vector<32x1xf32>
    %305 = arith.divf %303, %304 : vector<32x1xf32>
    %306 = vector.broadcast %305 : vector<32x1xf32> to vector<32x128xf32>
    %307 = arith.subf %299, %306 : vector<32x128xf32>
    %308 = arith.mulf %307, %307 : vector<32x128xf32>
    %cst_130 = arith.constant dense<0.000000e+00> : vector<32xf32>
    %309 = vector.multi_reduction <add>, %308, %cst_130 [1] : vector<32x128xf32> to vector<32xf32>
    %310 = vector.shape_cast %309 : vector<32xf32> to vector<32x1xf32>
    %cst_131 = arith.constant 1.280000e+02 : f32
    %311 = vector.broadcast %cst_131 : f32 to vector<32x1xf32>
    %312 = arith.divf %310, %311 : vector<32x1xf32>
    %313 = vector.broadcast %305 : vector<32x1xf32> to vector<32x128xf32>
    %314 = arith.subf %299, %313 : vector<32x128xf32>
    %cst_132 = arith.constant 9.99999997E-7 : f32
    %315 = vector.broadcast %cst_132 : f32 to vector<32x1xf32>
    %316 = arith.addf %312, %315 : vector<32x1xf32>
    %317 = math.rsqrt %316 : vector<32x1xf32>
    %318 = vector.broadcast %317 : vector<32x1xf32> to vector<32x128xf32>
    %319 = arith.mulf %314, %318 : vector<32x128xf32>
    %320 = vector.broadcast %300 : vector<1x128xf32> to vector<32x128xf32>
    %321 = arith.mulf %319, %320 : vector<32x128xf32>
    %322 = vector.broadcast %301 : vector<1x128xf32> to vector<32x128xf32>
    %323 = arith.addf %321, %322 : vector<32x128xf32>
    %c0_133 = arith.constant 0 : index
    %c0_134 = arith.constant 0 : index
    %324 = vector.load %arg18[%c0_133, %c0_134] : memref<32x128xf32, #tpu.memory_space<vmem>>, vector<32x128xf32>
    tpu.vector_store %arg18[%c0_133, %c0_134], %323 {strides = array<i32>} : memref<32x128xf32, #tpu.memory_space<vmem>>, vector<32x128xf32>,
    return
  }
}

</mosaic_0001>

<llo_original>
// kernel: siglip_vision_transformer.1
$region0: #{siglip_vision_transformer.1}
  #allocation0 [shape = 'u32[]', space=smem, size = 0x4, offset = 0x4, fixed_abs, tag = 'smem constant byte address 0x4 - core index']
  #allocation1 [shape = 'u32[144,128]{1,0:T(1,128)}', space=vmem, size = 0x12000, scoped, tag = 'internal scratch']
  %s0 = inlined_call_operand.vmem [shape: bf16[32,192], index: 0, kind: input, shape index: {}]
  %s1 = inlined_call_operand.vmem [shape: f32[16,128], index: 1, kind: input, shape index: {}]
  %s2 = inlined_call_operand.vmem [shape: bf16[192,128], index: 2, kind: input, shape index: {}]
  %s3 = inlined_call_operand.vmem [shape: f32[1,128], index: 3, kind: input, shape index: {}]
  %s4 = inlined_call_operand.vmem [shape: f32[2,1,128], index: 4, kind: input, shape index: {}]
  %s5 = inlined_call_operand.vmem [shape: f32[2,1,128], index: 5, kind: input, shape index: {}]
  %s6 = inlined_call_operand.vmem [shape: bf16[2,128,256], index: 6, kind: input, shape index: {}]
  %s7 = inlined_call_operand.vmem [shape: f32[2,1,256], index: 7, kind: input, shape index: {}]
  %s8 = inlined_call_operand.vmem [shape: bf16[2,128,128], index: 8, kind: input, shape index: {}]
  %s9 = inlined_call_operand.vmem [shape: f32[2,1,128], index: 9, kind: input, shape index: {}]
  %s10 = inlined_call_operand.vmem [shape: f32[2,1,128], index: 10, kind: input, shape index: {}]
  %s11 = inlined_call_operand.vmem [shape: f32[2,1,128], index: 11, kind: input, shape index: {}]
  %s12 = inlined_call_operand.vmem [shape: bf16[2,128,256], index: 12, kind: input, shape index: {}]
  %s13 = inlined_call_operand.vmem [shape: f32[2,1,256], index: 13, kind: input, shape index: {}]
  %s14 = inlined_call_operand.vmem [shape: bf16[2,256,128], index: 14, kind: input, shape index: {}]
  %s15 = inlined_call_operand.vmem [shape: f32[2,1,128], index: 15, kind: input, shape index: {}]
  %s16 = inlined_call_operand.vmem [shape: f32[1,128], index: 16, kind: input, shape index: {}]
  %s17 = inlined_call_operand.vmem [shape: f32[1,128], index: 17, kind: input, shape index: {}]
  %s18 = inlined_call_operand.hbm [shape: f32[32,128], index: 18, kind: output, shape index: {}]
  %s19 = sld [smem:[#allocation0]]
  $region82: #{siglip_vision_transformer.1} parent=0
    _
  %s21 = ssub.s32 1, %s19
  %s22 = scalar_select 0, %s21, %s19
  $region1: #{siglip_vision_transformer.1} parent=0
    #allocation2 [shape = 'u8[16384]{0}', space=vmem, size = 0x4000, scoped, tag = 'output window, operand 0, single buffered']
    #allocation3 [shape = 's32[1]{0}', space=sflag, size = 0x4, scoped, tag = 'scoped memory for siglip_vision_transformer.1']
    %23 = vsyncpa [#allocation3], 0
    // Predicated region
    $region2: #{siglip_vision_transformer.1} parent=1 // pred_check
      _
    $region3: #{siglip_vision_transformer.1} parent=1 // pred_check_branch
      %25 = sbr.rel (0) target = $region5
    $region4: #{siglip_vision_transformer.1} parent=1 // pred_region
      _
    $region5: #{siglip_vision_transformer.1} parent=1 // pred_fallthru
      _
    // Predicated region
    $region6: #{siglip_vision_transformer.1} parent=1 // pred_check
      _
    $region7: #{siglip_vision_transformer.1} parent=1 // pred_check_branch
      %27 = sbr.rel (0) target = $region9
    $region8: #{siglip_vision_transformer.1} parent=1 // pred_region
      _
    $region9: #{siglip_vision_transformer.1} parent=1 // pred_fallthru
      _
    // Predicated region
    $region10: #{siglip_vision_transformer.1} parent=1 // pred_check
      _
    $region11: #{siglip_vision_transformer.1} parent=1 // pred_check_branch
      %29 = sbr.rel (0) target = $region13
    $region12: #{siglip_vision_transformer.1} parent=1 // pred_region
      _
    $region13: #{siglip_vision_transformer.1} parent=1 // pred_fallthru
      _
    // Predicated region
    $region14: #{siglip_vision_transformer.1} parent=1 // pred_check
      _
    $region15: #{siglip_vision_transformer.1} parent=1 // pred_check_branch
      %31 = sbr.rel (0) target = $region17
    $region16: #{siglip_vision_transformer.1} parent=1 // pred_region
      _
    $region17: #{siglip_vision_transformer.1} parent=1 // pred_fallthru
      _
    // Predicated region
    $region18: #{siglip_vision_transformer.1} parent=1 // pred_check
      _
    $region19: #{siglip_vision_transformer.1} parent=1 // pred_check_branch
      %33 = sbr.rel (0) target = $region21
    $region20: #{siglip_vision_transformer.1} parent=1 // pred_region
      _
    $region21: #{siglip_vision_transformer.1} parent=1 // pred_fallthru
      _
    // Predicated region
    $region22: #{siglip_vision_transformer.1} parent=1 // pred_check
      _
    $region23: #{siglip_vision_transformer.1} parent=1 // pred_check_branch
      %35 = sbr.rel (0) target = $region25
    $region24: #{siglip_vision_transformer.1} parent=1 // pred_region
      _
    $region25: #{siglip_vision_transformer.1} parent=1 // pred_fallthru
      _
    // Predicated region
    $region26: #{siglip_vision_transformer.1} parent=1 // pred_check
      _
    $region27: #{siglip_vision_transformer.1} parent=1 // pred_check_branch
      %37 = sbr.rel (0) target = $region29
    $region28: #{siglip_vision_transformer.1} parent=1 // pred_region
      _
    $region29: #{siglip_vision_transformer.1} parent=1 // pred_fallthru
      _
    // Predicated region
    $region30: #{siglip_vision_transformer.1} parent=1 // pred_check
      _
    $region31: #{siglip_vision_transformer.1} parent=1 // pred_check_branch
      %39 = sbr.rel (0) target = $region33
    $region32: #{siglip_vision_transformer.1} parent=1 // pred_region
      _
    $region33: #{siglip_vision_transformer.1} parent=1 // pred_fallthru
      _
    // Predicated region
    $region34: #{siglip_vision_transformer.1} parent=1 // pred_check
      _
    $region35: #{siglip_vision_transformer.1} parent=1 // pred_check_branch
      %41 = sbr.rel (0) target = $region37
    $region36: #{siglip_vision_transformer.1} parent=1 // pred_region
      _
    $region37: #{siglip_vision_transformer.1} parent=1 // pred_fallthru
      _
    // Predicated region
    $region38: #{siglip_vision_transformer.1} parent=1 // pred_check
      _
    $region39: #{siglip_vision_transformer.1} parent=1 // pred_check_branch
      %43 = sbr.rel (0) target = $region41
    $region40: #{siglip_vision_transformer.1} parent=1 // pred_region
      _
    $region41: #{siglip_vision_transformer.1} parent=1 // pred_fallthru
      _
    // Predicated region
    $region42: #{siglip_vision_transformer.1} parent=1 // pred_check
      _
    $region43: #{siglip_vision_transformer.1} parent=1 // pred_check_branch
      %45 = sbr.rel (0) target = $region45
    $region44: #{siglip_vision_transformer.1} parent=1 // pred_region
      _
    $region45: #{siglip_vision_transformer.1} parent=1 // pred_fallthru
      _
    // Predicated region
    $region46: #{siglip_vision_transformer.1} parent=1 // pred_check
      _
    $region47: #{siglip_vision_transformer.1} parent=1 // pred_check_branch
      %47 = sbr.rel (0) target = $region49
    $region48: #{siglip_vision_transformer.1} parent=1 // pred_region
      _
    $region49: #{siglip_vision_transformer.1} parent=1 // pred_fallthru
      _
    // Predicated region
    $region50: #{siglip_vision_transformer.1} parent=1 // pred_check
      _
    $region51: #{siglip_vision_transformer.1} parent=1 // pred_check_branch
      %49 = sbr.rel (0) target = $region53
    $region52: #{siglip_vision_transformer.1} parent=1 // pred_region
      _
    $region53: #{siglip_vision_transformer.1} parent=1 // pred_fallthru
      _
    // Predicated region
    $region54: #{siglip_vision_transformer.1} parent=1 // pred_check
      _
    $region55: #{siglip_vision_transformer.1} parent=1 // pred_check_branch
      %51 = sbr.rel (0) target = $region57
    $region56: #{siglip_vision_transformer.1} parent=1 // pred_region
      _
    $region57: #{siglip_vision_transformer.1} parent=1 // pred_fallthru
      _
    // Predicated region
    $region58: #{siglip_vision_transformer.1} parent=1 // pred_check
      _
    $region59: #{siglip_vision_transformer.1} parent=1 // pred_check_branch
      %53 = sbr.rel (0) target = $region61
    $region60: #{siglip_vision_transformer.1} parent=1 // pred_region
      _
    $region61: #{siglip_vision_transformer.1} parent=1 // pred_fallthru
      _
    // Predicated region
    $region62: #{siglip_vision_transformer.1} parent=1 // pred_check
      _
    $region63: #{siglip_vision_transformer.1} parent=1 // pred_check_branch
      %55 = sbr.rel (0) target = $region65
    $region64: #{siglip_vision_transformer.1} parent=1 // pred_region
      _
    $region65: #{siglip_vision_transformer.1} parent=1 // pred_fallthru
      _
    // Predicated region
    $region66: #{siglip_vision_transformer.1} parent=1 // pred_check
      _
    $region67: #{siglip_vision_transformer.1} parent=1 // pred_check_branch
      %57 = sbr.rel (0) target = $region69
    $region68: #{siglip_vision_transformer.1} parent=1 // pred_region
      _
    $region69: #{siglip_vision_transformer.1} parent=1 // pred_fallthru
      _
    // Predicated region
    $region70: #{siglip_vision_transformer.1} parent=1 // pred_check
      _
    $region71: #{siglip_vision_transformer.1} parent=1 // pred_check_branch
      %59 = sbr.rel (0) target = $region73
    $region72: #{siglip_vision_transformer.1} parent=1 // pred_region
      _
    $region73: #{siglip_vision_transformer.1} parent=1 // pred_fallthru
      _
    %v61 = vld [vmem:[%s0] sm:$0xff]
    %v62 = vld [vmem:[%s0 + $0x8] sm:$0xff]
    %v63 = vld [vmem:[%s0 + $0x10] sm:$0xff]
    %v64 = vld [vmem:[%s0 + $0x18] sm:$0xff]
    %v65 = vld [vmem:[%s2] sm:$0xf]
    %v66 = vld [vmem:[%s2 + $0x4] sm:$0xf]
    %v67 = vld [vmem:[%s2 + $0x8] sm:$0xf]
    %v68 = vld [vmem:[%s2 + $0xc] sm:$0xf]
    %v69 = vld [vmem:[%s2 + $0x10] sm:$0xf]
    %v70 = vld [vmem:[%s2 + $0x14] sm:$0xf]
    %v71 = vld [vmem:[%s2 + $0x18] sm:$0xf]
    %v72 = vld [vmem:[%s2 + $0x1c] sm:$0xf]
    %v73 = vld [vmem:[%s2 + $0x20] sm:$0xf]
    %v74 = vld [vmem:[%s2 + $0x24] sm:$0xf]
    %v75 = vld [vmem:[%s2 + $0x28] sm:$0xf]
    %v76 = vld [vmem:[%s2 + $0x2c] sm:$0xf]
    %v77 = vld [vmem:[%s2 + $0x30] sm:$0xf]
    %v78 = vld [vmem:[%s2 + $0x34] sm:$0xf]
    %v79 = vld [vmem:[%s2 + $0x38] sm:$0xf]
    %v80 = vld [vmem:[%s2 + $0x3c] sm:$0xf]
    %v81 = vld [vmem:[%s2 + $0x40] sm:$0xf]
    %v82 = vld [vmem:[%s2 + $0x44] sm:$0xf]
    %v83 = vld [vmem:[%s2 + $0x48] sm:$0xf]
    %v84 = vld [vmem:[%s2 + $0x4c] sm:$0xf]
    %v85 = vld [vmem:[%s2 + $0x50] sm:$0xf]
    %v86 = vld [vmem:[%s2 + $0x54] sm:$0xf]
    %v87 = vld [vmem:[%s2 + $0x58] sm:$0xf]
    %v88 = vld [vmem:[%s2 + $0x5c] sm:$0xf]
    %v89 = vld [vmem:[%s3] sm:$0x1]
    %v91 = vlaneseq
    %v92 = vshrl.u32 %v91, 7
    %v93 = vsub.s32 0, %v92
    %v94 = vrot.slane %v89, %v93
    %v100 = vunpack.c.l.b16 %v61
    %v101 = vunpack.c.h.b16 %v61
    %v102 = vunpack.c.l.b16 %v62
    %v103 = vunpack.c.h.b16 %v62
    %v104 = vunpack.c.l.b16 %v63
    %v105 = vunpack.c.h.b16 %v63
    %v106 = vunpack.c.l.b16 %v64
    %v107 = vunpack.c.h.b16 %v64
    %v108 = vpack.c.b16 %v102, %v100
    %v109 = vpack.c.b16 %v103, %v101
    %v110 = vpack.c.b16 %v106, %v104
    %v111 = vpack.c.b16 %v107, %v105
    %v138 = vunpack.c.l.b16 %v65
    %v139 = vunpack.c.l.b16 %v66
    %v140 = vunpack.c.l.b16 %v67
    %v141 = vunpack.c.l.b16 %v68
    %v142 = vunpack.c.l.b16 %v69
    %v143 = vunpack.c.l.b16 %v70
    %v144 = vunpack.c.l.b16 %v71
    %v145 = vunpack.c.l.b16 %v72
    %v146 = vunpack.c.l.b16 %v73
    %v147 = vunpack.c.l.b16 %v74
    %v148 = vunpack.c.l.b16 %v75
    %v149 = vunpack.c.l.b16 %v76
    %v150 = vunpack.c.l.b16 %v77
    %v151 = vunpack.c.l.b16 %v78
    %v152 = vunpack.c.l.b16 %v79
    %v153 = vunpack.c.l.b16 %v80
    %v154 = vunpack.c.l.b16 %v81
    %v155 = vunpack.c.l.b16 %v82
    %v156 = vunpack.c.l.b16 %v83
    %v157 = vunpack.c.l.b16 %v84
    %v158 = vunpack.c.l.b16 %v85
    %v159 = vunpack.c.l.b16 %v86
    %v160 = vunpack.c.l.b16 %v87
    %v161 = vunpack.c.l.b16 %v88
    %v162 = vpack.c.b16 %v139, %v138
    %v163 = vpack.c.b16 %v141, %v140
    %v164 = vpack.c.b16 %v143, %v142
    %v165 = vpack.c.b16 %v145, %v144
    %v166 = vpack.c.b16 %v147, %v146
    %v167 = vpack.c.b16 %v149, %v148
    %v168 = vpack.c.b16 %v151, %v150
    %v169 = vpack.c.b16 %v153, %v152
    %v170 = vpack.c.b16 %v155, %v154
    %v171 = vpack.c.b16 %v157, %v156
    %v172 = vpack.c.b16 %v159, %v158
    %v173 = vpack.c.b16 %v161, %v160
    %vm186 = vcmask 523264
    %v188 = vsel %vm186, %v109, 0
    %v191 = vsel %vm186, %v111, 0
    %193 = vmatprep.subr.bf16.mxu0 0
    %194 = vmatpush1.bf16.msra.mxu0 %v162
    %195 = vmatprep.subr.bf16.mxu0 0
    %196 = vmatpush1.bf16.msra.mxu0 %v163
    %197 = vmatprep.subr.bf16.mxu0 0
    %198 = vmatpush1.bf16.msra.mxu0 %v164
    %199 = vmatprep.subr.bf16.mxu0 0
    %200 = vmatpush1.bf16.msra.mxu0 %v165
    %201 = vmatprep.subr.bf16.mxu0 0
    %202 = vmatpush1.bf16.msra.mxu0 %v166
    %203 = vmatprep.subr.bf16.mxu0 0
    %204 = vmatpush1.bf16.msra.mxu0 %v167
    %205 = vmatprep.subr.bf16.mxu0 0
    %206 = vmatpush1.bf16.msra.mxu0 %v168
    %207 = vmatprep.subr.bf16.mxu0 0
    %208 = vmatpush1.bf16.msra.mxu0 %v169
    %209 = vmatprep.subr.bf16.mxu0 0
    %210 = vmatpush1.bf16.msra.mxu0 %v170
    %211 = vmatprep.subr.bf16.mxu0 0
    %212 = vmatpush1.bf16.msra.mxu0 %v171
    %213 = vmatprep.subr.bf16.mxu0 0
    %214 = vmatpush1.bf16.msra.mxu0 %v172
    %215 = vmatprep.subr.bf16.mxu0 0
    %216 = vmatpush1.bf16.msra.mxu0 %v173
    %217 = vmatprep.subr.bf16.mxu0 0
    %218 = vmatpush1.bf16.msra.mxu0 0
    %219 = vmatprep.subr.bf16.mxu0 0
    %220 = vmatpush1.bf16.msra.mxu0 0
    %221 = vmatprep.subr.bf16.mxu0 0
    %222 = vmatpush1.bf16.msra.mxu0 0
    %223 = vmatprep.subr.bf16.mxu0 0
    %224 = vmatpush1.bf16.msra.mxu0 0
    %225 = vmatprep.mubr.bf16.mxu0 %v188
    %226 = vmatmul.mubr.bf16.gmra.mrb[0].mxu0 %v108
    %v227 = vpop.f32.mrb[0].mxu0
    %v228 = vadd.f32 %v94, %v227
    %v229 = vpop.f32.mrb[0].mxu0
    %v230 = vpop.f32.mrb[0].mxu0
    %v231 = vadd.f32 %v94, %v230
    %v232 = vpop.f32.mrb[0].mxu0
    %233 = vmatprep.mubr.bf16.mxu0 %v191
    %234 = vmatmul.mubr.bf16.gmra.mrb[0].mxu0 %v110
    %v235 = vpop.f32.mrb[0].mxu0
    %v236 = vadd.f32 %v94, %v235
    %v237 = vpop.f32.mrb[0].mxu0
    %v238 = vpop.f32.mrb[0].mxu0
    %v239 = vadd.f32 %v94, %v238
    %v240 = vpop.f32.mrb[0].mxu0
    %241 = vdwg.mxu0
    %v242 = vld [vmem:[%s1] sm:$0xff]
    %v243 = vld [vmem:[%s1 + $0x8] sm:$0xff]
    %v244 = vadd.f32 %v228, %v242
    %v245 = vadd.f32 %v231, %v243
    %v246 = vadd.f32 %v236, %v242
    %v247 = vadd.f32 %v239, %v243
    %v248 = vld [vmem:[%s4] sm:$0x1]
    %v249 = vld [vmem:[%s5] sm:$0x1]
    %250 = vadd.xlane.f32.xlu0 %v244
    %v251 = vpop.xlane.xlu0 %250
    %252 = vadd.xlane.f32.xlu0 %v245
    %v253 = vpop.xlane.xlu0 %252
    %254 = vadd.xlane.f32.xlu0 %v246
    %v255 = vpop.xlane.xlu0 %254
    %256 = vadd.xlane.f32.xlu0 %v247
    %v257 = vpop.xlane.xlu0 %256
    %v258 = vrcp.pop 128.0
    %v259 = vmul.f32 %v251, %v258
    %v260 = vmul.f32 %v253, %v258
    %v261 = vmul.f32 %v255, %v258
    %v262 = vmul.f32 %v257, %v258
    %v263 = vsub.f32 %v244, %v259
    %v264 = vsub.f32 %v245, %v260
    %v265 = vsub.f32 %v246, %v261
    %v266 = vsub.f32 %v247, %v262
    %v267 = vmul.f32 %v263, %v263
    %v268 = vmul.f32 %v264, %v264
    %v269 = vmul.f32 %v265, %v265
    %v270 = vmul.f32 %v266, %v266
    %271 = vadd.xlane.f32.xlu0 %v267
    %v272 = vpop.xlane.xlu0 %271
    %273 = vadd.xlane.f32.xlu0 %v268
    %v274 = vpop.xlane.xlu0 %273
    %275 = vadd.xlane.f32.xlu0 %v269
    %v276 = vpop.xlane.xlu0 %275
    %277 = vadd.xlane.f32.xlu0 %v270
    %v278 = vpop.xlane.xlu0 %277
    %v279 = vmul.f32 %v272, %v258
    %v280 = vmul.f32 %v274, %v258
    %v281 = vmul.f32 %v276, %v258
    %v282 = vmul.f32 %v278, %v258
    %v283 = vadd.f32 %v279, 1e-06
    %v284 = vadd.f32 %v280, 1e-06
    %v285 = vadd.f32 %v281, 1e-06
    %v286 = vadd.f32 %v282, 1e-06
    %v287 = vrsqrt.pop %v283
    %v288 = vrsqrt.pop %v284
    %v289 = vrsqrt.pop %v285
    %v290 = vrsqrt.pop %v286
    %v291 = vmul.f32 %v263, %v287
    %v292 = vmul.f32 %v264, %v288
    %v293 = vmul.f32 %v265, %v289
    %v294 = vmul.f32 %v266, %v290
    %v296 = vlaneseq
    %v297 = vshrl.u32 %v296, 7
    %v298 = vsub.s32 0, %v297
    %v299 = vrot.slane %v248, %v298
    %v301 = vmul.f32 %v291, %v299
    %v302 = vmul.f32 %v292, %v299
    %v303 = vmul.f32 %v293, %v299
    %v304 = vmul.f32 %v294, %v299
    %v306 = vlaneseq
    %v307 = vshrl.u32 %v306, 7
    %v308 = vsub.s32 0, %v307
    %v309 = vrot.slane %v249, %v308
    %v311 = vadd.f32 %v301, %v309
    %v312 = vadd.f32 %v302, %v309
    %v313 = vadd.f32 %v303, %v309
    %v314 = vadd.f32 %v304, %v309
    %v315 = vpack.c.bf16 %v312, %v311
    %v316 = vpack.c.bf16 %v314, %v313
    %v317 = vld [vmem:[%s6] sm:$0xff]
    %v318 = vld [vmem:[%s6 + $0x8] sm:$0xff]
    %v319 = vld [vmem:[%s6 + $0x10] sm:$0xff]
    %v320 = vld [vmem:[%s6 + $0x18] sm:$0xff]
    %v321 = vld [vmem:[%s6 + $0x20] sm:$0xff]
    %v322 = vld [vmem:[%s6 + $0x28] sm:$0xff]
    %v323 = vld [vmem:[%s6 + $0x30] sm:$0xff]
    %v324 = vld [vmem:[%s6 + $0x38] sm:$0xff]
    %v325 = vld [vmem:[%s6 + $0x40] sm:$0xff]
    %v326 = vld [vmem:[%s6 + $0x48] sm:$0xff]
    %v327 = vld [vmem:[%s6 + $0x50] sm:$0xff]
    %v328 = vld [vmem:[%s6 + $0x58] sm:$0xff]
    %v329 = vld [vmem:[%s6 + $0x60] sm:$0xff]
    %v330 = vld [vmem:[%s6 + $0x68] sm:$0xff]
    %v331 = vld [vmem:[%s6 + $0x70] sm:$0xff]
    %v332 = vld [vmem:[%s6 + $0x78] sm:$0xff]
    %v333 = vld [vmem:[%s7] sm:$0x3]
    %v335 = vlaneseq
    %v336 = vshrl.u32 %v335, 7
    %v337 = vsub.s32 0, %v336
    %v338 = vrot.slane %v333, %v337
    %v339 = vlaneseq
    %v340 = vshrl.u32 %v339, 7
    %v341 = vsub.s32 1, %v340
    %v342 = vrot.slane %v333, %v341
    %v361 = vunpack.c.l.b16 %v317
    %v362 = vunpack.c.h.b16 %v317
    %v363 = vunpack.c.l.b16 %v318
    %v364 = vunpack.c.h.b16 %v318
    %v365 = vunpack.c.l.b16 %v319
    %v366 = vunpack.c.h.b16 %v319
    %v367 = vunpack.c.l.b16 %v320
    %v368 = vunpack.c.h.b16 %v320
    %v369 = vunpack.c.l.b16 %v321
    %v370 = vunpack.c.h.b16 %v321
    %v371 = vunpack.c.l.b16 %v322
    %v372 = vunpack.c.h.b16 %v322
    %v373 = vunpack.c.l.b16 %v323
    %v374 = vunpack.c.h.b16 %v323
    %v375 = vunpack.c.l.b16 %v324
    %v376 = vunpack.c.h.b16 %v324
    %v377 = vunpack.c.l.b16 %v325
    %v378 = vunpack.c.h.b16 %v325
    %v379 = vunpack.c.l.b16 %v326
    %v380 = vunpack.c.h.b16 %v326
    %v381 = vunpack.c.l.b16 %v327
    %v382 = vunpack.c.h.b16 %v327
    %v383 = vunpack.c.l.b16 %v328
    %v384 = vunpack.c.h.b16 %v328
    %v385 = vunpack.c.l.b16 %v329
    %v386 = vunpack.c.h.b16 %v329
    %v387 = vunpack.c.l.b16 %v330
    %v388 = vunpack.c.h.b16 %v330
    %v389 = vunpack.c.l.b16 %v331
    %v390 = vunpack.c.h.b16 %v331
    %v391 = vunpack.c.l.b16 %v332
    %v392 = vunpack.c.h.b16 %v332
    %v393 = vpack.c.b16 %v363, %v361
    %v394 = vpack.c.b16 %v364, %v362
    %v395 = vpack.c.b16 %v367, %v365
    %v396 = vpack.c.b16 %v368, %v366
    %v397 = vpack.c.b16 %v371, %v369
    %v398 = vpack.c.b16 %v372, %v370
    %v399 = vpack.c.b16 %v375, %v373
    %v400 = vpack.c.b16 %v376, %v374
    %v401 = vpack.c.b16 %v379, %v377
    %v402 = vpack.c.b16 %v380, %v378
    %v403 = vpack.c.b16 %v383, %v381
    %v404 = vpack.c.b16 %v384, %v382
    %v405 = vpack.c.b16 %v387, %v385
    %v406 = vpack.c.b16 %v388, %v386
    %v407 = vpack.c.b16 %v391, %v389
    %v408 = vpack.c.b16 %v392, %v390
    %425 = vmatprep.subr.bf16.mxu0 %v394
    %426 = vmatpush1.bf16.msra.mxu0 %v393
    %427 = vmatprep.subr.bf16.mxu0 %v396
    %428 = vmatpush1.bf16.msra.mxu0 %v395
    %429 = vmatprep.subr.bf16.mxu0 %v398
    %430 = vmatpush1.bf16.msra.mxu0 %v397
    %431 = vmatprep.subr.bf16.mxu0 %v400
    %432 = vmatpush1.bf16.msra.mxu0 %v399
    %433 = vmatprep.subr.bf16.mxu0 %v402
    %434 = vmatpush1.bf16.msra.mxu0 %v401
    %435 = vmatprep.subr.bf16.mxu0 %v404
    %436 = vmatpush1.bf16.msra.mxu0 %v403
    %437 = vmatprep.subr.bf16.mxu0 %v406
    %438 = vmatpush1.bf16.msra.mxu0 %v405
    %439 = vmatprep.subr.bf16.mxu0 %v408
    %440 = vmatpush1.bf16.msra.mxu0 %v407
    %441 = vmatprep.subr.bf16.mxu0 0
    %442 = vmatpush1.bf16.msra.mxu0 0
    %443 = vmatprep.subr.bf16.mxu0 0
    %444 = vmatpush1.bf16.msra.mxu0 0
    %445 = vmatprep.subr.bf16.mxu0 0
    %446 = vmatpush1.bf16.msra.mxu0 0
    %447 = vmatprep.subr.bf16.mxu0 0
    %448 = vmatpush1.bf16.msra.mxu0 0
    %449 = vmatprep.subr.bf16.mxu0 0
    %450 = vmatpush1.bf16.msra.mxu0 0
    %451 = vmatprep.subr.bf16.mxu0 0
    %452 = vmatpush1.bf16.msra.mxu0 0
    %453 = vmatprep.subr.bf16.mxu0 0
    %454 = vmatpush1.bf16.msra.mxu0 0
    %455 = vmatprep.subr.bf16.mxu0 0
    %456 = vmatpush1.bf16.msra.mxu0 0
    %457 = vmatprep.mubr.bf16.mxu0 0
    %458 = vmatmul.mubr.bf16.gmra.mrb[0].mxu0 %v315
    %v459 = vpop.f32.mrb[0].mxu0
    %v460 = vadd.f32 %v338, %v459
    %v461 = vpop.f32.mrb[0].mxu0
    %v462 = vadd.f32 %v342, %v461
    %v463 = vpop.f32.mrb[0].mxu0
    %v464 = vadd.f32 %v338, %v463
    %v465 = vpop.f32.mrb[0].mxu0
    %v466 = vadd.f32 %v342, %v465
    %467 = vmatprep.mubr.bf16.mxu0 0
    %468 = vmatmul.mubr.bf16.gmra.mrb[0].mxu0 %v316
    %v469 = vpop.f32.mrb[0].mxu0
    %v470 = vadd.f32 %v338, %v469
    %v471 = vpop.f32.mrb[0].mxu0
    %v472 = vadd.f32 %v342, %v471
    %v473 = vpop.f32.mrb[0].mxu0
    %v474 = vadd.f32 %v338, %v473
    %v475 = vpop.f32.mrb[0].mxu0
    %v476 = vadd.f32 %v342, %v475
    %477 = vdwg.mxu0
    %v478 = vpack.c.bf16 %v464, %v460
    %v479 = vpack.c.bf16 %v466, %v462
    %v480 = vpack.c.bf16 %v474, %v470
    %v481 = vpack.c.bf16 %v476, %v472
    %484 = vrot.lane.b32.xlu0 %v478, 96
    %v485 = vpop.permute.xlu0 %484
    %486 = vrot.lane.b32.xlu0 %v480, 96
    %v487 = vpop.permute.xlu0 %486
    %488 = vrot.lane.b32.xlu0 %v478, 64
    %v489 = vpop.permute.xlu0 %488
    %490 = vrot.lane.b32.xlu0 %v480, 64
    %v491 = vpop.permute.xlu0 %490
    %492 = vrot.lane.b32.xlu0 %v478, 32
    %v493 = vpop.permute.xlu0 %492
    %494 = vrot.lane.b32.xlu0 %v480, 32
    %v495 = vpop.permute.xlu0 %494
    %498 = vrot.lane.b32.xlu0 %v479, 96
    %v499 = vpop.permute.xlu0 %498
    %500 = vrot.lane.b32.xlu0 %v481, 96
    %v501 = vpop.permute.xlu0 %500
    %504 = vrot.lane.b32.xlu0 %v479, 64
    %v505 = vpop.permute.xlu0 %504
    %506 = vrot.lane.b32.xlu0 %v481, 64
    %v507 = vpop.permute.xlu0 %506
    %510 = vrot.lane.b32.xlu0 %v479, 32
    %v511 = vpop.permute.xlu0 %510
    %512 = vrot.lane.b32.xlu0 %v481, 32
    %v513 = vpop.permute.xlu0 %512
    %vm516 = vcmask 261120
    %v518 = vsel %vm516, %v478, 0
    %520 = vmatprep.subr.bf16.mxu0 0
    %521 = vmatpush1.bf16.xpose.msra.mxu0 %v518
    %522 = vmatprep.subr.bf16.mxu0 0
    %523 = vmatpush1.bf16.xpose.msra.mxu0 0
    %524 = vmatprep.subr.bf16.mxu0 0
    %525 = vmatpush1.bf16.xpose.msra.mxu0 0
    %526 = vmatprep.subr.bf16.mxu0 0
    %527 = vmatpush1.bf16.xpose.msra.mxu0 0
    %528 = vmatprep.subr.bf16.mxu0 0
    %529 = vmatpush1.bf16.xpose.msra.mxu0 0
    %530 = vmatprep.subr.bf16.mxu0 0
    %531 = vmatpush1.bf16.xpose.msra.mxu0 0
    %532 = vmatprep.subr.bf16.mxu0 0
    %533 = vmatpush1.bf16.xpose.msra.mxu0 0
    %534 = vmatprep.subr.bf16.mxu0 0
    %535 = vmatpush1.bf16.xpose.msra.mxu0 0
    %536 = vmatprep.subr.bf16.mxu0 0
    %537 = vmatpush1.bf16.xpose.msra.mxu0 0
    %538 = vmatprep.subr.bf16.mxu0 0
    %539 = vmatpush1.bf16.xpose.msra.mxu0 0
    %540 = vmatprep.subr.bf16.mxu0 0
    %541 = vmatpush1.bf16.xpose.msra.mxu0 0
    %542 = vmatprep.subr.bf16.mxu0 0
    %543 = vmatpush1.bf16.xpose.msra.mxu0 0
    %544 = vmatprep.subr.bf16.mxu0 0
    %545 = vmatpush1.bf16.xpose.msra.mxu0 0
    %546 = vmatprep.subr.bf16.mxu0 0
    %547 = vmatpush1.bf16.xpose.msra.mxu0 0
    %548 = vmatprep.subr.bf16.mxu0 0
    %549 = vmatpush1.bf16.xpose.msra.mxu0 0
    %550 = vmatprep.subr.bf16.mxu0 0
    %551 = vmatpush1.bf16.xpose.msra.mxu0 0
    %552 = vmatprep.mubr.bf16.mxu0 0
    %553 = vmatmul.mubr.bf16.gmra.mrb[0].mxu0 %v518
    %v554 = vpop.f32.mrb[0].mxu0
    %v555 = vadd.f32 0.0, %v554
    %v556 = vpop.f32.mrb[0].mxu0
    %v557 = vpop.f32.mrb[0].mxu0
    %v558 = vadd.f32 0.0, %v557
    %v559 = vpop.f32.mrb[0].mxu0
    %560 = vdwg.mxu0
    %v562 = vsel %vm516, %v480, 0
    %564 = vmatprep.subr.bf16.mxu0 0
    %565 = vmatpush1.bf16.xpose.msra.mxu0 %v562
    %566 = vmatprep.subr.bf16.mxu0 0
    %567 = vmatpush1.bf16.xpose.msra.mxu0 0
    %568 = vmatprep.subr.bf16.mxu0 0
    %569 = vmatpush1.bf16.xpose.msra.mxu0 0
    %570 = vmatprep.subr.bf16.mxu0 0
    %571 = vmatpush1.bf16.xpose.msra.mxu0 0
    %572 = vmatprep.subr.bf16.mxu0 0
    %573 = vmatpush1.bf16.xpose.msra.mxu0 0
    %574 = vmatprep.subr.bf16.mxu0 0
    %575 = vmatpush1.bf16.xpose.msra.mxu0 0
    %576 = vmatprep.subr.bf16.mxu0 0
    %577 = vmatpush1.bf16.xpose.msra.mxu0 0
    %578 = vmatprep.subr.bf16.mxu0 0
    %579 = vmatpush1.bf16.xpose.msra.mxu0 0
    %580 = vmatprep.subr.bf16.mxu0 0
    %581 = vmatpush1.bf16.xpose.msra.mxu0 0
    %582 = vmatprep.subr.bf16.mxu0 0
    %583 = vmatpush1.bf16.xpose.msra.mxu0 0
    %584 = vmatprep.subr.bf16.mxu0 0
    %585 = vmatpush1.bf16.xpose.msra.mxu0 0
    %586 = vmatprep.subr.bf16.mxu0 0
    %587 = vmatpush1.bf16.xpose.msra.mxu0 0
    %588 = vmatprep.subr.bf16.mxu0 0
    %589 = vmatpush1.bf16.xpose.msra.mxu0 0
    %590 = vmatprep.subr.bf16.mxu0 0
    %591 = vmatpush1.bf16.xpose.msra.mxu0 0
    %592 = vmatprep.subr.bf16.mxu0 0
    %593 = vmatpush1.bf16.xpose.msra.mxu0 0
    %594 = vmatprep.subr.bf16.mxu0 0
    %595 = vmatpush1.bf16.xpose.msra.mxu0 0
    %596 = vmatprep.mubr.bf16.mxu0 0
    %597 = vmatmul.mubr.bf16.gmra.mrb[0].mxu0 %v562
    %v598 = vpop.f32.mrb[0].mxu0
    %v599 = vadd.f32 0.0, %v598
    %v600 = vpop.f32.mrb[0].mxu0
    %v601 = vpop.f32.mrb[0].mxu0
    %v602 = vadd.f32 0.0, %v601
    %v603 = vpop.f32.mrb[0].mxu0
    %604 = vdwg.mxu0
    %v606 = vsel %vm516, %v485, 0
    %608 = vmatprep.subr.bf16.mxu0 0
    %609 = vmatpush1.bf16.xpose.msra.mxu0 %v606
    %610 = vmatprep.subr.bf16.mxu0 0
    %611 = vmatpush1.bf16.xpose.msra.mxu0 0
    %612 = vmatprep.subr.bf16.mxu0 0
    %613 = vmatpush1.bf16.xpose.msra.mxu0 0
    %614 = vmatprep.subr.bf16.mxu0 0
    %615 = vmatpush1.bf16.xpose.msra.mxu0 0
    %616 = vmatprep.subr.bf16.mxu0 0
    %617 = vmatpush1.bf16.xpose.msra.mxu0 0
    %618 = vmatprep.subr.bf16.mxu0 0
    %619 = vmatpush1.bf16.xpose.msra.mxu0 0
    %620 = vmatprep.subr.bf16.mxu0 0
    %621 = vmatpush1.bf16.xpose.msra.mxu0 0
    %622 = vmatprep.subr.bf16.mxu0 0
    %623 = vmatpush1.bf16.xpose.msra.mxu0 0
    %624 = vmatprep.subr.bf16.mxu0 0
    %625 = vmatpush1.bf16.xpose.msra.mxu0 0
    %626 = vmatprep.subr.bf16.mxu0 0
    %627 = vmatpush1.bf16.xpose.msra.mxu0 0
    %628 = vmatprep.subr.bf16.mxu0 0
    %629 = vmatpush1.bf16.xpose.msra.mxu0 0
    %630 = vmatprep.subr.bf16.mxu0 0
    %631 = vmatpush1.bf16.xpose.msra.mxu0 0
    %632 = vmatprep.subr.bf16.mxu0 0
    %633 = vmatpush1.bf16.xpose.msra.mxu0 0
    %634 = vmatprep.subr.bf16.mxu0 0
    %635 = vmatpush1.bf16.xpose.msra.mxu0 0
    %636 = vmatprep.subr.bf16.mxu0 0
    %637 = vmatpush1.bf16.xpose.msra.mxu0 0
    %638 = vmatprep.subr.bf16.mxu0 0
    %639 = vmatpush1.bf16.xpose.msra.mxu0 0
    %640 = vmatprep.mubr.bf16.mxu0 0
    %641 = vmatmul.mubr.bf16.gmra.mrb[0].mxu0 %v606
    %v642 = vpop.f32.mrb[0].mxu0
    %v643 = vadd.f32 0.0, %v642
    %v644 = vpop.f32.mrb[0].mxu0
    %v645 = vpop.f32.mrb[0].mxu0
    %v646 = vadd.f32 0.0, %v645
    %v647 = vpop.f32.mrb[0].mxu0
    %648 = vdwg.mxu0
    %v650 = vsel %vm516, %v487, 0
    %652 = vmatprep.subr.bf16.mxu0 0
    %653 = vmatpush1.bf16.xpose.msra.mxu0 %v650
    %654 = vmatprep.subr.bf16.mxu0 0
    %655 = vmatpush1.bf16.xpose.msra.mxu0 0
    %656 = vmatprep.subr.bf16.mxu0 0
    %657 = vmatpush1.bf16.xpose.msra.mxu0 0
    %658 = vmatprep.subr.bf16.mxu0 0
    %659 = vmatpush1.bf16.xpose.msra.mxu0 0
    %660 = vmatprep.subr.bf16.mxu0 0
    %661 = vmatpush1.bf16.xpose.msra.mxu0 0
    %662 = vmatprep.subr.bf16.mxu0 0
    %663 = vmatpush1.bf16.xpose.msra.mxu0 0
    %664 = vmatprep.subr.bf16.mxu0 0
    %665 = vmatpush1.bf16.xpose.msra.mxu0 0
    %666 = vmatprep.subr.bf16.mxu0 0
    %667 = vmatpush1.bf16.xpose.msra.mxu0 0
    %668 = vmatprep.subr.bf16.mxu0 0
    %669 = vmatpush1.bf16.xpose.msra.mxu0 0
    %670 = vmatprep.subr.bf16.mxu0 0
    %671 = vmatpush1.bf16.xpose.msra.mxu0 0
    %672 = vmatprep.subr.bf16.mxu0 0
    %673 = vmatpush1.bf16.xpose.msra.mxu0 0
    %674 = vmatprep.subr.bf16.mxu0 0
    %675 = vmatpush1.bf16.xpose.msra.mxu0 0
    %676 = vmatprep.subr.bf16.mxu0 0
    %677 = vmatpush1.bf16.xpose.msra.mxu0 0
    %678 = vmatprep.subr.bf16.mxu0 0
    %679 = vmatpush1.bf16.xpose.msra.mxu0 0
    %680 = vmatprep.subr.bf16.mxu0 0
    %681 = vmatpush1.bf16.xpose.msra.mxu0 0
    %682 = vmatprep.subr.bf16.mxu0 0
    %683 = vmatpush1.bf16.xpose.msra.mxu0 0
    %684 = vmatprep.mubr.bf16.mxu0 0
    %685 = vmatmul.mubr.bf16.gmra.mrb[0].mxu0 %v650
    %v686 = vpop.f32.mrb[0].mxu0
    %v687 = vadd.f32 0.0, %v686
    %v688 = vpop.f32.mrb[0].mxu0
    %v689 = vpop.f32.mrb[0].mxu0
    %v690 = vadd.f32 0.0, %v689
    %v691 = vpop.f32.mrb[0].mxu0
    %692 = vdwg.mxu0
    %v694 = vsel %vm516, %v489, 0
    %696 = vmatprep.subr.bf16.mxu0 0
    %697 = vmatpush1.bf16.xpose.msra.mxu0 %v694
    %698 = vmatprep.subr.bf16.mxu0 0
    %699 = vmatpush1.bf16.xpose.msra.mxu0 0
    %700 = vmatprep.subr.bf16.mxu0 0
    %701 = vmatpush1.bf16.xpose.msra.mxu0 0
    %702 = vmatprep.subr.bf16.mxu0 0
    %703 = vmatpush1.bf16.xpose.msra.mxu0 0
    %704 = vmatprep.subr.bf16.mxu0 0
    %705 = vmatpush1.bf16.xpose.msra.mxu0 0
    %706 = vmatprep.subr.bf16.mxu0 0
    %707 = vmatpush1.bf16.xpose.msra.mxu0 0
    %708 = vmatprep.subr.bf16.mxu0 0
    %709 = vmatpush1.bf16.xpose.msra.mxu0 0
    %710 = vmatprep.subr.bf16.mxu0 0
    %711 = vmatpush1.bf16.xpose.msra.mxu0 0
    %712 = vmatprep.subr.bf16.mxu0 0
    %713 = vmatpush1.bf16.xpose.msra.mxu0 0
    %714 = vmatprep.subr.bf16.mxu0 0
    %715 = vmatpush1.bf16.xpose.msra.mxu0 0
    %716 = vmatprep.subr.bf16.mxu0 0
    %717 = vmatpush1.bf16.xpose.msra.mxu0 0
    %718 = vmatprep.subr.bf16.mxu0 0
    %719 = vmatpush1.bf16.xpose.msra.mxu0 0
    %720 = vmatprep.subr.bf16.mxu0 0
    %721 = vmatpush1.bf16.xpose.msra.mxu0 0
    %722 = vmatprep.subr.bf16.mxu0 0
    %723 = vmatpush1.bf16.xpose.msra.mxu0 0
    %724 = vmatprep.subr.bf16.mxu0 0
    %725 = vmatpush1.bf16.xpose.msra.mxu0 0
    %726 = vmatprep.subr.bf16.mxu0 0
    %727 = vmatpush1.bf16.xpose.msra.mxu0 0
    %728 = vmatprep.mubr.bf16.mxu0 0
    %729 = vmatmul.mubr.bf16.gmra.mrb[0].mxu0 %v694
    %v730 = vpop.f32.mrb[0].mxu0
    %v731 = vadd.f32 0.0, %v730
    %v732 = vpop.f32.mrb[0].mxu0
    %v733 = vpop.f32.mrb[0].mxu0
    %v734 = vadd.f32 0.0, %v733
    %v735 = vpop.f32.mrb[0].mxu0
    %736 = vdwg.mxu0
    %v738 = vsel %vm516, %v491, 0
    %740 = vmatprep.subr.bf16.mxu0 0
    %741 = vmatpush1.bf16.xpose.msra.mxu0 %v738
    %742 = vmatprep.subr.bf16.mxu0 0
    %743 = vmatpush1.bf16.xpose.msra.mxu0 0
    %744 = vmatprep.subr.bf16.mxu0 0
    %745 = vmatpush1.bf16.xpose.msra.mxu0 0
    %746 = vmatprep.subr.bf16.mxu0 0
    %747 = vmatpush1.bf16.xpose.msra.mxu0 0
    %748 = vmatprep.subr.bf16.mxu0 0
    %749 = vmatpush1.bf16.xpose.msra.mxu0 0
    %750 = vmatprep.subr.bf16.mxu0 0
    %751 = vmatpush1.bf16.xpose.msra.mxu0 0
    %752 = vmatprep.subr.bf16.mxu0 0
    %753 = vmatpush1.bf16.xpose.msra.mxu0 0
    %754 = vmatprep.subr.bf16.mxu0 0
    %755 = vmatpush1.bf16.xpose.msra.mxu0 0
    %756 = vmatprep.subr.bf16.mxu0 0
    %757 = vmatpush1.bf16.xpose.msra.mxu0 0
    %758 = vmatprep.subr.bf16.mxu0 0
    %759 = vmatpush1.bf16.xpose.msra.mxu0 0
    %760 = vmatprep.subr.bf16.mxu0 0
    %761 = vmatpush1.bf16.xpose.msra.mxu0 0
    %762 = vmatprep.subr.bf16.mxu0 0
    %763 = vmatpush1.bf16.xpose.msra.mxu0 0
    %764 = vmatprep.subr.bf16.mxu0 0
    %765 = vmatpush1.bf16.xpose.msra.mxu0 0
    %766 = vmatprep.subr.bf16.mxu0 0
    %767 = vmatpush1.bf16.xpose.msra.mxu0 0
    %768 = vmatprep.subr.bf16.mxu0 0
    %769 = vmatpush1.bf16.xpose.msra.mxu0 0
    %770 = vmatprep.subr.bf16.mxu0 0
    %771 = vmatpush1.bf16.xpose.msra.mxu0 0
    %772 = vmatprep.mubr.bf16.mxu0 0
    %773 = vmatmul.mubr.bf16.gmra.mrb[0].mxu0 %v738
    %v774 = vpop.f32.mrb[0].mxu0
    %v775 = vadd.f32 0.0, %v774
    %v776 = vpop.f32.mrb[0].mxu0
    %v777 = vpop.f32.mrb[0].mxu0
    %v778 = vadd.f32 0.0, %v777
    %v779 = vpop.f32.mrb[0].mxu0
    %780 = vdwg.mxu0
    %v782 = vsel %vm516, %v493, 0
    %784 = vmatprep.subr.bf16.mxu0 0
    %785 = vmatpush1.bf16.xpose.msra.mxu0 %v782
    %786 = vmatprep.subr.bf16.mxu0 0
    %787 = vmatpush1.bf16.xpose.msra.mxu0 0
    %788 = vmatprep.subr.bf16.mxu0 0
    %789 = vmatpush1.bf16.xpose.msra.mxu0 0
    %790 = vmatprep.subr.bf16.mxu0 0
    %791 = vmatpush1.bf16.xpose.msra.mxu0 0
    %792 = vmatprep.subr.bf16.mxu0 0
    %793 = vmatpush1.bf16.xpose.msra.mxu0 0
    %794 = vmatprep.subr.bf16.mxu0 0
    %795 = vmatpush1.bf16.xpose.msra.mxu0 0
    %796 = vmatprep.subr.bf16.mxu0 0
    %797 = vmatpush1.bf16.xpose.msra.mxu0 0
    %798 = vmatprep.subr.bf16.mxu0 0
    %799 = vmatpush1.bf16.xpose.msra.mxu0 0
    %800 = vmatprep.subr.bf16.mxu0 0
    %801 = vmatpush1.bf16.xpose.msra.mxu0 0
    %802 = vmatprep.subr.bf16.mxu0 0
    %803 = vmatpush1.bf16.xpose.msra.mxu0 0
    %804 = vmatprep.subr.bf16.mxu0 0
    %805 = vmatpush1.bf16.xpose.msra.mxu0 0
    %806 = vmatprep.subr.bf16.mxu0 0
    %807 = vmatpush1.bf16.xpose.msra.mxu0 0
    %808 = vmatprep.subr.bf16.mxu0 0
    %809 = vmatpush1.bf16.xpose.msra.mxu0 0
    %810 = vmatprep.subr.bf16.mxu0 0
    %811 = vmatpush1.bf16.xpose.msra.mxu0 0
    %812 = vmatprep.subr.bf16.mxu0 0
    %813 = vmatpush1.bf16.xpose.msra.mxu0 0
    %814 = vmatprep.subr.bf16.mxu0 0
    %815 = vmatpush1.bf16.xpose.msra.mxu0 0
    %816 = vmatprep.mubr.bf16.mxu0 0
    %817 = vmatmul.mubr.bf16.gmra.mrb[0].mxu0 %v782
    %v818 = vpop.f32.mrb[0].mxu0
    %v819 = vadd.f32 0.0, %v818
    %v820 = vpop.f32.mrb[0].mxu0
    %v821 = vpop.f32.mrb[0].mxu0
    %v822 = vadd.f32 0.0, %v821
    %v823 = vpop.f32.mrb[0].mxu0
    %824 = vdwg.mxu0
    %v826 = vsel %vm516, %v495, 0
    %828 = vmatprep.subr.bf16.mxu0 0
    %829 = vmatpush1.bf16.xpose.msra.mxu0 %v826
    %830 = vmatprep.subr.bf16.mxu0 0
    %831 = vmatpush1.bf16.xpose.msra.mxu0 0
    %832 = vmatprep.subr.bf16.mxu0 0
    %833 = vmatpush1.bf16.xpose.msra.mxu0 0
    %834 = vmatprep.subr.bf16.mxu0 0
    %835 = vmatpush1.bf16.xpose.msra.mxu0 0
    %836 = vmatprep.subr.bf16.mxu0 0
    %837 = vmatpush1.bf16.xpose.msra.mxu0 0
    %838 = vmatprep.subr.bf16.mxu0 0
    %839 = vmatpush1.bf16.xpose.msra.mxu0 0
    %840 = vmatprep.subr.bf16.mxu0 0
    %841 = vmatpush1.bf16.xpose.msra.mxu0 0
    %842 = vmatprep.subr.bf16.mxu0 0
    %843 = vmatpush1.bf16.xpose.msra.mxu0 0
    %844 = vmatprep.subr.bf16.mxu0 0
    %845 = vmatpush1.bf16.xpose.msra.mxu0 0
    %846 = vmatprep.subr.bf16.mxu0 0
    %847 = vmatpush1.bf16.xpose.msra.mxu0 0
    %848 = vmatprep.subr.bf16.mxu0 0
    %849 = vmatpush1.bf16.xpose.msra.mxu0 0
    %850 = vmatprep.subr.bf16.mxu0 0
    %851 = vmatpush1.bf16.xpose.msra.mxu0 0
    %852 = vmatprep.subr.bf16.mxu0 0
    %853 = vmatpush1.bf16.xpose.msra.mxu0 0
    %854 = vmatprep.subr.bf16.mxu0 0
    %855 = vmatpush1.bf16.xpose.msra.mxu0 0
    %856 = vmatprep.subr.bf16.mxu0 0
    %857 = vmatpush1.bf16.xpose.msra.mxu0 0
    %858 = vmatprep.subr.bf16.mxu0 0
    %859 = vmatpush1.bf16.xpose.msra.mxu0 0
    %860 = vmatprep.mubr.bf16.mxu0 0
    %861 = vmatmul.mubr.bf16.gmra.mrb[0].mxu0 %v826
    %v862 = vpop.f32.mrb[0].mxu0
    %v863 = vadd.f32 0.0, %v862
    %v864 = vpop.f32.mrb[0].mxu0
    %v865 = vpop.f32.mrb[0].mxu0
    %v866 = vadd.f32 0.0, %v865
    %v867 = vpop.f32.mrb[0].mxu0
    %868 = vdwg.mxu0
    %v869 = vmul.f32 %v555, 0.17677669
    %v870 = vmul.f32 %v558, 0.17677669
    %v871 = vmul.f32 %v599, 0.17677669
    %v872 = vmul.f32 %v602, 0.17677669
    %v873 = vmul.f32 %v643, 0.17677669
    %v874 = vmul.f32 %v646, 0.17677669
    %v875 = vmul.f32 %v687, 0.17677669
    %v876 = vmul.f32 %v690, 0.17677669
    %v877 = vmul.f32 %v731, 0.17677669
    %v878 = vmul.f32 %v734, 0.17677669
    %v879 = vmul.f32 %v775, 0.17677669
    %v880 = vmul.f32 %v778, 0.17677669
    %v881 = vmul.f32 %v819, 0.17677669
    %v882 = vmul.f32 %v822, 0.17677669
    %v883 = vmul.f32 %v863, 0.17677669
    %v884 = vmul.f32 %v866, 0.17677669
    %vm885 = vcmask 130048
    %v886 = vsel %vm885, %v869, -inf
    %887 = vmax.xlane.f32.xlu0 %v886
    %v888 = vpop.xlane.xlu0 %887
    %v889 = vsel %vm885, %v870, -inf
    %890 = vmax.xlane.f32.xlu0 %v889
    %v891 = vpop.xlane.xlu0 %890
    %v892 = vsel %vm885, %v871, -inf
    %893 = vmax.xlane.f32.xlu0 %v892
    %v894 = vpop.xlane.xlu0 %893
    %v895 = vsel %vm885, %v872, -inf
    %896 = vmax.xlane.f32.xlu0 %v895
    %v897 = vpop.xlane.xlu0 %896
    %v898 = vsel %vm885, %v873, -inf
    %899 = vmax.xlane.f32.xlu0 %v898
    %v900 = vpop.xlane.xlu0 %899
    %v901 = vsel %vm885, %v874, -inf
    %902 = vmax.xlane.f32.xlu0 %v901
    %v903 = vpop.xlane.xlu0 %902
    %v904 = vsel %vm885, %v875, -inf
    %905 = vmax.xlane.f32.xlu0 %v904
    %v906 = vpop.xlane.xlu0 %905
    %v907 = vsel %vm885, %v876, -inf
    %908 = vmax.xlane.f32.xlu0 %v907
    %v909 = vpop.xlane.xlu0 %908
    %v910 = vsel %vm885, %v877, -inf
    %911 = vmax.xlane.f32.xlu0 %v910
    %v912 = vpop.xlane.xlu0 %911
    %v913 = vsel %vm885, %v878, -inf
    %914 = vmax.xlane.f32.xlu0 %v913
    %v915 = vpop.xlane.xlu0 %914
    %v916 = vsel %vm885, %v879, -inf
    %917 = vmax.xlane.f32.xlu0 %v916
    %v918 = vpop.xlane.xlu0 %917
    %v919 = vsel %vm885, %v880, -inf
    %920 = vmax.xlane.f32.xlu0 %v919
    %v921 = vpop.xlane.xlu0 %920
    %v922 = vsel %vm885, %v881, -inf
    %923 = vmax.xlane.f32.xlu0 %v922
    %v924 = vpop.xlane.xlu0 %923
    %v925 = vsel %vm885, %v882, -inf
    %926 = vmax.xlane.f32.xlu0 %v925
    %v927 = vpop.xlane.xlu0 %926
    %v928 = vsel %vm885, %v883, -inf
    %929 = vmax.xlane.f32.xlu0 %v928
    %v930 = vpop.xlane.xlu0 %929
    %v931 = vsel %vm885, %v884, -inf
    %932 = vmax.xlane.f32.xlu0 %v931
    %v933 = vpop.xlane.xlu0 %932
    %v934 = vsub.f32 %v869, %v888
    %v935 = vsub.f32 %v870, %v891
    %v936 = vsub.f32 %v871, %v894
    %v937 = vsub.f32 %v872, %v897
    %v938 = vsub.f32 %v873, %v900
    %v939 = vsub.f32 %v874, %v903
    %v940 = vsub.f32 %v875, %v906
    %v941 = vsub.f32 %v876, %v909
    %v942 = vsub.f32 %v877, %v912
    %v943 = vsub.f32 %v878, %v915
    %v944 = vsub.f32 %v879, %v918
    %v945 = vsub.f32 %v880, %v921
    %v946 = vsub.f32 %v881, %v924
    %v947 = vsub.f32 %v882, %v927
    %v948 = vsub.f32 %v883, %v930
    %v949 = vsub.f32 %v884, %v933
    %v950 = vmul.f32 %v934, 1.442695
    %v951 = vpow.pop %v950
    %v952 = vmul.f32 %v935, 1.442695
    %v953 = vpow.pop %v952
    %v954 = vmul.f32 %v936, 1.442695
    %v955 = vpow.pop %v954
    %v956 = vmul.f32 %v937, 1.442695
    %v957 = vpow.pop %v956
    %v958 = vmul.f32 %v938, 1.442695
    %v959 = vpow.pop %v958
    %v960 = vmul.f32 %v939, 1.442695
    %v961 = vpow.pop %v960
    %v962 = vmul.f32 %v940, 1.442695
    %v963 = vpow.pop %v962
    %v964 = vmul.f32 %v941, 1.442695
    %v965 = vpow.pop %v964
    %v966 = vmul.f32 %v942, 1.442695
    %v967 = vpow.pop %v966
    %v968 = vmul.f32 %v943, 1.442695
    %v969 = vpow.pop %v968
    %v970 = vmul.f32 %v944, 1.442695
    %v971 = vpow.pop %v970
    %v972 = vmul.f32 %v945, 1.442695
    %v973 = vpow.pop %v972
    %v974 = vmul.f32 %v946, 1.442695
    %v975 = vpow.pop %v974
    %v976 = vmul.f32 %v947, 1.442695
    %v977 = vpow.pop %v976
    %v978 = vmul.f32 %v948, 1.442695
    %v979 = vpow.pop %v978
    %v980 = vmul.f32 %v949, 1.442695
    %v981 = vpow.pop %v980
    %v982 = vsel %vm885, %v951, 0.0
    %983 = vadd.xlane.f32.xlu0 %v982
    %v984 = vpop.xlane.xlu0 %983
    %v985 = vsel %vm885, %v953, 0.0
    %986 = vadd.xlane.f32.xlu0 %v985
    %v987 = vpop.xlane.xlu0 %986
    %v988 = vsel %vm885, %v955, 0.0
    %989 = vadd.xlane.f32.xlu0 %v988
    %v990 = vpop.xlane.xlu0 %989
    %v991 = vsel %vm885, %v957, 0.0
    %992 = vadd.xlane.f32.xlu0 %v991
    %v993 = vpop.xlane.xlu0 %992
    %v994 = vsel %vm885, %v959, 0.0
    %995 = vadd.xlane.f32.xlu0 %v994
    %v996 = vpop.xlane.xlu0 %995
    %v997 = vsel %vm885, %v961, 0.0
    %998 = vadd.xlane.f32.xlu0 %v997
    %v999 = vpop.xlane.xlu0 %998
    %v1000 = vsel %vm885, %v963, 0.0
    %1001 = vadd.xlane.f32.xlu0 %v1000
    %v1002 = vpop.xlane.xlu0 %1001
    %v1003 = vsel %vm885, %v965, 0.0
    %1004 = vadd.xlane.f32.xlu0 %v1003
    %v1005 = vpop.xlane.xlu0 %1004
    %v1006 = vsel %vm885, %v967, 0.0
    %1007 = vadd.xlane.f32.xlu0 %v1006
    %v1008 = vpop.xlane.xlu0 %1007
    %v1009 = vsel %vm885, %v969, 0.0
    %1010 = vadd.xlane.f32.xlu0 %v1009
    %v1011 = vpop.xlane.xlu0 %1010
    %v1012 = vsel %vm885, %v971, 0.0
    %1013 = vadd.xlane.f32.xlu0 %v1012
    %v1014 = vpop.xlane.xlu0 %1013
    %v1015 = vsel %vm885, %v973, 0.0
    %1016 = vadd.xlane.f32.xlu0 %v1015
    %v1017 = vpop.xlane.xlu0 %1016
    %v1018 = vsel %vm885, %v975, 0.0
    %1019 = vadd.xlane.f32.xlu0 %v1018
    %v1020 = vpop.xlane.xlu0 %1019
    %v1021 = vsel %vm885, %v977, 0.0
    %1022 = vadd.xlane.f32.xlu0 %v1021
    %v1023 = vpop.xlane.xlu0 %1022
    %v1024 = vsel %vm885, %v979, 0.0
    %1025 = vadd.xlane.f32.xlu0 %v1024
    %v1026 = vpop.xlane.xlu0 %1025
    %v1027 = vsel %vm885, %v981, 0.0
    %1028 = vadd.xlane.f32.xlu0 %v1027
    %v1029 = vpop.xlane.xlu0 %1028
    %v1030 = vrcp.pop %v984
    %v1031 = vrcp.pop %v987
    %v1032 = vrcp.pop %v990
    %v1033 = vrcp.pop %v993
    %v1034 = vrcp.pop %v996
    %v1035 = vrcp.pop %v999
    %v1036 = vrcp.pop %v1002
    %v1037 = vrcp.pop %v1005
    %v1038 = vrcp.pop %v1008
    %v1039 = vrcp.pop %v1011
    %v1040 = vrcp.pop %v1014
    %v1041 = vrcp.pop %v1017
    %v1042 = vrcp.pop %v1020
    %v1043 = vrcp.pop %v1023
    %v1044 = vrcp.pop %v1026
    %v1045 = vrcp.pop %v1029
    %v1046 = vmul.f32 %v951, %v1030
    %v1047 = vmul.f32 %v953, %v1031
    %v1048 = vmul.f32 %v955, %v1032
    %v1049 = vmul.f32 %v957, %v1033
    %v1050 = vmul.f32 %v959, %v1034
    %v1051 = vmul.f32 %v961, %v1035
    %v1052 = vmul.f32 %v963, %v1036
    %v1053 = vmul.f32 %v965, %v1037
    %v1054 = vmul.f32 %v967, %v1038
    %v1055 = vmul.f32 %v969, %v1039
    %v1056 = vmul.f32 %v971, %v1040
    %v1057 = vmul.f32 %v973, %v1041
    %v1058 = vmul.f32 %v975, %v1042
    %v1059 = vmul.f32 %v977, %v1043
    %v1060 = vmul.f32 %v979, %v1044
    %v1061 = vmul.f32 %v981, %v1045
    %v1062 = vpack.c.bf16 %v1047, %v1046
    %v1063 = vpack.c.bf16 %v1049, %v1048
    %v1064 = vpack.c.bf16 %v1051, %v1050
    %v1065 = vpack.c.bf16 %v1053, %v1052
    %v1066 = vpack.c.bf16 %v1055, %v1054
    %v1067 = vpack.c.bf16 %v1057, %v1056
    %v1068 = vpack.c.bf16 %v1059, %v1058
    %v1069 = vpack.c.bf16 %v1061, %v1060
    %v1071 = vsel %vm885, %v1062, 0
    %1073 = vmatprep.subr.bf16.mxu0 0
    %1074 = vmatpush1.bf16.msra.mxu0 %v479
    %1075 = vmatprep.subr.bf16.mxu0 0
    %1076 = vmatpush1.bf16.msra.mxu0 0
    %1077 = vmatprep.subr.bf16.mxu0 0
    %1078 = vmatpush1.bf16.msra.mxu0 0
    %1079 = vmatprep.subr.bf16.mxu0 0
    %1080 = vmatpush1.bf16.msra.mxu0 0
    %1081 = vmatprep.subr.bf16.mxu0 0
    %1082 = vmatpush1.bf16.msra.mxu0 0
    %1083 = vmatprep.subr.bf16.mxu0 0
    %1084 = vmatpush1.bf16.msra.mxu0 0
    %1085 = vmatprep.subr.bf16.mxu0 0
    %1086 = vmatpush1.bf16.msra.mxu0 0
    %1087 = vmatprep.subr.bf16.mxu0 0
    %1088 = vmatpush1.bf16.msra.mxu0 0
    %1089 = vmatprep.subr.bf16.mxu0 0
    %1090 = vmatpush1.bf16.msra.mxu0 0
    %1091 = vmatprep.subr.bf16.mxu0 0
    %1092 = vmatpush1.bf16.msra.mxu0 0
    %1093 = vmatprep.subr.bf16.mxu0 0
    %1094 = vmatpush1.bf16.msra.mxu0 0
    %1095 = vmatprep.subr.bf16.mxu0 0
    %1096 = vmatpush1.bf16.msra.mxu0 0
    %1097 = vmatprep.subr.bf16.mxu0 0
    %1098 = vmatpush1.bf16.msra.mxu0 0
    %1099 = vmatprep.subr.bf16.mxu0 0
    %1100 = vmatpush1.bf16.msra.mxu0 0
    %1101 = vmatprep.subr.bf16.mxu0 0
    %1102 = vmatpush1.bf16.msra.mxu0 0
    %1103 = vmatprep.subr.bf16.mxu0 0
    %1104 = vmatpush1.bf16.msra.mxu0 0
    %1105 = vmatprep.mubr.bf16.mxu0 0
    %1106 = vmatmul.mubr.bf16.gmra.mrb[0].mxu0 %v1071
    %v1107 = vpop.f32.mrb[0].mxu0
    %v1108 = vadd.f32 0.0, %v1107
    %v1109 = vpop.f32.mrb[0].mxu0
    %v1110 = vpop.f32.mrb[0].mxu0
    %v1111 = vadd.f32 0.0, %v1110
    %v1112 = vpop.f32.mrb[0].mxu0
    %1113 = vdwg.mxu0
    %v1115 = vsel %vm885, %v1063, 0
    %1117 = vmatprep.subr.bf16.mxu0 0
    %1118 = vmatpush1.bf16.msra.mxu0 %v481
    %1119 = vmatprep.subr.bf16.mxu0 0
    %1120 = vmatpush1.bf16.msra.mxu0 0
    %1121 = vmatprep.subr.bf16.mxu0 0
    %1122 = vmatpush1.bf16.msra.mxu0 0
    %1123 = vmatprep.subr.bf16.mxu0 0
    %1124 = vmatpush1.bf16.msra.mxu0 0
    %1125 = vmatprep.subr.bf16.mxu0 0
    %1126 = vmatpush1.bf16.msra.mxu0 0
    %1127 = vmatprep.subr.bf16.mxu0 0
    %1128 = vmatpush1.bf16.msra.mxu0 0
    %1129 = vmatprep.subr.bf16.mxu0 0
    %1130 = vmatpush1.bf16.msra.mxu0 0
    %1131 = vmatprep.subr.bf16.mxu0 0
    %1132 = vmatpush1.bf16.msra.mxu0 0
    %1133 = vmatprep.subr.bf16.mxu0 0
    %1134 = vmatpush1.bf16.msra.mxu0 0
    %1135 = vmatprep.subr.bf16.mxu0 0
    %1136 = vmatpush1.bf16.msra.mxu0 0
    %1137 = vmatprep.subr.bf16.mxu0 0
    %1138 = vmatpush1.bf16.msra.mxu0 0
    %1139 = vmatprep.subr.bf16.mxu0 0
    %1140 = vmatpush1.bf16.msra.mxu0 0
    %1141 = vmatprep.subr.bf16.mxu0 0
    %1142 = vmatpush1.bf16.msra.mxu0 0
    %1143 = vmatprep.subr.bf16.mxu0 0
    %1144 = vmatpush1.bf16.msra.mxu0 0
    %1145 = vmatprep.subr.bf16.mxu0 0
    %1146 = vmatpush1.bf16.msra.mxu0 0
    %1147 = vmatprep.subr.bf16.mxu0 0
    %1148 = vmatpush1.bf16.msra.mxu0 0
    %1149 = vmatprep.mubr.bf16.mxu0 0
    %1150 = vmatmul.mubr.bf16.gmra.mrb[0].mxu0 %v1115
    %v1151 = vpop.f32.mrb[0].mxu0
    %v1152 = vadd.f32 0.0, %v1151
    %v1153 = vpop.f32.mrb[0].mxu0
    %v1154 = vpop.f32.mrb[0].mxu0
    %v1155 = vadd.f32 0.0, %v1154
    %v1156 = vpop.f32.mrb[0].mxu0
    %1157 = vdwg.mxu0
    %v1159 = vsel %vm885, %v1064, 0
    %1161 = vmatprep.subr.bf16.mxu0 0
    %1162 = vmatpush1.bf16.msra.mxu0 %v499
    %1163 = vmatprep.subr.bf16.mxu0 0
    %1164 = vmatpush1.bf16.msra.mxu0 0
    %1165 = vmatprep.subr.bf16.mxu0 0
    %1166 = vmatpush1.bf16.msra.mxu0 0
    %1167 = vmatprep.subr.bf16.mxu0 0
    %1168 = vmatpush1.bf16.msra.mxu0 0
    %1169 = vmatprep.subr.bf16.mxu0 0
    %1170 = vmatpush1.bf16.msra.mxu0 0
    %1171 = vmatprep.subr.bf16.mxu0 0
    %1172 = vmatpush1.bf16.msra.mxu0 0
    %1173 = vmatprep.subr.bf16.mxu0 0
    %1174 = vmatpush1.bf16.msra.mxu0 0
    %1175 = vmatprep.subr.bf16.mxu0 0
    %1176 = vmatpush1.bf16.msra.mxu0 0
    %1177 = vmatprep.subr.bf16.mxu0 0
    %1178 = vmatpush1.bf16.msra.mxu0 0
    %1179 = vmatprep.subr.bf16.mxu0 0
    %1180 = vmatpush1.bf16.msra.mxu0 0
    %1181 = vmatprep.subr.bf16.mxu0 0
    %1182 = vmatpush1.bf16.msra.mxu0 0
    %1183 = vmatprep.subr.bf16.mxu0 0
    %1184 = vmatpush1.bf16.msra.mxu0 0
    %1185 = vmatprep.subr.bf16.mxu0 0
    %1186 = vmatpush1.bf16.msra.mxu0 0
    %1187 = vmatprep.subr.bf16.mxu0 0
    %1188 = vmatpush1.bf16.msra.mxu0 0
    %1189 = vmatprep.subr.bf16.mxu0 0
    %1190 = vmatpush1.bf16.msra.mxu0 0
    %1191 = vmatprep.subr.bf16.mxu0 0
    %1192 = vmatpush1.bf16.msra.mxu0 0
    %1193 = vmatprep.mubr.bf16.mxu0 0
    %1194 = vmatmul.mubr.bf16.gmra.mrb[0].mxu0 %v1159
    %v1195 = vpop.f32.mrb[0].mxu0
    %v1196 = vadd.f32 0.0, %v1195
    %v1197 = vpop.f32.mrb[0].mxu0
    %v1198 = vpop.f32.mrb[0].mxu0
    %v1199 = vadd.f32 0.0, %v1198
    %v1200 = vpop.f32.mrb[0].mxu0
    %1201 = vdwg.mxu0
    %v1203 = vsel %vm885, %v1065, 0
    %1205 = vmatprep.subr.bf16.mxu0 0
    %1206 = vmatpush1.bf16.msra.mxu0 %v501
    %1207 = vmatprep.subr.bf16.mxu0 0
    %1208 = vmatpush1.bf16.msra.mxu0 0
    %1209 = vmatprep.subr.bf16.mxu0 0
    %1210 = vmatpush1.bf16.msra.mxu0 0
    %1211 = vmatprep.subr.bf16.mxu0 0
    %1212 = vmatpush1.bf16.msra.mxu0 0
    %1213 = vmatprep.subr.bf16.mxu0 0
    %1214 = vmatpush1.bf16.msra.mxu0 0
    %1215 = vmatprep.subr.bf16.mxu0 0
    %1216 = vmatpush1.bf16.msra.mxu0 0
    %1217 = vmatprep.subr.bf16.mxu0 0
    %1218 = vmatpush1.bf16.msra.mxu0 0
    %1219 = vmatprep.subr.bf16.mxu0 0
    %1220 = vmatpush1.bf16.msra.mxu0 0
    %1221 = vmatprep.subr.bf16.mxu0 0
    %1222 = vmatpush1.bf16.msra.mxu0 0
    %1223 = vmatprep.subr.bf16.mxu0 0
    %1224 = vmatpush1.bf16.msra.mxu0 0
    %1225 = vmatprep.subr.bf16.mxu0 0
    %1226 = vmatpush1.bf16.msra.mxu0 0
    %1227 = vmatprep.subr.bf16.mxu0 0
    %1228 = vmatpush1.bf16.msra.mxu0 0
    %1229 = vmatprep.subr.bf16.mxu0 0
    %1230 = vmatpush1.bf16.msra.mxu0 0
    %1231 = vmatprep.subr.bf16.mxu0 0
    %1232 = vmatpush1.bf16.msra.mxu0 0
    %1233 = vmatprep.subr.bf16.mxu0 0
    %1234 = vmatpush1.bf16.msra.mxu0 0
    %1235 = vmatprep.subr.bf16.mxu0 0
    %1236 = vmatpush1.bf16.msra.mxu0 0
    %1237 = vmatprep.mubr.bf16.mxu0 0
    %1238 = vmatmul.mubr.bf16.gmra.mrb[0].mxu0 %v1203
    %v1239 = vpop.f32.mrb[0].mxu0
    %v1240 = vadd.f32 0.0, %v1239
    %v1241 = vpop.f32.mrb[0].mxu0
    %v1242 = vpop.f32.mrb[0].mxu0
    %v1243 = vadd.f32 0.0, %v1242
    %v1244 = vpop.f32.mrb[0].mxu0
    %1245 = vdwg.mxu0
    %v1247 = vsel %vm885, %v1066, 0
    %1249 = vmatprep.subr.bf16.mxu0 0
    %1250 = vmatpush1.bf16.msra.mxu0 %v505
    %1251 = vmatprep.subr.bf16.mxu0 0
    %1252 = vmatpush1.bf16.msra.mxu0 0
    %1253 = vmatprep.subr.bf16.mxu0 0
    %1254 = vmatpush1.bf16.msra.mxu0 0
    %1255 = vmatprep.subr.bf16.mxu0 0
    %1256 = vmatpush1.bf16.msra.mxu0 0
    %1257 = vmatprep.subr.bf16.mxu0 0
    %1258 = vmatpush1.bf16.msra.mxu0 0
    %1259 = vmatprep.subr.bf16.mxu0 0
    %1260 = vmatpush1.bf16.msra.mxu0 0
    %1261 = vmatprep.subr.bf16.mxu0 0
    %1262 = vmatpush1.bf16.msra.mxu0 0
    %1263 = vmatprep.subr.bf16.mxu0 0
    %1264 = vmatpush1.bf16.msra.mxu0 0
    %1265 = vmatprep.subr.bf16.mxu0 0
    %1266 = vmatpush1.bf16.msra.mxu0 0
    %1267 = vmatprep.subr.bf16.mxu0 0
    %1268 = vmatpush1.bf16.msra.mxu0 0
    %1269 = vmatprep.subr.bf16.mxu0 0
    %1270 = vmatpush1.bf16.msra.mxu0 0
    %1271 = vmatprep.subr.bf16.mxu0 0
    %1272 = vmatpush1.bf16.msra.mxu0 0
    %1273 = vmatprep.subr.bf16.mxu0 0
    %1274 = vmatpush1.bf16.msra.mxu0 0
    %1275 = vmatprep.subr.bf16.mxu0 0
    %1276 = vmatpush1.bf16.msra.mxu0 0
    %1277 = vmatprep.subr.bf16.mxu0 0
    %1278 = vmatpush1.bf16.msra.mxu0 0
    %1279 = vmatprep.subr.bf16.mxu0 0
    %1280 = vmatpush1.bf16.msra.mxu0 0
    %1281 = vmatprep.mubr.bf16.mxu0 0
    %1282 = vmatmul.mubr.bf16.gmra.mrb[0].mxu0 %v1247
    %v1283 = vpop.f32.mrb[0].mxu0
    %v1284 = vadd.f32 0.0, %v1283
    %v1285 = vpop.f32.mrb[0].mxu0
    %v1286 = vpop.f32.mrb[0].mxu0
    %v1287 = vadd.f32 0.0, %v1286
    %v1288 = vpop.f32.mrb[0].mxu0
    %1289 = vdwg.mxu0
    %v1291 = vsel %vm885, %v1067, 0
    %1293 = vmatprep.subr.bf16.mxu0 0
    %1294 = vmatpush1.bf16.msra.mxu0 %v507
    %1295 = vmatprep.subr.bf16.mxu0 0
    %1296 = vmatpush1.bf16.msra.mxu0 0
    %1297 = vmatprep.subr.bf16.mxu0 0
    %1298 = vmatpush1.bf16.msra.mxu0 0
    %1299 = vmatprep.subr.bf16.mxu0 0
    %1300 = vmatpush1.bf16.msra.mxu0 0
    %1301 = vmatprep.subr.bf16.mxu0 0
    %1302 = vmatpush1.bf16.msra.mxu0 0
    %1303 = vmatprep.subr.bf16.mxu0 0
    %1304 = vmatpush1.bf16.msra.mxu0 0
    %1305 = vmatprep.subr.bf16.mxu0 0
    %1306 = vmatpush1.bf16.msra.mxu0 0
    %1307 = vmatprep.subr.bf16.mxu0 0
    %1308 = vmatpush1.bf16.msra.mxu0 0
    %1309 = vmatprep.subr.bf16.mxu0 0
    %1310 = vmatpush1.bf16.msra.mxu0 0
    %1311 = vmatprep.subr.bf16.mxu0 0
    %1312 = vmatpush1.bf16.msra.mxu0 0
    %1313 = vmatprep.subr.bf16.mxu0 0
    %1314 = vmatpush1.bf16.msra.mxu0 0
    %1315 = vmatprep.subr.bf16.mxu0 0
    %1316 = vmatpush1.bf16.msra.mxu0 0
    %1317 = vmatprep.subr.bf16.mxu0 0
    %1318 = vmatpush1.bf16.msra.mxu0 0
    %1319 = vmatprep.subr.bf16.mxu0 0
    %1320 = vmatpush1.bf16.msra.mxu0 0
    %1321 = vmatprep.subr.bf16.mxu0 0
    %1322 = vmatpush1.bf16.msra.mxu0 0
    %1323 = vmatprep.subr.bf16.mxu0 0
    %1324 = vmatpush1.bf16.msra.mxu0 0
    %1325 = vmatprep.mubr.bf16.mxu0 0
    %1326 = vmatmul.mubr.bf16.gmra.mrb[0].mxu0 %v1291
    %v1327 = vpop.f32.mrb[0].mxu0
    %v1328 = vadd.f32 0.0, %v1327
    %v1329 = vpop.f32.mrb[0].mxu0
    %v1330 = vpop.f32.mrb[0].mxu0
    %v1331 = vadd.f32 0.0, %v1330
    %v1332 = vpop.f32.mrb[0].mxu0
    %1333 = vdwg.mxu0
    %v1335 = vsel %vm885, %v1068, 0
    %1337 = vmatprep.subr.bf16.mxu0 0
    %1338 = vmatpush1.bf16.msra.mxu0 %v511
    %1339 = vmatprep.subr.bf16.mxu0 0
    %1340 = vmatpush1.bf16.msra.mxu0 0
    %1341 = vmatprep.subr.bf16.mxu0 0
    %1342 = vmatpush1.bf16.msra.mxu0 0
    %1343 = vmatprep.subr.bf16.mxu0 0
    %1344 = vmatpush1.bf16.msra.mxu0 0
    %1345 = vmatprep.subr.bf16.mxu0 0
    %1346 = vmatpush1.bf16.msra.mxu0 0
    %1347 = vmatprep.subr.bf16.mxu0 0
    %1348 = vmatpush1.bf16.msra.mxu0 0
    %1349 = vmatprep.subr.bf16.mxu0 0
    %1350 = vmatpush1.bf16.msra.mxu0 0
    %1351 = vmatprep.subr.bf16.mxu0 0
    %1352 = vmatpush1.bf16.msra.mxu0 0
    %1353 = vmatprep.subr.bf16.mxu0 0
    %1354 = vmatpush1.bf16.msra.mxu0 0
    %1355 = vmatprep.subr.bf16.mxu0 0
    %1356 = vmatpush1.bf16.msra.mxu0 0
    %1357 = vmatprep.subr.bf16.mxu0 0
    %1358 = vmatpush1.bf16.msra.mxu0 0
    %1359 = vmatprep.subr.bf16.mxu0 0
    %1360 = vmatpush1.bf16.msra.mxu0 0
    %1361 = vmatprep.subr.bf16.mxu0 0
    %1362 = vmatpush1.bf16.msra.mxu0 0
    %1363 = vmatprep.subr.bf16.mxu0 0
    %1364 = vmatpush1.bf16.msra.mxu0 0
    %1365 = vmatprep.subr.bf16.mxu0 0
    %1366 = vmatpush1.bf16.msra.mxu0 0
    %1367 = vmatprep.subr.bf16.mxu0 0
    %1368 = vmatpush1.bf16.msra.mxu0 0
    %1369 = vmatprep.mubr.bf16.mxu0 0
    %1370 = vmatmul.mubr.bf16.gmra.mrb[0].mxu0 %v1335
    %v1371 = vpop.f32.mrb[0].mxu0
    %v1372 = vadd.f32 0.0, %v1371
    %v1373 = vpop.f32.mrb[0].mxu0
    %v1374 = vpop.f32.mrb[0].mxu0
    %v1375 = vadd.f32 0.0, %v1374
    %v1376 = vpop.f32.mrb[0].mxu0
    %1377 = vdwg.mxu0
    %v1379 = vsel %vm885, %v1069, 0
    %1381 = vmatprep.subr.bf16.mxu0 0
    %1382 = vmatpush1.bf16.msra.mxu0 %v513
    %1383 = vmatprep.subr.bf16.mxu0 0
    %1384 = vmatpush1.bf16.msra.mxu0 0
    %1385 = vmatprep.subr.bf16.mxu0 0
    %1386 = vmatpush1.bf16.msra.mxu0 0
    %1387 = vmatprep.subr.bf16.mxu0 0
    %1388 = vmatpush1.bf16.msra.mxu0 0
    %1389 = vmatprep.subr.bf16.mxu0 0
    %1390 = vmatpush1.bf16.msra.mxu0 0
    %1391 = vmatprep.subr.bf16.mxu0 0
    %1392 = vmatpush1.bf16.msra.mxu0 0
    %1393 = vmatprep.subr.bf16.mxu0 0
    %1394 = vmatpush1.bf16.msra.mxu0 0
    %1395 = vmatprep.subr.bf16.mxu0 0
    %1396 = vmatpush1.bf16.msra.mxu0 0
    %1397 = vmatprep.subr.bf16.mxu0 0
    %1398 = vmatpush1.bf16.msra.mxu0 0
    %1399 = vmatprep.subr.bf16.mxu0 0
    %1400 = vmatpush1.bf16.msra.mxu0 0
    %1401 = vmatprep.subr.bf16.mxu0 0
    %1402 = vmatpush1.bf16.msra.mxu0 0
    %1403 = vmatprep.subr.bf16.mxu0 0
    %1404 = vmatpush1.bf16.msra.mxu0 0
    %1405 = vmatprep.subr.bf16.mxu0 0
    %1406 = vmatpush1.bf16.msra.mxu0 0
    %1407 = vmatprep.subr.bf16.mxu0 0
    %1408 = vmatpush1.bf16.msra.mxu0 0
    %1409 = vmatprep.subr.bf16.mxu0 0
    %1410 = vmatpush1.bf16.msra.mxu0 0
    %1411 = vmatprep.subr.bf16.mxu0 0
    %1412 = vmatpush1.bf16.msra.mxu0 0
    %1413 = vmatprep.mubr.bf16.mxu0 0
    %1414 = vmatmul.mubr.bf16.gmra.mrb[0].mxu0 %v1379
    %v1415 = vpop.f32.mrb[0].mxu0
    %v1416 = vadd.f32 0.0, %v1415
    %v1417 = vpop.f32.mrb[0].mxu0
    %v1418 = vpop.f32.mrb[0].mxu0
    %v1419 = vadd.f32 0.0, %v1418
    %v1420 = vpop.f32.mrb[0].mxu0
    %1421 = vdwg.mxu0
    %1426 = vrot.lane.b32.xlu0 %v1196, 32
    %v1427 = vpop.permute.xlu0 %1426
    %1428 = vrot.lane.b32.xlu0 %v1199, 32
    %v1429 = vpop.permute.xlu0 %1428
    %1430 = vrot.lane.b32.xlu0 %v1240, 32
    %v1431 = vpop.permute.xlu0 %1430
    %1432 = vrot.lane.b32.xlu0 %v1243, 32
    %v1433 = vpop.permute.xlu0 %1432
    %1442 = vrot.lane.b32.xlu0 %v1284, 64
    %v1443 = vpop.permute.xlu0 %1442
    %1444 = vrot.lane.b32.xlu0 %v1287, 64
    %v1445 = vpop.permute.xlu0 %1444
    %1446 = vrot.lane.b32.xlu0 %v1328, 64
    %v1447 = vpop.permute.xlu0 %1446
    %1448 = vrot.lane.b32.xlu0 %v1331, 64
    %v1449 = vpop.permute.xlu0 %1448
    %1458 = vrot.lane.b32.xlu0 %v1372, 96
    %v1459 = vpop.permute.xlu0 %1458
    %1460 = vrot.lane.b32.xlu0 %v1375, 96
    %v1461 = vpop.permute.xlu0 %1460
    %1462 = vrot.lane.b32.xlu0 %v1416, 96
    %v1463 = vpop.permute.xlu0 %1462
    %1464 = vrot.lane.b32.xlu0 %v1419, 96
    %v1465 = vpop.permute.xlu0 %1464
    %v1470 = vsel %vm516, %v1108, %v1427
    %v1471 = vsel %vm516, %v1111, %v1429
    %v1472 = vsel %vm516, %v1152, %v1431
    %v1473 = vsel %vm516, %v1155, %v1433
    %v1474 = vsel %vm186, %v1470, %v1443
    %v1475 = vsel %vm186, %v1471, %v1445
    %v1476 = vsel %vm186, %v1472, %v1447
    %v1477 = vsel %vm186, %v1473, %v1449
    %vm1478 = vcmask 785408
    %v1479 = vsel %vm1478, %v1474, %v1459
    %v1480 = vsel %vm1478, %v1475, %v1461
    %v1481 = vsel %vm1478, %v1476, %v1463
    %v1482 = vsel %vm1478, %v1477, %v1465
    %v1483 = vpack.c.bf16 %v1480, %v1479
    %v1484 = vpack.c.bf16 %v1482, %v1481
    %v1485 = vld [vmem:[%s8] sm:$0xf]
    %v1486 = vld [vmem:[%s8 + $0x4] sm:$0xf]
    %v1487 = vld [vmem:[%s8 + $0x8] sm:$0xf]
    %v1488 = vld [vmem:[%s8 + $0xc] sm:$0xf]
    %v1489 = vld [vmem:[%s8 + $0x10] sm:$0xf]
    %v1490 = vld [vmem:[%s8 + $0x14] sm:$0xf]
    %v1491 = vld [vmem:[%s8 + $0x18] sm:$0xf]
    %v1492 = vld [vmem:[%s8 + $0x1c] sm:$0xf]
    %v1493 = vld [vmem:[%s8 + $0x20] sm:$0xf]
    %v1494 = vld [vmem:[%s8 + $0x24] sm:$0xf]
    %v1495 = vld [vmem:[%s8 + $0x28] sm:$0xf]
    %v1496 = vld [vmem:[%s8 + $0x2c] sm:$0xf]
    %v1497 = vld [vmem:[%s8 + $0x30] sm:$0xf]
    %v1498 = vld [vmem:[%s8 + $0x34] sm:$0xf]
    %v1499 = vld [vmem:[%s8 + $0x38] sm:$0xf]
    %v1500 = vld [vmem:[%s8 + $0x3c] sm:$0xf]
    %v1501 = vld [vmem:[%s9] sm:$0x1]
    %v1503 = vlaneseq
    %v1504 = vshrl.u32 %v1503, 7
    %v1505 = vsub.s32 0, %v1504
    %v1506 = vrot.slane %v1501, %v1505
    %v1524 = vunpack.c.l.b16 %v1485
    %v1525 = vunpack.c.l.b16 %v1486
    %v1526 = vunpack.c.l.b16 %v1487
    %v1527 = vunpack.c.l.b16 %v1488
    %v1528 = vunpack.c.l.b16 %v1489
    %v1529 = vunpack.c.l.b16 %v1490
    %v1530 = vunpack.c.l.b16 %v1491
    %v1531 = vunpack.c.l.b16 %v1492
    %v1532 = vunpack.c.l.b16 %v1493
    %v1533 = vunpack.c.l.b16 %v1494
    %v1534 = vunpack.c.l.b16 %v1495
    %v1535 = vunpack.c.l.b16 %v1496
    %v1536 = vunpack.c.l.b16 %v1497
    %v1537 = vunpack.c.l.b16 %v1498
    %v1538 = vunpack.c.l.b16 %v1499
    %v1539 = vunpack.c.l.b16 %v1500
    %v1540 = vpack.c.b16 %v1525, %v1524
    %v1541 = vpack.c.b16 %v1527, %v1526
    %v1542 = vpack.c.b16 %v1529, %v1528
    %v1543 = vpack.c.b16 %v1531, %v1530
    %v1544 = vpack.c.b16 %v1533, %v1532
    %v1545 = vpack.c.b16 %v1535, %v1534
    %v1546 = vpack.c.b16 %v1537, %v1536
    %v1547 = vpack.c.b16 %v1539, %v1538
    %1556 = vmatprep.subr.bf16.mxu0 0
    %1557 = vmatpush1.bf16.msra.mxu0 %v1540
    %1558 = vmatprep.subr.bf16.mxu0 0
    %1559 = vmatpush1.bf16.msra.mxu0 %v1541
    %1560 = vmatprep.subr.bf16.mxu0 0
    %1561 = vmatpush1.bf16.msra.mxu0 %v1542
    %1562 = vmatprep.subr.bf16.mxu0 0
    %1563 = vmatpush1.bf16.msra.mxu0 %v1543
    %1564 = vmatprep.subr.bf16.mxu0 0
    %1565 = vmatpush1.bf16.msra.mxu0 %v1544
    %1566 = vmatprep.subr.bf16.mxu0 0
    %1567 = vmatpush1.bf16.msra.mxu0 %v1545
    %1568 = vmatprep.subr.bf16.mxu0 0
    %1569 = vmatpush1.bf16.msra.mxu0 %v1546
    %1570 = vmatprep.subr.bf16.mxu0 0
    %1571 = vmatpush1.bf16.msra.mxu0 %v1547
    %1572 = vmatprep.subr.bf16.mxu0 0
    %1573 = vmatpush1.bf16.msra.mxu0 0
    %1574 = vmatprep.subr.bf16.mxu0 0
    %1575 = vmatpush1.bf16.msra.mxu0 0
    %1576 = vmatprep.subr.bf16.mxu0 0
    %1577 = vmatpush1.bf16.msra.mxu0 0
    %1578 = vmatprep.subr.bf16.mxu0 0
    %1579 = vmatpush1.bf16.msra.mxu0 0
    %1580 = vmatprep.subr.bf16.mxu0 0
    %1581 = vmatpush1.bf16.msra.mxu0 0
    %1582 = vmatprep.subr.bf16.mxu0 0
    %1583 = vmatpush1.bf16.msra.mxu0 0
    %1584 = vmatprep.subr.bf16.mxu0 0
    %1585 = vmatpush1.bf16.msra.mxu0 0
    %1586 = vmatprep.subr.bf16.mxu0 0
    %1587 = vmatpush1.bf16.msra.mxu0 0
    %1588 = vmatprep.mubr.bf16.mxu0 0
    %1589 = vmatmul.mubr.bf16.gmra.mrb[0].mxu0 %v1483
    %v1590 = vpop.f32.mrb[0].mxu0
    %v1591 = vadd.f32 %v1506, %v1590
    %v1592 = vpop.f32.mrb[0].mxu0
    %v1593 = vpop.f32.mrb[0].mxu0
    %v1594 = vadd.f32 %v1506, %v1593
    %v1595 = vpop.f32.mrb[0].mxu0
    %1596 = vmatprep.mubr.bf16.mxu0 0
    %1597 = vmatmul.mubr.bf16.gmra.mrb[0].mxu0 %v1484
    %v1598 = vpop.f32.mrb[0].mxu0
    %v1599 = vadd.f32 %v1506, %v1598
    %v1600 = vpop.f32.mrb[0].mxu0
    %v1601 = vpop.f32.mrb[0].mxu0
    %v1602 = vadd.f32 %v1506, %v1601
    %v1603 = vpop.f32.mrb[0].mxu0
    %1604 = vdwg.mxu0
    %v1605 = vadd.f32 %v244, %v1591
    %v1606 = vadd.f32 %v245, %v1594
    %v1607 = vadd.f32 %v246, %v1599
    %v1608 = vadd.f32 %v247, %v1602
    %v1609 = vld [vmem:[%s10] sm:$0x1]
    %v1610 = vld [vmem:[%s11] sm:$0x1]
    %1611 = vadd.xlane.f32.xlu0 %v1605
    %v1612 = vpop.xlane.xlu0 %1611
    %1613 = vadd.xlane.f32.xlu0 %v1606
    %v1614 = vpop.xlane.xlu0 %1613
    %1615 = vadd.xlane.f32.xlu0 %v1607
    %v1616 = vpop.xlane.xlu0 %1615
    %1617 = vadd.xlane.f32.xlu0 %v1608
    %v1618 = vpop.xlane.xlu0 %1617
    %v1619 = vmul.f32 %v1612, %v258
    %v1620 = vmul.f32 %v1614, %v258
    %v1621 = vmul.f32 %v1616, %v258
    %v1622 = vmul.f32 %v1618, %v258
    %v1623 = vsub.f32 %v1605, %v1619
    %v1624 = vsub.f32 %v1606, %v1620
    %v1625 = vsub.f32 %v1607, %v1621
    %v1626 = vsub.f32 %v1608, %v1622
    %v1627 = vmul.f32 %v1623, %v1623
    %v1628 = vmul.f32 %v1624, %v1624
    %v1629 = vmul.f32 %v1625, %v1625
    %v1630 = vmul.f32 %v1626, %v1626
    %1631 = vadd.xlane.f32.xlu0 %v1627
    %v1632 = vpop.xlane.xlu0 %1631
    %1633 = vadd.xlane.f32.xlu0 %v1628
    %v1634 = vpop.xlane.xlu0 %1633
    %1635 = vadd.xlane.f32.xlu0 %v1629
    %v1636 = vpop.xlane.xlu0 %1635
    %1637 = vadd.xlane.f32.xlu0 %v1630
    %v1638 = vpop.xlane.xlu0 %1637
    %v1639 = vmul.f32 %v1632, %v258
    %v1640 = vmul.f32 %v1634, %v258
    %v1641 = vmul.f32 %v1636, %v258
    %v1642 = vmul.f32 %v1638, %v258
    %v1643 = vadd.f32 %v1639, 1e-06
    %v1644 = vadd.f32 %v1640, 1e-06
    %v1645 = vadd.f32 %v1641, 1e-06
    %v1646 = vadd.f32 %v1642, 1e-06
    %v1647 = vrsqrt.pop %v1643
    %v1648 = vrsqrt.pop %v1644
    %v1649 = vrsqrt.pop %v1645
    %v1650 = vrsqrt.pop %v1646
    %v1651 = vmul.f32 %v1623, %v1647
    %v1652 = vmul.f32 %v1624, %v1648
    %v1653 = vmul.f32 %v1625, %v1649
    %v1654 = vmul.f32 %v1626, %v1650
    %v1656 = vlaneseq
    %v1657 = vshrl.u32 %v1656, 7
    %v1658 = vsub.s32 0, %v1657
    %v1659 = vrot.slane %v1609, %v1658
    %v1661 = vmul.f32 %v1651, %v1659
    %v1662 = vmul.f32 %v1652, %v1659
    %v1663 = vmul.f32 %v1653, %v1659
    %v1664 = vmul.f32 %v1654, %v1659
    %v1666 = vlaneseq
    %v1667 = vshrl.u32 %v1666, 7
    %v1668 = vsub.s32 0, %v1667
    %v1669 = vrot.slane %v1610, %v1668
    %v1671 = vadd.f32 %v1661, %v1669
    %v1672 = vadd.f32 %v1662, %v1669
    %v1673 = vadd.f32 %v1663, %v1669
    %v1674 = vadd.f32 %v1664, %v1669
    %v1675 = vpack.c.bf16 %v1672, %v1671
    %v1676 = vpack.c.bf16 %v1674, %v1673
    %v1677 = vld [vmem:[%s12] sm:$0xff]
    %v1678 = vld [vmem:[%s12 + $0x8] sm:$0xff]
    %v1679 = vld [vmem:[%s12 + $0x10] sm:$0xff]
    %v1680 = vld [vmem:[%s12 + $0x18] sm:$0xff]
    %v1681 = vld [vmem:[%s12 + $0x20] sm:$0xff]
    %v1682 = vld [vmem:[%s12 + $0x28] sm:$0xff]
    %v1683 = vld [vmem:[%s12 + $0x30] sm:$0xff]
    %v1684 = vld [vmem:[%s12 + $0x38] sm:$0xff]
    %v1685 = vld [vmem:[%s12 + $0x40] sm:$0xff]
    %v1686 = vld [vmem:[%s12 + $0x48] sm:$0xff]
    %v1687 = vld [vmem:[%s12 + $0x50] sm:$0xff]
    %v1688 = vld [vmem:[%s12 + $0x58] sm:$0xff]
    %v1689 = vld [vmem:[%s12 + $0x60] sm:$0xff]
    %v1690 = vld [vmem:[%s12 + $0x68] sm:$0xff]
    %v1691 = vld [vmem:[%s12 + $0x70] sm:$0xff]
    %v1692 = vld [vmem:[%s12 + $0x78] sm:$0xff]
    %v1693 = vld [vmem:[%s13] sm:$0x3]
    %v1695 = vlaneseq
    %v1696 = vshrl.u32 %v1695, 7
    %v1697 = vsub.s32 0, %v1696
    %v1698 = vrot.slane %v1693, %v1697
    %v1699 = vlaneseq
    %v1700 = vshrl.u32 %v1699, 7
    %v1701 = vsub.s32 1, %v1700
    %v1702 = vrot.slane %v1693, %v1701
    %v1721 = vunpack.c.l.b16 %v1677
    %v1722 = vunpack.c.h.b16 %v1677
    %v1723 = vunpack.c.l.b16 %v1678
    %v1724 = vunpack.c.h.b16 %v1678
    %v1725 = vunpack.c.l.b16 %v1679
    %v1726 = vunpack.c.h.b16 %v1679
    %v1727 = vunpack.c.l.b16 %v1680
    %v1728 = vunpack.c.h.b16 %v1680
    %v1729 = vunpack.c.l.b16 %v1681
    %v1730 = vunpack.c.h.b16 %v1681
    %v1731 = vunpack.c.l.b16 %v1682
    %v1732 = vunpack.c.h.b16 %v1682
    %v1733 = vunpack.c.l.b16 %v1683
    %v1734 = vunpack.c.h.b16 %v1683
    %v1735 = vunpack.c.l.b16 %v1684
    %v1736 = vunpack.c.h.b16 %v1684
    %v1737 = vunpack.c.l.b16 %v1685
    %v1738 = vunpack.c.h.b16 %v1685
    %v1739 = vunpack.c.l.b16 %v1686
    %v1740 = vunpack.c.h.b16 %v1686
    %v1741 = vunpack.c.l.b16 %v1687
    %v1742 = vunpack.c.h.b16 %v1687
    %v1743 = vunpack.c.l.b16 %v1688
    %v1744 = vunpack.c.h.b16 %v1688
    %v1745 = vunpack.c.l.b16 %v1689
    %v1746 = vunpack.c.h.b16 %v1689
    %v1747 = vunpack.c.l.b16 %v1690
    %v1748 = vunpack.c.h.b16 %v1690
    %v1749 = vunpack.c.l.b16 %v1691
    %v1750 = vunpack.c.h.b16 %v1691
    %v1751 = vunpack.c.l.b16 %v1692
    %v1752 = vunpack.c.h.b16 %v1692
    %v1753 = vpack.c.b16 %v1723, %v1721
    %v1754 = vpack.c.b16 %v1724, %v1722
    %v1755 = vpack.c.b16 %v1727, %v1725
    %v1756 = vpack.c.b16 %v1728, %v1726
    %v1757 = vpack.c.b16 %v1731, %v1729
    %v1758 = vpack.c.b16 %v1732, %v1730
    %v1759 = vpack.c.b16 %v1735, %v1733
    %v1760 = vpack.c.b16 %v1736, %v1734
    %v1761 = vpack.c.b16 %v1739, %v1737
    %v1762 = vpack.c.b16 %v1740, %v1738
    %v1763 = vpack.c.b16 %v1743, %v1741
    %v1764 = vpack.c.b16 %v1744, %v1742
    %v1765 = vpack.c.b16 %v1747, %v1745
    %v1766 = vpack.c.b16 %v1748, %v1746
    %v1767 = vpack.c.b16 %v1751, %v1749
    %v1768 = vpack.c.b16 %v1752, %v1750
    %1785 = vmatprep.subr.bf16.mxu0 %v1754
    %1786 = vmatpush1.bf16.msra.mxu0 %v1753
    %1787 = vmatprep.subr.bf16.mxu0 %v1756
    %1788 = vmatpush1.bf16.msra.mxu0 %v1755
    %1789 = vmatprep.subr.bf16.mxu0 %v1758
    %1790 = vmatpush1.bf16.msra.mxu0 %v1757
    %1791 = vmatprep.subr.bf16.mxu0 %v1760
    %1792 = vmatpush1.bf16.msra.mxu0 %v1759
    %1793 = vmatprep.subr.bf16.mxu0 %v1762
    %1794 = vmatpush1.bf16.msra.mxu0 %v1761
    %1795 = vmatprep.subr.bf16.mxu0 %v1764
    %1796 = vmatpush1.bf16.msra.mxu0 %v1763
    %1797 = vmatprep.subr.bf16.mxu0 %v1766
    %1798 = vmatpush1.bf16.msra.mxu0 %v1765
    %1799 = vmatprep.subr.bf16.mxu0 %v1768
    %1800 = vmatpush1.bf16.msra.mxu0 %v1767
    %1801 = vmatprep.subr.bf16.mxu0 0
    %1802 = vmatpush1.bf16.msra.mxu0 0
    %1803 = vmatprep.subr.bf16.mxu0 0
    %1804 = vmatpush1.bf16.msra.mxu0 0
    %1805 = vmatprep.subr.bf16.mxu0 0
    %1806 = vmatpush1.bf16.msra.mxu0 0
    %1807 = vmatprep.subr.bf16.mxu0 0
    %1808 = vmatpush1.bf16.msra.mxu0 0
    %1809 = vmatprep.subr.bf16.mxu0 0
    %1810 = vmatpush1.bf16.msra.mxu0 0
    %1811 = vmatprep.subr.bf16.mxu0 0
    %1812 = vmatpush1.bf16.msra.mxu0 0
    %1813 = vmatprep.subr.bf16.mxu0 0
    %1814 = vmatpush1.bf16.msra.mxu0 0
    %1815 = vmatprep.subr.bf16.mxu0 0
    %1816 = vmatpush1.bf16.msra.mxu0 0
    %1817 = vmatprep.mubr.bf16.mxu0 0
    %1818 = vmatmul.mubr.bf16.gmra.mrb[0].mxu0 %v1675
    %v1819 = vpop.f32.mrb[0].mxu0
    %v1820 = vadd.f32 %v1698, %v1819
    %v1821 = vpop.f32.mrb[0].mxu0
    %v1822 = vadd.f32 %v1702, %v1821
    %v1823 = vpop.f32.mrb[0].mxu0
    %v1824 = vadd.f32 %v1698, %v1823
    %v1825 = vpop.f32.mrb[0].mxu0
    %v1826 = vadd.f32 %v1702, %v1825
    %1827 = vmatprep.mubr.bf16.mxu0 0
    %1828 = vmatmul.mubr.bf16.gmra.mrb[0].mxu0 %v1676
    %v1829 = vpop.f32.mrb[0].mxu0
    %v1830 = vadd.f32 %v1698, %v1829
    %v1831 = vpop.f32.mrb[0].mxu0
    %v1832 = vadd.f32 %v1702, %v1831
    %v1833 = vpop.f32.mrb[0].mxu0
    %v1834 = vadd.f32 %v1698, %v1833
    %v1835 = vpop.f32.mrb[0].mxu0
    %v1836 = vadd.f32 %v1702, %v1835
    %1837 = vdwg.mxu0
    %v1838 = vmul.f32 %v1820, %v1820
    %v1839 = vmul.f32 %v1822, %v1822
    %v1840 = vmul.f32 %v1824, %v1824
    %v1841 = vmul.f32 %v1826, %v1826
    %v1842 = vmul.f32 %v1830, %v1830
    %v1843 = vmul.f32 %v1832, %v1832
    %v1844 = vmul.f32 %v1834, %v1834
    %v1845 = vmul.f32 %v1836, %v1836
    %v1846 = vmul.f32 %v1820, %v1838
    %v1847 = vmul.f32 %v1822, %v1839
    %v1848 = vmul.f32 %v1824, %v1840
    %v1849 = vmul.f32 %v1826, %v1841
    %v1850 = vmul.f32 %v1830, %v1842
    %v1851 = vmul.f32 %v1832, %v1843
    %v1852 = vmul.f32 %v1834, %v1844
    %v1853 = vmul.f32 %v1836, %v1845
    %v1854 = vmul.f32 %v1846, 0.044715
    %v1855 = vmul.f32 %v1847, 0.044715
    %v1856 = vmul.f32 %v1848, 0.044715
    %v1857 = vmul.f32 %v1849, 0.044715
    %v1858 = vmul.f32 %v1850, 0.044715
    %v1859 = vmul.f32 %v1851, 0.044715
    %v1860 = vmul.f32 %v1852, 0.044715
    %v1861 = vmul.f32 %v1853, 0.044715
    %v1862 = vadd.f32 %v1820, %v1854
    %v1863 = vadd.f32 %v1822, %v1855
    %v1864 = vadd.f32 %v1824, %v1856
    %v1865 = vadd.f32 %v1826, %v1857
    %v1866 = vadd.f32 %v1830, %v1858
    %v1867 = vadd.f32 %v1832, %v1859
    %v1868 = vadd.f32 %v1834, %v1860
    %v1869 = vadd.f32 %v1836, %v1861
    %v1870 = vmul.f32 %v1862, 0.7978846
    %v1871 = vmul.f32 %v1863, 0.7978846
    %v1872 = vmul.f32 %v1864, 0.7978846
    %v1873 = vmul.f32 %v1865, 0.7978846
    %v1874 = vmul.f32 %v1866, 0.7978846
    %v1875 = vmul.f32 %v1867, 0.7978846
    %v1876 = vmul.f32 %v1868, 0.7978846
    %v1877 = vmul.f32 %v1869, 0.7978846
    %v1878 = vtanh.pop %v1870
    %v1879 = vtanh.pop %v1871
    %v1880 = vtanh.pop %v1872
    %v1881 = vtanh.pop %v1873
    %v1882 = vtanh.pop %v1874
    %v1883 = vtanh.pop %v1875
    %v1884 = vtanh.pop %v1876
    %v1885 = vtanh.pop %v1877
    %v1886 = vadd.f32 %v1878, 1.0
    %v1887 = vadd.f32 %v1879, 1.0
    %v1888 = vadd.f32 %v1880, 1.0
    %v1889 = vadd.f32 %v1881, 1.0
    %v1890 = vadd.f32 %v1882, 1.0
    %v1891 = vadd.f32 %v1883, 1.0
    %v1892 = vadd.f32 %v1884, 1.0
    %v1893 = vadd.f32 %v1885, 1.0
    %v1894 = vmul.f32 %v1886, 0.5
    %v1895 = vmul.f32 %v1887, 0.5
    %v1896 = vmul.f32 %v1888, 0.5
    %v1897 = vmul.f32 %v1889, 0.5
    %v1898 = vmul.f32 %v1890, 0.5
    %v1899 = vmul.f32 %v1891, 0.5
    %v1900 = vmul.f32 %v1892, 0.5
    %v1901 = vmul.f32 %v1893, 0.5
    %v1902 = vmul.f32 %v1820, %v1894
    %v1903 = vmul.f32 %v1822, %v1895
    %v1904 = vmul.f32 %v1824, %v1896
    %v1905 = vmul.f32 %v1826, %v1897
    %v1906 = vmul.f32 %v1830, %v1898
    %v1907 = vmul.f32 %v1832, %v1899
    %v1908 = vmul.f32 %v1834, %v1900
    %v1909 = vmul.f32 %v1836, %v1901
    %v1910 = vpack.c.bf16 %v1904, %v1902
    %v1911 = vpack.c.bf16 %v1905, %v1903
    %v1912 = vpack.c.bf16 %v1908, %v1906
    %v1913 = vpack.c.bf16 %v1909, %v1907
    %v1914 = vld [vmem:[%s14] sm:$0xf]
    %v1915 = vld [vmem:[%s14 + $0x4] sm:$0xf]
    %v1916 = vld [vmem:[%s14 + $0x8] sm:$0xf]
    %v1917 = vld [vmem:[%s14 + $0xc] sm:$0xf]
    %v1918 = vld [vmem:[%s14 + $0x10] sm:$0xf]
    %v1919 = vld [vmem:[%s14 + $0x14] sm:$0xf]
    %v1920 = vld [vmem:[%s14 + $0x18] sm:$0xf]
    %v1921 = vld [vmem:[%s14 + $0x1c] sm:$0xf]
    %v1922 = vld [vmem:[%s14 + $0x20] sm:$0xf]
    %v1923 = vld [vmem:[%s14 + $0x24] sm:$0xf]
    %v1924 = vld [vmem:[%s14 + $0x28] sm:$0xf]
    %v1925 = vld [vmem:[%s14 + $0x2c] sm:$0xf]
    %v1926 = vld [vmem:[%s14 + $0x30] sm:$0xf]
    %v1927 = vld [vmem:[%s14 + $0x34] sm:$0xf]
    %v1928 = vld [vmem:[%s14 + $0x38] sm:$0xf]
    %v1929 = vld [vmem:[%s14 + $0x3c] sm:$0xf]
    %v1930 = vld [vmem:[%s14 + $0x40] sm:$0xf]
    %v1931 = vld [vmem:[%s14 + $0x44] sm:$0xf]
    %v1932 = vld [vmem:[%s14 + $0x48] sm:$0xf]
    %v1933 = vld [vmem:[%s14 + $0x4c] sm:$0xf]
    %v1934 = vld [vmem:[%s14 + $0x50] sm:$0xf]
    %v1935 = vld [vmem:[%s14 + $0x54] sm:$0xf]
    %v1936 = vld [vmem:[%s14 + $0x58] sm:$0xf]
    %v1937 = vld [vmem:[%s14 + $0x5c] sm:$0xf]
    %v1938 = vld [vmem:[%s14 + $0x60] sm:$0xf]
    %v1939 = vld [vmem:[%s14 + $0x64] sm:$0xf]
    %v1940 = vld [vmem:[%s14 + $0x68] sm:$0xf]
    %v1941 = vld [vmem:[%s14 + $0x6c] sm:$0xf]
    %v1942 = vld [vmem:[%s14 + $0x70] sm:$0xf]
    %v1943 = vld [vmem:[%s14 + $0x74] sm:$0xf]
    %v1944 = vld [vmem:[%s14 + $0x78] sm:$0xf]
    %v1945 = vld [vmem:[%s14 + $0x7c] sm:$0xf]
    %v1946 = vld [vmem:[%s15] sm:$0x1]
    %v1948 = vlaneseq
    %v1949 = vshrl.u32 %v1948, 7
    %v1950 = vsub.s32 0, %v1949
    %v1951 = vrot.slane %v1946, %v1950
    %v1985 = vunpack.c.l.b16 %v1914
    %v1986 = vunpack.c.l.b16 %v1915
    %v1987 = vunpack.c.l.b16 %v1916
    %v1988 = vunpack.c.l.b16 %v1917
    %v1989 = vunpack.c.l.b16 %v1918
    %v1990 = vunpack.c.l.b16 %v1919
    %v1991 = vunpack.c.l.b16 %v1920
    %v1992 = vunpack.c.l.b16 %v1921
    %v1993 = vunpack.c.l.b16 %v1922
    %v1994 = vunpack.c.l.b16 %v1923
    %v1995 = vunpack.c.l.b16 %v1924
    %v1996 = vunpack.c.l.b16 %v1925
    %v1997 = vunpack.c.l.b16 %v1926
    %v1998 = vunpack.c.l.b16 %v1927
    %v1999 = vunpack.c.l.b16 %v1928
    %v2000 = vunpack.c.l.b16 %v1929
    %v2001 = vunpack.c.l.b16 %v1930
    %v2002 = vunpack.c.l.b16 %v1931
    %v2003 = vunpack.c.l.b16 %v1932
    %v2004 = vunpack.c.l.b16 %v1933
    %v2005 = vunpack.c.l.b16 %v1934
    %v2006 = vunpack.c.l.b16 %v1935
    %v2007 = vunpack.c.l.b16 %v1936
    %v2008 = vunpack.c.l.b16 %v1937
    %v2009 = vunpack.c.l.b16 %v1938
    %v2010 = vunpack.c.l.b16 %v1939
    %v2011 = vunpack.c.l.b16 %v1940
    %v2012 = vunpack.c.l.b16 %v1941
    %v2013 = vunpack.c.l.b16 %v1942
    %v2014 = vunpack.c.l.b16 %v1943
    %v2015 = vunpack.c.l.b16 %v1944
    %v2016 = vunpack.c.l.b16 %v1945
    %v2017 = vpack.c.b16 %v1986, %v1985
    %v2018 = vpack.c.b16 %v1988, %v1987
    %v2019 = vpack.c.b16 %v1990, %v1989
    %v2020 = vpack.c.b16 %v1992, %v1991
    %v2021 = vpack.c.b16 %v1994, %v1993
    %v2022 = vpack.c.b16 %v1996, %v1995
    %v2023 = vpack.c.b16 %v1998, %v1997
    %v2024 = vpack.c.b16 %v2000, %v1999
    %v2025 = vpack.c.b16 %v2002, %v2001
    %v2026 = vpack.c.b16 %v2004, %v2003
    %v2027 = vpack.c.b16 %v2006, %v2005
    %v2028 = vpack.c.b16 %v2008, %v2007
    %v2029 = vpack.c.b16 %v2010, %v2009
    %v2030 = vpack.c.b16 %v2012, %v2011
    %v2031 = vpack.c.b16 %v2014, %v2013
    %v2032 = vpack.c.b16 %v2016, %v2015
    %2049 = vmatprep.subr.bf16.mxu0 0
    %2050 = vmatpush1.bf16.msra.mxu0 %v2017
    %2051 = vmatprep.subr.bf16.mxu0 0
    %2052 = vmatpush1.bf16.msra.mxu0 %v2018
    %2053 = vmatprep.subr.bf16.mxu0 0
    %2054 = vmatpush1.bf16.msra.mxu0 %v2019
    %2055 = vmatprep.subr.bf16.mxu0 0
    %2056 = vmatpush1.bf16.msra.mxu0 %v2020
    %2057 = vmatprep.subr.bf16.mxu0 0
    %2058 = vmatpush1.bf16.msra.mxu0 %v2021
    %2059 = vmatprep.subr.bf16.mxu0 0
    %2060 = vmatpush1.bf16.msra.mxu0 %v2022
    %2061 = vmatprep.subr.bf16.mxu0 0
    %2062 = vmatpush1.bf16.msra.mxu0 %v2023
    %2063 = vmatprep.subr.bf16.mxu0 0
    %2064 = vmatpush1.bf16.msra.mxu0 %v2024
    %2065 = vmatprep.subr.bf16.mxu0 0
    %2066 = vmatpush1.bf16.msra.mxu0 %v2025
    %2067 = vmatprep.subr.bf16.mxu0 0
    %2068 = vmatpush1.bf16.msra.mxu0 %v2026
    %2069 = vmatprep.subr.bf16.mxu0 0
    %2070 = vmatpush1.bf16.msra.mxu0 %v2027
    %2071 = vmatprep.subr.bf16.mxu0 0
    %2072 = vmatpush1.bf16.msra.mxu0 %v2028
    %2073 = vmatprep.subr.bf16.mxu0 0
    %2074 = vmatpush1.bf16.msra.mxu0 %v2029
    %2075 = vmatprep.subr.bf16.mxu0 0
    %2076 = vmatpush1.bf16.msra.mxu0 %v2030
    %2077 = vmatprep.subr.bf16.mxu0 0
    %2078 = vmatpush1.bf16.msra.mxu0 %v2031
    %2079 = vmatprep.subr.bf16.mxu0 0
    %2080 = vmatpush1.bf16.msra.mxu0 %v2032
    %2081 = vmatprep.mubr.bf16.mxu0 %v1911
    %2082 = vmatmul.mubr.bf16.gmra.mrb[0].mxu0 %v1910
    %v2083 = vpop.f32.mrb[0].mxu0
    %v2084 = vadd.f32 %v1951, %v2083
    %v2085 = vpop.f32.mrb[0].mxu0
    %v2086 = vpop.f32.mrb[0].mxu0
    %v2087 = vadd.f32 %v1951, %v2086
    %v2088 = vpop.f32.mrb[0].mxu0
    %2089 = vmatprep.mubr.bf16.mxu0 %v1913
    %2090 = vmatmul.mubr.bf16.gmra.mrb[0].mxu0 %v1912
    %v2091 = vpop.f32.mrb[0].mxu0
    %v2092 = vadd.f32 %v1951, %v2091
    %v2093 = vpop.f32.mrb[0].mxu0
    %v2094 = vpop.f32.mrb[0].mxu0
    %v2095 = vadd.f32 %v1951, %v2094
    %v2096 = vpop.f32.mrb[0].mxu0
    %2097 = vdwg.mxu0
    %v2098 = vadd.f32 %v1605, %v2084
    %v2099 = vadd.f32 %v1606, %v2087
    %v2100 = vadd.f32 %v1607, %v2092
    %v2101 = vadd.f32 %v1608, %v2095
    %s2102 = scalar_lea.vmem %s4, 1
    %v2103 = vld [vmem:[%s2102] sm:$0x1]
    %s2104 = scalar_lea.vmem %s5, 1
    %v2105 = vld [vmem:[%s2104] sm:$0x1]
    %2106 = vadd.xlane.f32.xlu0 %v2098
    %v2107 = vpop.xlane.xlu0 %2106
    %2108 = vadd.xlane.f32.xlu0 %v2099
    %v2109 = vpop.xlane.xlu0 %2108
    %2110 = vadd.xlane.f32.xlu0 %v2100
    %v2111 = vpop.xlane.xlu0 %2110
    %2112 = vadd.xlane.f32.xlu0 %v2101
    %v2113 = vpop.xlane.xlu0 %2112
    %v2114 = vmul.f32 %v2107, %v258
    %v2115 = vmul.f32 %v2109, %v258
    %v2116 = vmul.f32 %v2111, %v258
    %v2117 = vmul.f32 %v2113, %v258
    %v2118 = vsub.f32 %v2098, %v2114
    %v2119 = vsub.f32 %v2099, %v2115
    %v2120 = vsub.f32 %v2100, %v2116
    %v2121 = vsub.f32 %v2101, %v2117
    %v2122 = vmul.f32 %v2118, %v2118
    %v2123 = vmul.f32 %v2119, %v2119
    %v2124 = vmul.f32 %v2120, %v2120
    %v2125 = vmul.f32 %v2121, %v2121
    %2126 = vadd.xlane.f32.xlu0 %v2122
    %v2127 = vpop.xlane.xlu0 %2126
    %2128 = vadd.xlane.f32.xlu0 %v2123
    %v2129 = vpop.xlane.xlu0 %2128
    %2130 = vadd.xlane.f32.xlu0 %v2124
    %v2131 = vpop.xlane.xlu0 %2130
    %2132 = vadd.xlane.f32.xlu0 %v2125
    %v2133 = vpop.xlane.xlu0 %2132
    %v2134 = vmul.f32 %v2127, %v258
    %v2135 = vmul.f32 %v2129, %v258
    %v2136 = vmul.f32 %v2131, %v258
    %v2137 = vmul.f32 %v2133, %v258
    %v2138 = vadd.f32 %v2134, 1e-06
    %v2139 = vadd.f32 %v2135, 1e-06
    %v2140 = vadd.f32 %v2136, 1e-06
    %v2141 = vadd.f32 %v2137, 1e-06
    %v2142 = vrsqrt.pop %v2138
    %v2143 = vrsqrt.pop %v2139
    %v2144 = vrsqrt.pop %v2140
    %v2145 = vrsqrt.pop %v2141
    %v2146 = vmul.f32 %v2118, %v2142
    %v2147 = vmul.f32 %v2119, %v2143
    %v2148 = vmul.f32 %v2120, %v2144
    %v2149 = vmul.f32 %v2121, %v2145
    %v2151 = vlaneseq
    %v2152 = vshrl.u32 %v2151, 7
    %v2153 = vsub.s32 0, %v2152
    %v2154 = vrot.slane %v2103, %v2153
    %v2156 = vmul.f32 %v2146, %v2154
    %v2157 = vmul.f32 %v2147, %v2154
    %v2158 = vmul.f32 %v2148, %v2154
    %v2159 = vmul.f32 %v2149, %v2154
    %v2161 = vlaneseq
    %v2162 = vshrl.u32 %v2161, 7
    %v2163 = vsub.s32 0, %v2162
    %v2164 = vrot.slane %v2105, %v2163
    %v2166 = vadd.f32 %v2156, %v2164
    %v2167 = vadd.f32 %v2157, %v2164
    %v2168 = vadd.f32 %v2158, %v2164
    %v2169 = vadd.f32 %v2159, %v2164
    %v2170 = vpack.c.bf16 %v2167, %v2166
    %v2171 = vpack.c.bf16 %v2169, %v2168
    %s2172 = scalar_lea.vmem %s6, 128
    %v2173 = vld [vmem:[%s2172] sm:$0xff]
    %v2174 = vld [vmem:[%s2172 + $0x8] sm:$0xff]
    %v2175 = vld [vmem:[%s2172 + $0x10] sm:$0xff]
    %v2176 = vld [vmem:[%s2172 + $0x18] sm:$0xff]
    %v2177 = vld [vmem:[%s2172 + $0x20] sm:$0xff]
    %v2178 = vld [vmem:[%s2172 + $0x28] sm:$0xff]
    %v2179 = vld [vmem:[%s2172 + $0x30] sm:$0xff]
    %v2180 = vld [vmem:[%s2172 + $0x38] sm:$0xff]
    %v2181 = vld [vmem:[%s2172 + $0x40] sm:$0xff]
    %v2182 = vld [vmem:[%s2172 + $0x48] sm:$0xff]
    %v2183 = vld [vmem:[%s2172 + $0x50] sm:$0xff]
    %v2184 = vld [vmem:[%s2172 + $0x58] sm:$0xff]
    %v2185 = vld [vmem:[%s2172 + $0x60] sm:$0xff]
    %v2186 = vld [vmem:[%s2172 + $0x68] sm:$0xff]
    %v2187 = vld [vmem:[%s2172 + $0x70] sm:$0xff]
    %v2188 = vld [vmem:[%s2172 + $0x78] sm:$0xff]
    %s2189 = scalar_lea.vmem %s7, 2
    %v2190 = vld [vmem:[%s2189] sm:$0x3]
    %v2192 = vlaneseq
    %v2193 = vshrl.u32 %v2192, 7
    %v2194 = vsub.s32 0, %v2193
    %v2195 = vrot.slane %v2190, %v2194
    %v2196 = vlaneseq
    %v2197 = vshrl.u32 %v2196, 7
    %v2198 = vsub.s32 1, %v2197
    %v2199 = vrot.slane %v2190, %v2198
    %v2218 = vunpack.c.l.b16 %v2173
    %v2219 = vunpack.c.h.b16 %v2173
    %v2220 = vunpack.c.l.b16 %v2174
    %v2221 = vunpack.c.h.b16 %v2174
    %v2222 = vunpack.c.l.b16 %v2175
    %v2223 = vunpack.c.h.b16 %v2175
    %v2224 = vunpack.c.l.b16 %v2176
    %v2225 = vunpack.c.h.b16 %v2176
    %v2226 = vunpack.c.l.b16 %v2177
    %v2227 = vunpack.c.h.b16 %v2177
    %v2228 = vunpack.c.l.b16 %v2178
    %v2229 = vunpack.c.h.b16 %v2178
    %v2230 = vunpack.c.l.b16 %v2179
    %v2231 = vunpack.c.h.b16 %v2179
    %v2232 = vunpack.c.l.b16 %v2180
    %v2233 = vunpack.c.h.b16 %v2180
    %v2234 = vunpack.c.l.b16 %v2181
    %v2235 = vunpack.c.h.b16 %v2181
    %v2236 = vunpack.c.l.b16 %v2182
    %v2237 = vunpack.c.h.b16 %v2182
    %v2238 = vunpack.c.l.b16 %v2183
    %v2239 = vunpack.c.h.b16 %v2183
    %v2240 = vunpack.c.l.b16 %v2184
    %v2241 = vunpack.c.h.b16 %v2184
    %v2242 = vunpack.c.l.b16 %v2185
    %v2243 = vunpack.c.h.b16 %v2185
    %v2244 = vunpack.c.l.b16 %v2186
    %v2245 = vunpack.c.h.b16 %v2186
    %v2246 = vunpack.c.l.b16 %v2187
    %v2247 = vunpack.c.h.b16 %v2187
    %v2248 = vunpack.c.l.b16 %v2188
    %v2249 = vunpack.c.h.b16 %v2188
    %v2250 = vpack.c.b16 %v2220, %v2218
    %v2251 = vpack.c.b16 %v2221, %v2219
    %v2252 = vpack.c.b16 %v2224, %v2222
    %v2253 = vpack.c.b16 %v2225, %v2223
    %v2254 = vpack.c.b16 %v2228, %v2226
    %v2255 = vpack.c.b16 %v2229, %v2227
    %v2256 = vpack.c.b16 %v2232, %v2230
    %v2257 = vpack.c.b16 %v2233, %v2231
    %v2258 = vpack.c.b16 %v2236, %v2234
    %v2259 = vpack.c.b16 %v2237, %v2235
    %v2260 = vpack.c.b16 %v2240, %v2238
    %v2261 = vpack.c.b16 %v2241, %v2239
    %v2262 = vpack.c.b16 %v2244, %v2242
    %v2263 = vpack.c.b16 %v2245, %v2243
    %v2264 = vpack.c.b16 %v2248, %v2246
    %v2265 = vpack.c.b16 %v2249, %v2247
    %2282 = vmatprep.subr.bf16.mxu0 %v2251
    %2283 = vmatpush1.bf16.msra.mxu0 %v2250
    %2284 = vmatprep.subr.bf16.mxu0 %v2253
    %2285 = vmatpush1.bf16.msra.mxu0 %v2252
    %2286 = vmatprep.subr.bf16.mxu0 %v2255
    %2287 = vmatpush1.bf16.msra.mxu0 %v2254
    %2288 = vmatprep.subr.bf16.mxu0 %v2257
    %2289 = vmatpush1.bf16.msra.mxu0 %v2256
    %2290 = vmatprep.subr.bf16.mxu0 %v2259
    %2291 = vmatpush1.bf16.msra.mxu0 %v2258
    %2292 = vmatprep.subr.bf16.mxu0 %v2261
    %2293 = vmatpush1.bf16.msra.mxu0 %v2260
    %2294 = vmatprep.subr.bf16.mxu0 %v2263
    %2295 = vmatpush1.bf16.msra.mxu0 %v2262
    %2296 = vmatprep.subr.bf16.mxu0 %v2265
    %2297 = vmatpush1.bf16.msra.mxu0 %v2264
    %2298 = vmatprep.subr.bf16.mxu0 0
    %2299 = vmatpush1.bf16.msra.mxu0 0
    %2300 = vmatprep.subr.bf16.mxu0 0
    %2301 = vmatpush1.bf16.msra.mxu0 0
    %2302 = vmatprep.subr.bf16.mxu0 0
    %2303 = vmatpush1.bf16.msra.mxu0 0
    %2304 = vmatprep.subr.bf16.mxu0 0
    %2305 = vmatpush1.bf16.msra.mxu0 0
    %2306 = vmatprep.subr.bf16.mxu0 0
    %2307 = vmatpush1.bf16.msra.mxu0 0
    %2308 = vmatprep.subr.bf16.mxu0 0
    %2309 = vmatpush1.bf16.msra.mxu0 0
    %2310 = vmatprep.subr.bf16.mxu0 0
    %2311 = vmatpush1.bf16.msra.mxu0 0
    %2312 = vmatprep.subr.bf16.mxu0 0
    %2313 = vmatpush1.bf16.msra.mxu0 0
    %2314 = vmatprep.mubr.bf16.mxu0 0
    %2315 = vmatmul.mubr.bf16.gmra.mrb[0].mxu0 %v2170
    %v2316 = vpop.f32.mrb[0].mxu0
    %v2317 = vadd.f32 %v2195, %v2316
    %v2318 = vpop.f32.mrb[0].mxu0
    %v2319 = vadd.f32 %v2199, %v2318
    %v2320 = vpop.f32.mrb[0].mxu0
    %v2321 = vadd.f32 %v2195, %v2320
    %v2322 = vpop.f32.mrb[0].mxu0
    %v2323 = vadd.f32 %v2199, %v2322
    %2324 = vmatprep.mubr.bf16.mxu0 0
    %2325 = vmatmul.mubr.bf16.gmra.mrb[0].mxu0 %v2171
    %v2326 = vpop.f32.mrb[0].mxu0
    %v2327 = vadd.f32 %v2195, %v2326
    %v2328 = vpop.f32.mrb[0].mxu0
    %v2329 = vadd.f32 %v2199, %v2328
    %v2330 = vpop.f32.mrb[0].mxu0
    %v2331 = vadd.f32 %v2195, %v2330
    %v2332 = vpop.f32.mrb[0].mxu0
    %v2333 = vadd.f32 %v2199, %v2332
    %2334 = vdwg.mxu0
    %v2335 = vpack.c.bf16 %v2321, %v2317
    %v2336 = vpack.c.bf16 %v2323, %v2319
    %v2337 = vpack.c.bf16 %v2331, %v2327
    %v2338 = vpack.c.bf16 %v2333, %v2329
    %2341 = vrot.lane.b32.xlu0 %v2335, 96
    %v2342 = vpop.permute.xlu0 %2341
    %2343 = vrot.lane.b32.xlu0 %v2337, 96
    %v2344 = vpop.permute.xlu0 %2343
    %2345 = vrot.lane.b32.xlu0 %v2335, 64
    %v2346 = vpop.permute.xlu0 %2345
    %2347 = vrot.lane.b32.xlu0 %v2337, 64
    %v2348 = vpop.permute.xlu0 %2347
    %2349 = vrot.lane.b32.xlu0 %v2335, 32
    %v2350 = vpop.permute.xlu0 %2349
    %2351 = vrot.lane.b32.xlu0 %v2337, 32
    %v2352 = vpop.permute.xlu0 %2351
    %2355 = vrot.lane.b32.xlu0 %v2336, 96
    %v2356 = vpop.permute.xlu0 %2355
    %2357 = vrot.lane.b32.xlu0 %v2338, 96
    %v2358 = vpop.permute.xlu0 %2357
    %2361 = vrot.lane.b32.xlu0 %v2336, 64
    %v2362 = vpop.permute.xlu0 %2361
    %2363 = vrot.lane.b32.xlu0 %v2338, 64
    %v2364 = vpop.permute.xlu0 %2363
    %2367 = vrot.lane.b32.xlu0 %v2336, 32
    %v2368 = vpop.permute.xlu0 %2367
    %2369 = vrot.lane.b32.xlu0 %v2338, 32
    %v2370 = vpop.permute.xlu0 %2369
    %v2374 = vsel %vm516, %v2335, 0
    %2376 = vmatprep.subr.bf16.mxu0 0
    %2377 = vmatpush1.bf16.xpose.msra.mxu0 %v2374
    %2378 = vmatprep.subr.bf16.mxu0 0
    %2379 = vmatpush1.bf16.xpose.msra.mxu0 0
    %2380 = vmatprep.subr.bf16.mxu0 0
    %2381 = vmatpush1.bf16.xpose.msra.mxu0 0
    %2382 = vmatprep.subr.bf16.mxu0 0
    %2383 = vmatpush1.bf16.xpose.msra.mxu0 0
    %2384 = vmatprep.subr.bf16.mxu0 0
    %2385 = vmatpush1.bf16.xpose.msra.mxu0 0
    %2386 = vmatprep.subr.bf16.mxu0 0
    %2387 = vmatpush1.bf16.xpose.msra.mxu0 0
    %2388 = vmatprep.subr.bf16.mxu0 0
    %2389 = vmatpush1.bf16.xpose.msra.mxu0 0
    %2390 = vmatprep.subr.bf16.mxu0 0
    %2391 = vmatpush1.bf16.xpose.msra.mxu0 0
    %2392 = vmatprep.subr.bf16.mxu0 0
    %2393 = vmatpush1.bf16.xpose.msra.mxu0 0
    %2394 = vmatprep.subr.bf16.mxu0 0
    %2395 = vmatpush1.bf16.xpose.msra.mxu0 0
    %2396 = vmatprep.subr.bf16.mxu0 0
    %2397 = vmatpush1.bf16.xpose.msra.mxu0 0
    %2398 = vmatprep.subr.bf16.mxu0 0
    %2399 = vmatpush1.bf16.xpose.msra.mxu0 0
    %2400 = vmatprep.subr.bf16.mxu0 0
    %2401 = vmatpush1.bf16.xpose.msra.mxu0 0
    %2402 = vmatprep.subr.bf16.mxu0 0
    %2403 = vmatpush1.bf16.xpose.msra.mxu0 0
    %2404 = vmatprep.subr.bf16.mxu0 0
    %2405 = vmatpush1.bf16.xpose.msra.mxu0 0
    %2406 = vmatprep.subr.bf16.mxu0 0
    %2407 = vmatpush1.bf16.xpose.msra.mxu0 0
    %2408 = vmatprep.mubr.bf16.mxu0 0
    %2409 = vmatmul.mubr.bf16.gmra.mrb[0].mxu0 %v2374
    %v2410 = vpop.f32.mrb[0].mxu0
    %v2411 = vadd.f32 0.0, %v2410
    %v2412 = vpop.f32.mrb[0].mxu0
    %v2413 = vpop.f32.mrb[0].mxu0
    %v2414 = vadd.f32 0.0, %v2413
    %v2415 = vpop.f32.mrb[0].mxu0
    %2416 = vdwg.mxu0
    %v2418 = vsel %vm516, %v2337, 0
    %2420 = vmatprep.subr.bf16.mxu0 0
    %2421 = vmatpush1.bf16.xpose.msra.mxu0 %v2418
    %2422 = vmatprep.subr.bf16.mxu0 0
    %2423 = vmatpush1.bf16.xpose.msra.mxu0 0
    %2424 = vmatprep.subr.bf16.mxu0 0
    %2425 = vmatpush1.bf16.xpose.msra.mxu0 0
    %2426 = vmatprep.subr.bf16.mxu0 0
    %2427 = vmatpush1.bf16.xpose.msra.mxu0 0
    %2428 = vmatprep.subr.bf16.mxu0 0
    %2429 = vmatpush1.bf16.xpose.msra.mxu0 0
    %2430 = vmatprep.subr.bf16.mxu0 0
    %2431 = vmatpush1.bf16.xpose.msra.mxu0 0
    %2432 = vmatprep.subr.bf16.mxu0 0
    %2433 = vmatpush1.bf16.xpose.msra.mxu0 0
    %2434 = vmatprep.subr.bf16.mxu0 0
    %2435 = vmatpush1.bf16.xpose.msra.mxu0 0
    %2436 = vmatprep.subr.bf16.mxu0 0
    %2437 = vmatpush1.bf16.xpose.msra.mxu0 0
    %2438 = vmatprep.subr.bf16.mxu0 0
    %2439 = vmatpush1.bf16.xpose.msra.mxu0 0
    %2440 = vmatprep.subr.bf16.mxu0 0
    %2441 = vmatpush1.bf16.xpose.msra.mxu0 0
    %2442 = vmatprep.subr.bf16.mxu0 0
    %2443 = vmatpush1.bf16.xpose.msra.mxu0 0
    %2444 = vmatprep.subr.bf16.mxu0 0
    %2445 = vmatpush1.bf16.xpose.msra.mxu0 0
    %2446 = vmatprep.subr.bf16.mxu0 0
    %2447 = vmatpush1.bf16.xpose.msra.mxu0 0
    %2448 = vmatprep.subr.bf16.mxu0 0
    %2449 = vmatpush1.bf16.xpose.msra.mxu0 0
    %2450 = vmatprep.subr.bf16.mxu0 0
    %2451 = vmatpush1.bf16.xpose.msra.mxu0 0
    %2452 = vmatprep.mubr.bf16.mxu0 0
    %2453 = vmatmul.mubr.bf16.gmra.mrb[0].mxu0 %v2418
    %v2454 = vpop.f32.mrb[0].mxu0
    %v2455 = vadd.f32 0.0, %v2454
    %v2456 = vpop.f32.mrb[0].mxu0
    %v2457 = vpop.f32.mrb[0].mxu0
    %v2458 = vadd.f32 0.0, %v2457
    %v2459 = vpop.f32.mrb[0].mxu0
    %2460 = vdwg.mxu0
    %v2462 = vsel %vm516, %v2342, 0
    %2464 = vmatprep.subr.bf16.mxu0 0
    %2465 = vmatpush1.bf16.xpose.msra.mxu0 %v2462
    %2466 = vmatprep.subr.bf16.mxu0 0
    %2467 = vmatpush1.bf16.xpose.msra.mxu0 0
    %2468 = vmatprep.subr.bf16.mxu0 0
    %2469 = vmatpush1.bf16.xpose.msra.mxu0 0
    %2470 = vmatprep.subr.bf16.mxu0 0
    %2471 = vmatpush1.bf16.xpose.msra.mxu0 0
    %2472 = vmatprep.subr.bf16.mxu0 0
    %2473 = vmatpush1.bf16.xpose.msra.mxu0 0
    %2474 = vmatprep.subr.bf16.mxu0 0
    %2475 = vmatpush1.bf16.xpose.msra.mxu0 0
    %2476 = vmatprep.subr.bf16.mxu0 0
    %2477 = vmatpush1.bf16.xpose.msra.mxu0 0
    %2478 = vmatprep.subr.bf16.mxu0 0
    %2479 = vmatpush1.bf16.xpose.msra.mxu0 0
    %2480 = vmatprep.subr.bf16.mxu0 0
    %2481 = vmatpush1.bf16.xpose.msra.mxu0 0
    %2482 = vmatprep.subr.bf16.mxu0 0
    %2483 = vmatpush1.bf16.xpose.msra.mxu0 0
    %2484 = vmatprep.subr.bf16.mxu0 0
    %2485 = vmatpush1.bf16.xpose.msra.mxu0 0
    %2486 = vmatprep.subr.bf16.mxu0 0
    %2487 = vmatpush1.bf16.xpose.msra.mxu0 0
    %2488 = vmatprep.subr.bf16.mxu0 0
    %2489 = vmatpush1.bf16.xpose.msra.mxu0 0
    %2490 = vmatprep.subr.bf16.mxu0 0
    %2491 = vmatpush1.bf16.xpose.msra.mxu0 0
    %2492 = vmatprep.subr.bf16.mxu0 0
    %2493 = vmatpush1.bf16.xpose.msra.mxu0 0
    %2494 = vmatprep.subr.bf16.mxu0 0
    %2495 = vmatpush1.bf16.xpose.msra.mxu0 0
    %2496 = vmatprep.mubr.bf16.mxu0 0
    %2497 = vmatmul.mubr.bf16.gmra.mrb[0].mxu0 %v2462
    %v2498 = vpop.f32.mrb[0].mxu0
    %v2499 = vadd.f32 0.0, %v2498
    %v2500 = vpop.f32.mrb[0].mxu0
    %v2501 = vpop.f32.mrb[0].mxu0
    %v2502 = vadd.f32 0.0, %v2501
    %v2503 = vpop.f32.mrb[0].mxu0
    %2504 = vdwg.mxu0
    %v2506 = vsel %vm516, %v2344, 0
    %2508 = vmatprep.subr.bf16.mxu0 0
    %2509 = vmatpush1.bf16.xpose.msra.mxu0 %v2506
    %2510 = vmatprep.subr.bf16.mxu0 0
    %2511 = vmatpush1.bf16.xpose.msra.mxu0 0
    %2512 = vmatprep.subr.bf16.mxu0 0
    %2513 = vmatpush1.bf16.xpose.msra.mxu0 0
    %2514 = vmatprep.subr.bf16.mxu0 0
    %2515 = vmatpush1.bf16.xpose.msra.mxu0 0
    %2516 = vmatprep.subr.bf16.mxu0 0
    %2517 = vmatpush1.bf16.xpose.msra.mxu0 0
    %2518 = vmatprep.subr.bf16.mxu0 0
    %2519 = vmatpush1.bf16.xpose.msra.mxu0 0
    %2520 = vmatprep.subr.bf16.mxu0 0
    %2521 = vmatpush1.bf16.xpose.msra.mxu0 0
    %2522 = vmatprep.subr.bf16.mxu0 0
    %2523 = vmatpush1.bf16.xpose.msra.mxu0 0
    %2524 = vmatprep.subr.bf16.mxu0 0
    %2525 = vmatpush1.bf16.xpose.msra.mxu0 0
    %2526 = vmatprep.subr.bf16.mxu0 0
    %2527 = vmatpush1.bf16.xpose.msra.mxu0 0
    %2528 = vmatprep.subr.bf16.mxu0 0
    %2529 = vmatpush1.bf16.xpose.msra.mxu0 0
    %2530 = vmatprep.subr.bf16.mxu0 0
    %2531 = vmatpush1.bf16.xpose.msra.mxu0 0
    %2532 = vmatprep.subr.bf16.mxu0 0
    %2533 = vmatpush1.bf16.xpose.msra.mxu0 0
    %2534 = vmatprep.subr.bf16.mxu0 0
    %2535 = vmatpush1.bf16.xpose.msra.mxu0 0
    %2536 = vmatprep.subr.bf16.mxu0 0
    %2537 = vmatpush1.bf16.xpose.msra.mxu0 0
    %2538 = vmatprep.subr.bf16.mxu0 0
    %2539 = vmatpush1.bf16.xpose.msra.mxu0 0
    %2540 = vmatprep.mubr.bf16.mxu0 0
    %2541 = vmatmul.mubr.bf16.gmra.mrb[0].mxu0 %v2506
    %v2542 = vpop.f32.mrb[0].mxu0
    %v2543 = vadd.f32 0.0, %v2542
    %v2544 = vpop.f32.mrb[0].mxu0
    %v2545 = vpop.f32.mrb[0].mxu0
    %v2546 = vadd.f32 0.0, %v2545
    %v2547 = vpop.f32.mrb[0].mxu0
    %2548 = vdwg.mxu0
    %v2550 = vsel %vm516, %v2346, 0
    %2552 = vmatprep.subr.bf16.mxu0 0
    %2553 = vmatpush1.bf16.xpose.msra.mxu0 %v2550
    %2554 = vmatprep.subr.bf16.mxu0 0
    %2555 = vmatpush1.bf16.xpose.msra.mxu0 0
    %2556 = vmatprep.subr.bf16.mxu0 0
    %2557 = vmatpush1.bf16.xpose.msra.mxu0 0
    %2558 = vmatprep.subr.bf16.mxu0 0
    %2559 = vmatpush1.bf16.xpose.msra.mxu0 0
    %2560 = vmatprep.subr.bf16.mxu0 0
    %2561 = vmatpush1.bf16.xpose.msra.mxu0 0
    %2562 = vmatprep.subr.bf16.mxu0 0
    %2563 = vmatpush1.bf16.xpose.msra.mxu0 0
    %2564 = vmatprep.subr.bf16.mxu0 0
    %2565 = vmatpush1.bf16.xpose.msra.mxu0 0
    %2566 = vmatprep.subr.bf16.mxu0 0
    %2567 = vmatpush1.bf16.xpose.msra.mxu0 0
    %2568 = vmatprep.subr.bf16.mxu0 0
    %2569 = vmatpush1.bf16.xpose.msra.mxu0 0
    %2570 = vmatprep.subr.bf16.mxu0 0
    %2571 = vmatpush1.bf16.xpose.msra.mxu0 0
    %2572 = vmatprep.subr.bf16.mxu0 0
    %2573 = vmatpush1.bf16.xpose.msra.mxu0 0
    %2574 = vmatprep.subr.bf16.mxu0 0
    %2575 = vmatpush1.bf16.xpose.msra.mxu0 0
    %2576 = vmatprep.subr.bf16.mxu0 0
    %2577 = vmatpush1.bf16.xpose.msra.mxu0 0
    %2578 = vmatprep.subr.bf16.mxu0 0
    %2579 = vmatpush1.bf16.xpose.msra.mxu0 0
    %2580 = vmatprep.subr.bf16.mxu0 0
    %2581 = vmatpush1.bf16.xpose.msra.mxu0 0
    %2582 = vmatprep.subr.bf16.mxu0 0
    %2583 = vmatpush1.bf16.xpose.msra.mxu0 0
    %2584 = vmatprep.mubr.bf16.mxu0 0
    %2585 = vmatmul.mubr.bf16.gmra.mrb[0].mxu0 %v2550
    %v2586 = vpop.f32.mrb[0].mxu0
    %v2587 = vadd.f32 0.0, %v2586
    %v2588 = vpop.f32.mrb[0].mxu0
    %v2589 = vpop.f32.mrb[0].mxu0
    %v2590 = vadd.f32 0.0, %v2589
    %v2591 = vpop.f32.mrb[0].mxu0
    %2592 = vdwg.mxu0
    %v2594 = vsel %vm516, %v2348, 0
    %2596 = vmatprep.subr.bf16.mxu0 0
    %2597 = vmatpush1.bf16.xpose.msra.mxu0 %v2594
    %2598 = vmatprep.subr.bf16.mxu0 0
    %2599 = vmatpush1.bf16.xpose.msra.mxu0 0
    %2600 = vmatprep.subr.bf16.mxu0 0
    %2601 = vmatpush1.bf16.xpose.msra.mxu0 0
    %2602 = vmatprep.subr.bf16.mxu0 0
    %2603 = vmatpush1.bf16.xpose.msra.mxu0 0
    %2604 = vmatprep.subr.bf16.mxu0 0
    %2605 = vmatpush1.bf16.xpose.msra.mxu0 0
    %2606 = vmatprep.subr.bf16.mxu0 0
    %2607 = vmatpush1.bf16.xpose.msra.mxu0 0
    %2608 = vmatprep.subr.bf16.mxu0 0
    %2609 = vmatpush1.bf16.xpose.msra.mxu0 0
    %2610 = vmatprep.subr.bf16.mxu0 0
    %2611 = vmatpush1.bf16.xpose.msra.mxu0 0
    %2612 = vmatprep.subr.bf16.mxu0 0
    %2613 = vmatpush1.bf16.xpose.msra.mxu0 0
    %2614 = vmatprep.subr.bf16.mxu0 0
    %2615 = vmatpush1.bf16.xpose.msra.mxu0 0
    %2616 = vmatprep.subr.bf16.mxu0 0
    %2617 = vmatpush1.bf16.xpose.msra.mxu0 0
    %2618 = vmatprep.subr.bf16.mxu0 0
    %2619 = vmatpush1.bf16.xpose.msra.mxu0 0
    %2620 = vmatprep.subr.bf16.mxu0 0
    %2621 = vmatpush1.bf16.xpose.msra.mxu0 0
    %2622 = vmatprep.subr.bf16.mxu0 0
    %2623 = vmatpush1.bf16.xpose.msra.mxu0 0
    %2624 = vmatprep.subr.bf16.mxu0 0
    %2625 = vmatpush1.bf16.xpose.msra.mxu0 0
    %2626 = vmatprep.subr.bf16.mxu0 0
    %2627 = vmatpush1.bf16.xpose.msra.mxu0 0
    %2628 = vmatprep.mubr.bf16.mxu0 0
    %2629 = vmatmul.mubr.bf16.gmra.mrb[0].mxu0 %v2594
    %v2630 = vpop.f32.mrb[0].mxu0
    %v2631 = vadd.f32 0.0, %v2630
    %v2632 = vpop.f32.mrb[0].mxu0
    %v2633 = vpop.f32.mrb[0].mxu0
    %v2634 = vadd.f32 0.0, %v2633
    %v2635 = vpop.f32.mrb[0].mxu0
    %2636 = vdwg.mxu0
    %v2638 = vsel %vm516, %v2350, 0
    %2640 = vmatprep.subr.bf16.mxu0 0
    %2641 = vmatpush1.bf16.xpose.msra.mxu0 %v2638
    %2642 = vmatprep.subr.bf16.mxu0 0
    %2643 = vmatpush1.bf16.xpose.msra.mxu0 0
    %2644 = vmatprep.subr.bf16.mxu0 0
    %2645 = vmatpush1.bf16.xpose.msra.mxu0 0
    %2646 = vmatprep.subr.bf16.mxu0 0
    %2647 = vmatpush1.bf16.xpose.msra.mxu0 0
    %2648 = vmatprep.subr.bf16.mxu0 0
    %2649 = vmatpush1.bf16.xpose.msra.mxu0 0
    %2650 = vmatprep.subr.bf16.mxu0 0
    %2651 = vmatpush1.bf16.xpose.msra.mxu0 0
    %2652 = vmatprep.subr.bf16.mxu0 0
    %2653 = vmatpush1.bf16.xpose.msra.mxu0 0
    %2654 = vmatprep.subr.bf16.mxu0 0
    %2655 = vmatpush1.bf16.xpose.msra.mxu0 0
    %2656 = vmatprep.subr.bf16.mxu0 0
    %2657 = vmatpush1.bf16.xpose.msra.mxu0 0
    %2658 = vmatprep.subr.bf16.mxu0 0
    %2659 = vmatpush1.bf16.xpose.msra.mxu0 0
    %2660 = vmatprep.subr.bf16.mxu0 0
    %2661 = vmatpush1.bf16.xpose.msra.mxu0 0
    %2662 = vmatprep.subr.bf16.mxu0 0
    %2663 = vmatpush1.bf16.xpose.msra.mxu0 0
    %2664 = vmatprep.subr.bf16.mxu0 0
    %2665 = vmatpush1.bf16.xpose.msra.mxu0 0
    %2666 = vmatprep.subr.bf16.mxu0 0
    %2667 = vmatpush1.bf16.xpose.msra.mxu0 0
    %2668 = vmatprep.subr.bf16.mxu0 0
    %2669 = vmatpush1.bf16.xpose.msra.mxu0 0
    %2670 = vmatprep.subr.bf16.mxu0 0
    %2671 = vmatpush1.bf16.xpose.msra.mxu0 0
    %2672 = vmatprep.mubr.bf16.mxu0 0
    %2673 = vmatmul.mubr.bf16.gmra.mrb[0].mxu0 %v2638
    %v2674 = vpop.f32.mrb[0].mxu0
    %v2675 = vadd.f32 0.0, %v2674
    %v2676 = vpop.f32.mrb[0].mxu0
    %v2677 = vpop.f32.mrb[0].mxu0
    %v2678 = vadd.f32 0.0, %v2677
    %v2679 = vpop.f32.mrb[0].mxu0
    %2680 = vdwg.mxu0
    %v2682 = vsel %vm516, %v2352, 0
    %2684 = vmatprep.subr.bf16.mxu0 0
    %2685 = vmatpush1.bf16.xpose.msra.mxu0 %v2682
    %2686 = vmatprep.subr.bf16.mxu0 0
    %2687 = vmatpush1.bf16.xpose.msra.mxu0 0
    %2688 = vmatprep.subr.bf16.mxu0 0
    %2689 = vmatpush1.bf16.xpose.msra.mxu0 0
    %2690 = vmatprep.subr.bf16.mxu0 0
    %2691 = vmatpush1.bf16.xpose.msra.mxu0 0
    %2692 = vmatprep.subr.bf16.mxu0 0
    %2693 = vmatpush1.bf16.xpose.msra.mxu0 0
    %2694 = vmatprep.subr.bf16.mxu0 0
    %2695 = vmatpush1.bf16.xpose.msra.mxu0 0
    %2696 = vmatprep.subr.bf16.mxu0 0
    %2697 = vmatpush1.bf16.xpose.msra.mxu0 0
    %2698 = vmatprep.subr.bf16.mxu0 0
    %2699 = vmatpush1.bf16.xpose.msra.mxu0 0
    %2700 = vmatprep.subr.bf16.mxu0 0
    %2701 = vmatpush1.bf16.xpose.msra.mxu0 0
    %2702 = vmatprep.subr.bf16.mxu0 0
    %2703 = vmatpush1.bf16.xpose.msra.mxu0 0
    %2704 = vmatprep.subr.bf16.mxu0 0
    %2705 = vmatpush1.bf16.xpose.msra.mxu0 0
    %2706 = vmatprep.subr.bf16.mxu0 0
    %2707 = vmatpush1.bf16.xpose.msra.mxu0 0
    %2708 = vmatprep.subr.bf16.mxu0 0
    %2709 = vmatpush1.bf16.xpose.msra.mxu0 0
    %2710 = vmatprep.subr.bf16.mxu0 0
    %2711 = vmatpush1.bf16.xpose.msra.mxu0 0
    %2712 = vmatprep.subr.bf16.mxu0 0
    %2713 = vmatpush1.bf16.xpose.msra.mxu0 0
    %2714 = vmatprep.subr.bf16.mxu0 0
    %2715 = vmatpush1.bf16.xpose.msra.mxu0 0
    %2716 = vmatprep.mubr.bf16.mxu0 0
    %2717 = vmatmul.mubr.bf16.gmra.mrb[0].mxu0 %v2682
    %v2718 = vpop.f32.mrb[0].mxu0
    %v2719 = vadd.f32 0.0, %v2718
    %v2720 = vpop.f32.mrb[0].mxu0
    %v2721 = vpop.f32.mrb[0].mxu0
    %v2722 = vadd.f32 0.0, %v2721
    %v2723 = vpop.f32.mrb[0].mxu0
    %2724 = vdwg.mxu0
    %v2725 = vmul.f32 %v2411, 0.17677669
    %v2726 = vmul.f32 %v2414, 0.17677669
    %v2727 = vmul.f32 %v2455, 0.17677669
    %v2728 = vmul.f32 %v2458, 0.17677669
    %v2729 = vmul.f32 %v2499, 0.17677669
    %v2730 = vmul.f32 %v2502, 0.17677669
    %v2731 = vmul.f32 %v2543, 0.17677669
    %v2732 = vmul.f32 %v2546, 0.17677669
    %v2733 = vmul.f32 %v2587, 0.17677669
    %v2734 = vmul.f32 %v2590, 0.17677669
    %v2735 = vmul.f32 %v2631, 0.17677669
    %v2736 = vmul.f32 %v2634, 0.17677669
    %v2737 = vmul.f32 %v2675, 0.17677669
    %v2738 = vmul.f32 %v2678, 0.17677669
    %v2739 = vmul.f32 %v2719, 0.17677669
    %v2740 = vmul.f32 %v2722, 0.17677669
    %v2741 = vsel %vm885, %v2725, -inf
    %2742 = vmax.xlane.f32.xlu0 %v2741
    %v2743 = vpop.xlane.xlu0 %2742
    %v2744 = vsel %vm885, %v2726, -inf
    %2745 = vmax.xlane.f32.xlu0 %v2744
    %v2746 = vpop.xlane.xlu0 %2745
    %v2747 = vsel %vm885, %v2727, -inf
    %2748 = vmax.xlane.f32.xlu0 %v2747
    %v2749 = vpop.xlane.xlu0 %2748
    %v2750 = vsel %vm885, %v2728, -inf
    %2751 = vmax.xlane.f32.xlu0 %v2750
    %v2752 = vpop.xlane.xlu0 %2751
    %v2753 = vsel %vm885, %v2729, -inf
    %2754 = vmax.xlane.f32.xlu0 %v2753
    %v2755 = vpop.xlane.xlu0 %2754
    %v2756 = vsel %vm885, %v2730, -inf
    %2757 = vmax.xlane.f32.xlu0 %v2756
    %v2758 = vpop.xlane.xlu0 %2757
    %v2759 = vsel %vm885, %v2731, -inf
    %2760 = vmax.xlane.f32.xlu0 %v2759
    %v2761 = vpop.xlane.xlu0 %2760
    %v2762 = vsel %vm885, %v2732, -inf
    %2763 = vmax.xlane.f32.xlu0 %v2762
    %v2764 = vpop.xlane.xlu0 %2763
    %v2765 = vsel %vm885, %v2733, -inf
    %2766 = vmax.xlane.f32.xlu0 %v2765
    %v2767 = vpop.xlane.xlu0 %2766
    %v2768 = vsel %vm885, %v2734, -inf
    %2769 = vmax.xlane.f32.xlu0 %v2768
    %v2770 = vpop.xlane.xlu0 %2769
    %v2771 = vsel %vm885, %v2735, -inf
    %2772 = vmax.xlane.f32.xlu0 %v2771
    %v2773 = vpop.xlane.xlu0 %2772
    %v2774 = vsel %vm885, %v2736, -inf
    %2775 = vmax.xlane.f32.xlu0 %v2774
    %v2776 = vpop.xlane.xlu0 %2775
    %v2777 = vsel %vm885, %v2737, -inf
    %2778 = vmax.xlane.f32.xlu0 %v2777
    %v2779 = vpop.xlane.xlu0 %2778
    %v2780 = vsel %vm885, %v2738, -inf
    %2781 = vmax.xlane.f32.xlu0 %v2780
    %v2782 = vpop.xlane.xlu0 %2781
    %v2783 = vsel %vm885, %v2739, -inf
    %2784 = vmax.xlane.f32.xlu0 %v2783
    %v2785 = vpop.xlane.xlu0 %2784
    %v2786 = vsel %vm885, %v2740, -inf
    %2787 = vmax.xlane.f32.xlu0 %v2786
    %v2788 = vpop.xlane.xlu0 %2787
    %v2789 = vsub.f32 %v2725, %v2743
    %v2790 = vsub.f32 %v2726, %v2746
    %v2791 = vsub.f32 %v2727, %v2749
    %v2792 = vsub.f32 %v2728, %v2752
    %v2793 = vsub.f32 %v2729, %v2755
    %v2794 = vsub.f32 %v2730, %v2758
    %v2795 = vsub.f32 %v2731, %v2761
    %v2796 = vsub.f32 %v2732, %v2764
    %v2797 = vsub.f32 %v2733, %v2767
    %v2798 = vsub.f32 %v2734, %v2770
    %v2799 = vsub.f32 %v2735, %v2773
    %v2800 = vsub.f32 %v2736, %v2776
    %v2801 = vsub.f32 %v2737, %v2779
    %v2802 = vsub.f32 %v2738, %v2782
    %v2803 = vsub.f32 %v2739, %v2785
    %v2804 = vsub.f32 %v2740, %v2788
    %v2805 = vmul.f32 %v2789, 1.442695
    %v2806 = vpow.pop %v2805
    %v2807 = vmul.f32 %v2790, 1.442695
    %v2808 = vpow.pop %v2807
    %v2809 = vmul.f32 %v2791, 1.442695
    %v2810 = vpow.pop %v2809
    %v2811 = vmul.f32 %v2792, 1.442695
    %v2812 = vpow.pop %v2811
    %v2813 = vmul.f32 %v2793, 1.442695
    %v2814 = vpow.pop %v2813
    %v2815 = vmul.f32 %v2794, 1.442695
    %v2816 = vpow.pop %v2815
    %v2817 = vmul.f32 %v2795, 1.442695
    %v2818 = vpow.pop %v2817
    %v2819 = vmul.f32 %v2796, 1.442695
    %v2820 = vpow.pop %v2819
    %v2821 = vmul.f32 %v2797, 1.442695
    %v2822 = vpow.pop %v2821
    %v2823 = vmul.f32 %v2798, 1.442695
    %v2824 = vpow.pop %v2823
    %v2825 = vmul.f32 %v2799, 1.442695
    %v2826 = vpow.pop %v2825
    %v2827 = vmul.f32 %v2800, 1.442695
    %v2828 = vpow.pop %v2827
    %v2829 = vmul.f32 %v2801, 1.442695
    %v2830 = vpow.pop %v2829
    %v2831 = vmul.f32 %v2802, 1.442695
    %v2832 = vpow.pop %v2831
    %v2833 = vmul.f32 %v2803, 1.442695
    %v2834 = vpow.pop %v2833
    %v2835 = vmul.f32 %v2804, 1.442695
    %v2836 = vpow.pop %v2835
    %v2837 = vsel %vm885, %v2806, 0.0
    %2838 = vadd.xlane.f32.xlu0 %v2837
    %v2839 = vpop.xlane.xlu0 %2838
    %v2840 = vsel %vm885, %v2808, 0.0
    %2841 = vadd.xlane.f32.xlu0 %v2840
    %v2842 = vpop.xlane.xlu0 %2841
    %v2843 = vsel %vm885, %v2810, 0.0
    %2844 = vadd.xlane.f32.xlu0 %v2843
    %v2845 = vpop.xlane.xlu0 %2844
    %v2846 = vsel %vm885, %v2812, 0.0
    %2847 = vadd.xlane.f32.xlu0 %v2846
    %v2848 = vpop.xlane.xlu0 %2847
    %v2849 = vsel %vm885, %v2814, 0.0
    %2850 = vadd.xlane.f32.xlu0 %v2849
    %v2851 = vpop.xlane.xlu0 %2850
    %v2852 = vsel %vm885, %v2816, 0.0
    %2853 = vadd.xlane.f32.xlu0 %v2852
    %v2854 = vpop.xlane.xlu0 %2853
    %v2855 = vsel %vm885, %v2818, 0.0
    %2856 = vadd.xlane.f32.xlu0 %v2855
    %v2857 = vpop.xlane.xlu0 %2856
    %v2858 = vsel %vm885, %v2820, 0.0
    %2859 = vadd.xlane.f32.xlu0 %v2858
    %v2860 = vpop.xlane.xlu0 %2859
    %v2861 = vsel %vm885, %v2822, 0.0
    %2862 = vadd.xlane.f32.xlu0 %v2861
    %v2863 = vpop.xlane.xlu0 %2862
    %v2864 = vsel %vm885, %v2824, 0.0
    %2865 = vadd.xlane.f32.xlu0 %v2864
    %v2866 = vpop.xlane.xlu0 %2865
    %v2867 = vsel %vm885, %v2826, 0.0
    %2868 = vadd.xlane.f32.xlu0 %v2867
    %v2869 = vpop.xlane.xlu0 %2868
    %v2870 = vsel %vm885, %v2828, 0.0
    %2871 = vadd.xlane.f32.xlu0 %v2870
    %v2872 = vpop.xlane.xlu0 %2871
    %v2873 = vsel %vm885, %v2830, 0.0
    %2874 = vadd.xlane.f32.xlu0 %v2873
    %v2875 = vpop.xlane.xlu0 %2874
    %v2876 = vsel %vm885, %v2832, 0.0
    %2877 = vadd.xlane.f32.xlu0 %v2876
    %v2878 = vpop.xlane.xlu0 %2877
    %v2879 = vsel %vm885, %v2834, 0.0
    %2880 = vadd.xlane.f32.xlu0 %v2879
    %v2881 = vpop.xlane.xlu0 %2880
    %v2882 = vsel %vm885, %v2836, 0.0
    %2883 = vadd.xlane.f32.xlu0 %v2882
    %v2884 = vpop.xlane.xlu0 %2883
    %v2885 = vrcp.pop %v2839
    %v2886 = vrcp.pop %v2842
    %v2887 = vrcp.pop %v2845
    %v2888 = vrcp.pop %v2848
    %v2889 = vrcp.pop %v2851
    %v2890 = vrcp.pop %v2854
    %v2891 = vrcp.pop %v2857
    %v2892 = vrcp.pop %v2860
    %v2893 = vrcp.pop %v2863
    %v2894 = vrcp.pop %v2866
    %v2895 = vrcp.pop %v2869
    %v2896 = vrcp.pop %v2872
    %v2897 = vrcp.pop %v2875
    %v2898 = vrcp.pop %v2878
    %v2899 = vrcp.pop %v2881
    %v2900 = vrcp.pop %v2884
    %v2901 = vmul.f32 %v2806, %v2885
    %v2902 = vmul.f32 %v2808, %v2886
    %v2903 = vmul.f32 %v2810, %v2887
    %v2904 = vmul.f32 %v2812, %v2888
    %v2905 = vmul.f32 %v2814, %v2889
    %v2906 = vmul.f32 %v2816, %v2890
    %v2907 = vmul.f32 %v2818, %v2891
    %v2908 = vmul.f32 %v2820, %v2892
    %v2909 = vmul.f32 %v2822, %v2893
    %v2910 = vmul.f32 %v2824, %v2894
    %v2911 = vmul.f32 %v2826, %v2895
    %v2912 = vmul.f32 %v2828, %v2896
    %v2913 = vmul.f32 %v2830, %v2897
    %v2914 = vmul.f32 %v2832, %v2898
    %v2915 = vmul.f32 %v2834, %v2899
    %v2916 = vmul.f32 %v2836, %v2900
    %v2917 = vpack.c.bf16 %v2902, %v2901
    %v2918 = vpack.c.bf16 %v2904, %v2903
    %v2919 = vpack.c.bf16 %v2906, %v2905
    %v2920 = vpack.c.bf16 %v2908, %v2907
    %v2921 = vpack.c.bf16 %v2910, %v2909
    %v2922 = vpack.c.bf16 %v2912, %v2911
    %v2923 = vpack.c.bf16 %v2914, %v2913
    %v2924 = vpack.c.bf16 %v2916, %v2915
    %v2926 = vsel %vm885, %v2917, 0
    %2928 = vmatprep.subr.bf16.mxu0 0
    %2929 = vmatpush1.bf16.msra.mxu0 %v2336
    %2930 = vmatprep.subr.bf16.mxu0 0
    %2931 = vmatpush1.bf16.msra.mxu0 0
    %2932 = vmatprep.subr.bf16.mxu0 0
    %2933 = vmatpush1.bf16.msra.mxu0 0
    %2934 = vmatprep.subr.bf16.mxu0 0
    %2935 = vmatpush1.bf16.msra.mxu0 0
    %2936 = vmatprep.subr.bf16.mxu0 0
    %2937 = vmatpush1.bf16.msra.mxu0 0
    %2938 = vmatprep.subr.bf16.mxu0 0
    %2939 = vmatpush1.bf16.msra.mxu0 0
    %2940 = vmatprep.subr.bf16.mxu0 0
    %2941 = vmatpush1.bf16.msra.mxu0 0
    %2942 = vmatprep.subr.bf16.mxu0 0
    %2943 = vmatpush1.bf16.msra.mxu0 0
    %2944 = vmatprep.subr.bf16.mxu0 0
    %2945 = vmatpush1.bf16.msra.mxu0 0
    %2946 = vmatprep.subr.bf16.mxu0 0
    %2947 = vmatpush1.bf16.msra.mxu0 0
    %2948 = vmatprep.subr.bf16.mxu0 0
    %2949 = vmatpush1.bf16.msra.mxu0 0
    %2950 = vmatprep.subr.bf16.mxu0 0
    %2951 = vmatpush1.bf16.msra.mxu0 0
    %2952 = vmatprep.subr.bf16.mxu0 0
    %2953 = vmatpush1.bf16.msra.mxu0 0
    %2954 = vmatprep.subr.bf16.mxu0 0
    %2955 = vmatpush1.bf16.msra.mxu0 0
    %2956 = vmatprep.subr.bf16.mxu0 0
    %2957 = vmatpush1.bf16.msra.mxu0 0
    %2958 = vmatprep.subr.bf16.mxu0 0
    %2959 = vmatpush1.bf16.msra.mxu0 0
    %2960 = vmatprep.mubr.bf16.mxu0 0
    %2961 = vmatmul.mubr.bf16.gmra.mrb[0].mxu0 %v2926
    %v2962 = vpop.f32.mrb[0].mxu0
    %v2963 = vadd.f32 0.0, %v2962
    %v2964 = vpop.f32.mrb[0].mxu0
    %v2965 = vpop.f32.mrb[0].mxu0
    %v2966 = vadd.f32 0.0, %v2965
    %v2967 = vpop.f32.mrb[0].mxu0
    %2968 = vdwg.mxu0
    %v2970 = vsel %vm885, %v2918, 0
    %2972 = vmatprep.subr.bf16.mxu0 0
    %2973 = vmatpush1.bf16.msra.mxu0 %v2338
    %2974 = vmatprep.subr.bf16.mxu0 0
    %2975 = vmatpush1.bf16.msra.mxu0 0
    %2976 = vmatprep.subr.bf16.mxu0 0
    %2977 = vmatpush1.bf16.msra.mxu0 0
    %2978 = vmatprep.subr.bf16.mxu0 0
    %2979 = vmatpush1.bf16.msra.mxu0 0
    %2980 = vmatprep.subr.bf16.mxu0 0
    %2981 = vmatpush1.bf16.msra.mxu0 0
    %2982 = vmatprep.subr.bf16.mxu0 0
    %2983 = vmatpush1.bf16.msra.mxu0 0
    %2984 = vmatprep.subr.bf16.mxu0 0
    %2985 = vmatpush1.bf16.msra.mxu0 0
    %2986 = vmatprep.subr.bf16.mxu0 0
    %2987 = vmatpush1.bf16.msra.mxu0 0
    %2988 = vmatprep.subr.bf16.mxu0 0
    %2989 = vmatpush1.bf16.msra.mxu0 0
    %2990 = vmatprep.subr.bf16.mxu0 0
    %2991 = vmatpush1.bf16.msra.mxu0 0
    %2992 = vmatprep.subr.bf16.mxu0 0
    %2993 = vmatpush1.bf16.msra.mxu0 0
    %2994 = vmatprep.subr.bf16.mxu0 0
    %2995 = vmatpush1.bf16.msra.mxu0 0
    %2996 = vmatprep.subr.bf16.mxu0 0
    %2997 = vmatpush1.bf16.msra.mxu0 0
    %2998 = vmatprep.subr.bf16.mxu0 0
    %2999 = vmatpush1.bf16.msra.mxu0 0
    %3000 = vmatprep.subr.bf16.mxu0 0
    %3001 = vmatpush1.bf16.msra.mxu0 0
    %3002 = vmatprep.subr.bf16.mxu0 0
    %3003 = vmatpush1.bf16.msra.mxu0 0
    %3004 = vmatprep.mubr.bf16.mxu0 0
    %3005 = vmatmul.mubr.bf16.gmra.mrb[0].mxu0 %v2970
    %v3006 = vpop.f32.mrb[0].mxu0
    %v3007 = vadd.f32 0.0, %v3006
    %v3008 = vpop.f32.mrb[0].mxu0
    %v3009 = vpop.f32.mrb[0].mxu0
    %v3010 = vadd.f32 0.0, %v3009
    %v3011 = vpop.f32.mrb[0].mxu0
    %3012 = vdwg.mxu0
    %v3014 = vsel %vm885, %v2919, 0
    %3016 = vmatprep.subr.bf16.mxu0 0
    %3017 = vmatpush1.bf16.msra.mxu0 %v2356
    %3018 = vmatprep.subr.bf16.mxu0 0
    %3019 = vmatpush1.bf16.msra.mxu0 0
    %3020 = vmatprep.subr.bf16.mxu0 0
    %3021 = vmatpush1.bf16.msra.mxu0 0
    %3022 = vmatprep.subr.bf16.mxu0 0
    %3023 = vmatpush1.bf16.msra.mxu0 0
    %3024 = vmatprep.subr.bf16.mxu0 0
    %3025 = vmatpush1.bf16.msra.mxu0 0
    %3026 = vmatprep.subr.bf16.mxu0 0
    %3027 = vmatpush1.bf16.msra.mxu0 0
    %3028 = vmatprep.subr.bf16.mxu0 0
    %3029 = vmatpush1.bf16.msra.mxu0 0
    %3030 = vmatprep.subr.bf16.mxu0 0
    %3031 = vmatpush1.bf16.msra.mxu0 0
    %3032 = vmatprep.subr.bf16.mxu0 0
    %3033 = vmatpush1.bf16.msra.mxu0 0
    %3034 = vmatprep.subr.bf16.mxu0 0
    %3035 = vmatpush1.bf16.msra.mxu0 0
    %3036 = vmatprep.subr.bf16.mxu0 0
    %3037 = vmatpush1.bf16.msra.mxu0 0
    %3038 = vmatprep.subr.bf16.mxu0 0
    %3039 = vmatpush1.bf16.msra.mxu0 0
    %3040 = vmatprep.subr.bf16.mxu0 0
    %3041 = vmatpush1.bf16.msra.mxu0 0
    %3042 = vmatprep.subr.bf16.mxu0 0
    %3043 = vmatpush1.bf16.msra.mxu0 0
    %3044 = vmatprep.subr.bf16.mxu0 0
    %3045 = vmatpush1.bf16.msra.mxu0 0
    %3046 = vmatprep.subr.bf16.mxu0 0
    %3047 = vmatpush1.bf16.msra.mxu0 0
    %3048 = vmatprep.mubr.bf16.mxu0 0
    %3049 = vmatmul.mubr.bf16.gmra.mrb[0].mxu0 %v3014
    %v3050 = vpop.f32.mrb[0].mxu0
    %v3051 = vadd.f32 0.0, %v3050
    %v3052 = vpop.f32.mrb[0].mxu0
    %v3053 = vpop.f32.mrb[0].mxu0
    %v3054 = vadd.f32 0.0, %v3053
    %v3055 = vpop.f32.mrb[0].mxu0
    %3056 = vdwg.mxu0
    %v3058 = vsel %vm885, %v2920, 0
    %3060 = vmatprep.subr.bf16.mxu0 0
    %3061 = vmatpush1.bf16.msra.mxu0 %v2358
    %3062 = vmatprep.subr.bf16.mxu0 0
    %3063 = vmatpush1.bf16.msra.mxu0 0
    %3064 = vmatprep.subr.bf16.mxu0 0
    %3065 = vmatpush1.bf16.msra.mxu0 0
    %3066 = vmatprep.subr.bf16.mxu0 0
    %3067 = vmatpush1.bf16.msra.mxu0 0
    %3068 = vmatprep.subr.bf16.mxu0 0
    %3069 = vmatpush1.bf16.msra.mxu0 0
    %3070 = vmatprep.subr.bf16.mxu0 0
    %3071 = vmatpush1.bf16.msra.mxu0 0
    %3072 = vmatprep.subr.bf16.mxu0 0
    %3073 = vmatpush1.bf16.msra.mxu0 0
    %3074 = vmatprep.subr.bf16.mxu0 0
    %3075 = vmatpush1.bf16.msra.mxu0 0
    %3076 = vmatprep.subr.bf16.mxu0 0
    %3077 = vmatpush1.bf16.msra.mxu0 0
    %3078 = vmatprep.subr.bf16.mxu0 0
    %3079 = vmatpush1.bf16.msra.mxu0 0
    %3080 = vmatprep.subr.bf16.mxu0 0
    %3081 = vmatpush1.bf16.msra.mxu0 0
    %3082 = vmatprep.subr.bf16.mxu0 0
    %3083 = vmatpush1.bf16.msra.mxu0 0
    %3084 = vmatprep.subr.bf16.mxu0 0
    %3085 = vmatpush1.bf16.msra.mxu0 0
    %3086 = vmatprep.subr.bf16.mxu0 0
    %3087 = vmatpush1.bf16.msra.mxu0 0
    %3088 = vmatprep.subr.bf16.mxu0 0
    %3089 = vmatpush1.bf16.msra.mxu0 0
    %3090 = vmatprep.subr.bf16.mxu0 0
    %3091 = vmatpush1.bf16.msra.mxu0 0
    %3092 = vmatprep.mubr.bf16.mxu0 0
    %3093 = vmatmul.mubr.bf16.gmra.mrb[0].mxu0 %v3058
    %v3094 = vpop.f32.mrb[0].mxu0
    %v3095 = vadd.f32 0.0, %v3094
    %v3096 = vpop.f32.mrb[0].mxu0
    %v3097 = vpop.f32.mrb[0].mxu0
    %v3098 = vadd.f32 0.0, %v3097
    %v3099 = vpop.f32.mrb[0].mxu0
    %3100 = vdwg.mxu0
    %v3102 = vsel %vm885, %v2921, 0
    %3104 = vmatprep.subr.bf16.mxu0 0
    %3105 = vmatpush1.bf16.msra.mxu0 %v2362
    %3106 = vmatprep.subr.bf16.mxu0 0
    %3107 = vmatpush1.bf16.msra.mxu0 0
    %3108 = vmatprep.subr.bf16.mxu0 0
    %3109 = vmatpush1.bf16.msra.mxu0 0
    %3110 = vmatprep.subr.bf16.mxu0 0
    %3111 = vmatpush1.bf16.msra.mxu0 0
    %3112 = vmatprep.subr.bf16.mxu0 0
    %3113 = vmatpush1.bf16.msra.mxu0 0
    %3114 = vmatprep.subr.bf16.mxu0 0
    %3115 = vmatpush1.bf16.msra.mxu0 0
    %3116 = vmatprep.subr.bf16.mxu0 0
    %3117 = vmatpush1.bf16.msra.mxu0 0
    %3118 = vmatprep.subr.bf16.mxu0 0
    %3119 = vmatpush1.bf16.msra.mxu0 0
    %3120 = vmatprep.subr.bf16.mxu0 0
    %3121 = vmatpush1.bf16.msra.mxu0 0
    %3122 = vmatprep.subr.bf16.mxu0 0
    %3123 = vmatpush1.bf16.msra.mxu0 0
    %3124 = vmatprep.subr.bf16.mxu0 0
    %3125 = vmatpush1.bf16.msra.mxu0 0
    %3126 = vmatprep.subr.bf16.mxu0 0
    %3127 = vmatpush1.bf16.msra.mxu0 0
    %3128 = vmatprep.subr.bf16.mxu0 0
    %3129 = vmatpush1.bf16.msra.mxu0 0
    %3130 = vmatprep.subr.bf16.mxu0 0
    %3131 = vmatpush1.bf16.msra.mxu0 0
    %3132 = vmatprep.subr.bf16.mxu0 0
    %3133 = vmatpush1.bf16.msra.mxu0 0
    %3134 = vmatprep.subr.bf16.mxu0 0
    %3135 = vmatpush1.bf16.msra.mxu0 0
    %3136 = vmatprep.mubr.bf16.mxu0 0
    %3137 = vmatmul.mubr.bf16.gmra.mrb[0].mxu0 %v3102
    %v3138 = vpop.f32.mrb[0].mxu0
    %v3139 = vadd.f32 0.0, %v3138
    %v3140 = vpop.f32.mrb[0].mxu0
    %v3141 = vpop.f32.mrb[0].mxu0
    %v3142 = vadd.f32 0.0, %v3141
    %v3143 = vpop.f32.mrb[0].mxu0
    %3144 = vdwg.mxu0
    %v3146 = vsel %vm885, %v2922, 0
    %3148 = vmatprep.subr.bf16.mxu0 0
    %3149 = vmatpush1.bf16.msra.mxu0 %v2364
    %3150 = vmatprep.subr.bf16.mxu0 0
    %3151 = vmatpush1.bf16.msra.mxu0 0
    %3152 = vmatprep.subr.bf16.mxu0 0
    %3153 = vmatpush1.bf16.msra.mxu0 0
    %3154 = vmatprep.subr.bf16.mxu0 0
    %3155 = vmatpush1.bf16.msra.mxu0 0
    %3156 = vmatprep.subr.bf16.mxu0 0
    %3157 = vmatpush1.bf16.msra.mxu0 0
    %3158 = vmatprep.subr.bf16.mxu0 0
    %3159 = vmatpush1.bf16.msra.mxu0 0
    %3160 = vmatprep.subr.bf16.mxu0 0
    %3161 = vmatpush1.bf16.msra.mxu0 0
    %3162 = vmatprep.subr.bf16.mxu0 0
    %3163 = vmatpush1.bf16.msra.mxu0 0
    %3164 = vmatprep.subr.bf16.mxu0 0
    %3165 = vmatpush1.bf16.msra.mxu0 0
    %3166 = vmatprep.subr.bf16.mxu0 0
    %3167 = vmatpush1.bf16.msra.mxu0 0
    %3168 = vmatprep.subr.bf16.mxu0 0
    %3169 = vmatpush1.bf16.msra.mxu0 0
    %3170 = vmatprep.subr.bf16.mxu0 0
    %3171 = vmatpush1.bf16.msra.mxu0 0
    %3172 = vmatprep.subr.bf16.mxu0 0
    %3173 = vmatpush1.bf16.msra.mxu0 0
    %3174 = vmatprep.subr.bf16.mxu0 0
    %3175 = vmatpush1.bf16.msra.mxu0 0
    %3176 = vmatprep.subr.bf16.mxu0 0
    %3177 = vmatpush1.bf16.msra.mxu0 0
    %3178 = vmatprep.subr.bf16.mxu0 0
    %3179 = vmatpush1.bf16.msra.mxu0 0
    %3180 = vmatprep.mubr.bf16.mxu0 0
    %3181 = vmatmul.mubr.bf16.gmra.mrb[0].mxu0 %v3146
    %v3182 = vpop.f32.mrb[0].mxu0
    %v3183 = vadd.f32 0.0, %v3182
    %v3184 = vpop.f32.mrb[0].mxu0
    %v3185 = vpop.f32.mrb[0].mxu0
    %v3186 = vadd.f32 0.0, %v3185
    %v3187 = vpop.f32.mrb[0].mxu0
    %3188 = vdwg.mxu0
    %v3190 = vsel %vm885, %v2923, 0
    %3192 = vmatprep.subr.bf16.mxu0 0
    %3193 = vmatpush1.bf16.msra.mxu0 %v2368
    %3194 = vmatprep.subr.bf16.mxu0 0
    %3195 = vmatpush1.bf16.msra.mxu0 0
    %3196 = vmatprep.subr.bf16.mxu0 0
    %3197 = vmatpush1.bf16.msra.mxu0 0
    %3198 = vmatprep.subr.bf16.mxu0 0
    %3199 = vmatpush1.bf16.msra.mxu0 0
    %3200 = vmatprep.subr.bf16.mxu0 0
    %3201 = vmatpush1.bf16.msra.mxu0 0
    %3202 = vmatprep.subr.bf16.mxu0 0
    %3203 = vmatpush1.bf16.msra.mxu0 0
    %3204 = vmatprep.subr.bf16.mxu0 0
    %3205 = vmatpush1.bf16.msra.mxu0 0
    %3206 = vmatprep.subr.bf16.mxu0 0
    %3207 = vmatpush1.bf16.msra.mxu0 0
    %3208 = vmatprep.subr.bf16.mxu0 0
    %3209 = vmatpush1.bf16.msra.mxu0 0
    %3210 = vmatprep.subr.bf16.mxu0 0
    %3211 = vmatpush1.bf16.msra.mxu0 0
    %3212 = vmatprep.subr.bf16.mxu0 0
    %3213 = vmatpush1.bf16.msra.mxu0 0
    %3214 = vmatprep.subr.bf16.mxu0 0
    %3215 = vmatpush1.bf16.msra.mxu0 0
    %3216 = vmatprep.subr.bf16.mxu0 0
    %3217 = vmatpush1.bf16.msra.mxu0 0
    %3218 = vmatprep.subr.bf16.mxu0 0
    %3219 = vmatpush1.bf16.msra.mxu0 0
    %3220 = vmatprep.subr.bf16.mxu0 0
    %3221 = vmatpush1.bf16.msra.mxu0 0
    %3222 = vmatprep.subr.bf16.mxu0 0
    %3223 = vmatpush1.bf16.msra.mxu0 0
    %3224 = vmatprep.mubr.bf16.mxu0 0
    %3225 = vmatmul.mubr.bf16.gmra.mrb[0].mxu0 %v3190
    %v3226 = vpop.f32.mrb[0].mxu0
    %v3227 = vadd.f32 0.0, %v3226
    %v3228 = vpop.f32.mrb[0].mxu0
    %v3229 = vpop.f32.mrb[0].mxu0
    %v3230 = vadd.f32 0.0, %v3229
    %v3231 = vpop.f32.mrb[0].mxu0
    %3232 = vdwg.mxu0
    %v3234 = vsel %vm885, %v2924, 0
    %3236 = vmatprep.subr.bf16.mxu0 0
    %3237 = vmatpush1.bf16.msra.mxu0 %v2370
    %3238 = vmatprep.subr.bf16.mxu0 0
    %3239 = vmatpush1.bf16.msra.mxu0 0
    %3240 = vmatprep.subr.bf16.mxu0 0
    %3241 = vmatpush1.bf16.msra.mxu0 0
    %3242 = vmatprep.subr.bf16.mxu0 0
    %3243 = vmatpush1.bf16.msra.mxu0 0
    %3244 = vmatprep.subr.bf16.mxu0 0
    %3245 = vmatpush1.bf16.msra.mxu0 0
    %3246 = vmatprep.subr.bf16.mxu0 0
    %3247 = vmatpush1.bf16.msra.mxu0 0
    %3248 = vmatprep.subr.bf16.mxu0 0
    %3249 = vmatpush1.bf16.msra.mxu0 0
    %3250 = vmatprep.subr.bf16.mxu0 0
    %3251 = vmatpush1.bf16.msra.mxu0 0
    %3252 = vmatprep.subr.bf16.mxu0 0
    %3253 = vmatpush1.bf16.msra.mxu0 0
    %3254 = vmatprep.subr.bf16.mxu0 0
    %3255 = vmatpush1.bf16.msra.mxu0 0
    %3256 = vmatprep.subr.bf16.mxu0 0
    %3257 = vmatpush1.bf16.msra.mxu0 0
    %3258 = vmatprep.subr.bf16.mxu0 0
    %3259 = vmatpush1.bf16.msra.mxu0 0
    %3260 = vmatprep.subr.bf16.mxu0 0
    %3261 = vmatpush1.bf16.msra.mxu0 0
    %3262 = vmatprep.subr.bf16.mxu0 0
    %3263 = vmatpush1.bf16.msra.mxu0 0
    %3264 = vmatprep.subr.bf16.mxu0 0
    %3265 = vmatpush1.bf16.msra.mxu0 0
    %3266 = vmatprep.subr.bf16.mxu0 0
    %3267 = vmatpush1.bf16.msra.mxu0 0
    %3268 = vmatprep.mubr.bf16.mxu0 0
    %3269 = vmatmul.mubr.bf16.gmra.mrb[0].mxu0 %v3234
    %v3270 = vpop.f32.mrb[0].mxu0
    %v3271 = vadd.f32 0.0, %v3270
    %v3272 = vpop.f32.mrb[0].mxu0
    %v3273 = vpop.f32.mrb[0].mxu0
    %v3274 = vadd.f32 0.0, %v3273
    %v3275 = vpop.f32.mrb[0].mxu0
    %3276 = vdwg.mxu0
    %3281 = vrot.lane.b32.xlu0 %v3051, 32
    %v3282 = vpop.permute.xlu0 %3281
    %3283 = vrot.lane.b32.xlu0 %v3054, 32
    %v3284 = vpop.permute.xlu0 %3283
    %3285 = vrot.lane.b32.xlu0 %v3095, 32
    %v3286 = vpop.permute.xlu0 %3285
    %3287 = vrot.lane.b32.xlu0 %v3098, 32
    %v3288 = vpop.permute.xlu0 %3287
    %3297 = vrot.lane.b32.xlu0 %v3139, 64
    %v3298 = vpop.permute.xlu0 %3297
    %3299 = vrot.lane.b32.xlu0 %v3142, 64
    %v3300 = vpop.permute.xlu0 %3299
    %3301 = vrot.lane.b32.xlu0 %v3183, 64
    %v3302 = vpop.permute.xlu0 %3301
    %3303 = vrot.lane.b32.xlu0 %v3186, 64
    %v3304 = vpop.permute.xlu0 %3303
    %3313 = vrot.lane.b32.xlu0 %v3227, 96
    %v3314 = vpop.permute.xlu0 %3313
    %3315 = vrot.lane.b32.xlu0 %v3230, 96
    %v3316 = vpop.permute.xlu0 %3315
    %3317 = vrot.lane.b32.xlu0 %v3271, 96
    %v3318 = vpop.permute.xlu0 %3317
    %3319 = vrot.lane.b32.xlu0 %v3274, 96
    %v3320 = vpop.permute.xlu0 %3319
    %v3325 = vsel %vm516, %v2963, %v3282
    %v3326 = vsel %vm516, %v2966, %v3284
    %v3327 = vsel %vm516, %v3007, %v3286
    %v3328 = vsel %vm516, %v3010, %v3288
    %v3329 = vsel %vm186, %v3325, %v3298
    %v3330 = vsel %vm186, %v3326, %v3300
    %v3331 = vsel %vm186, %v3327, %v3302
    %v3332 = vsel %vm186, %v3328, %v3304
    %v3333 = vsel %vm1478, %v3329, %v3314
    %v3334 = vsel %vm1478, %v3330, %v3316
    %v3335 = vsel %vm1478, %v3331, %v3318
    %v3336 = vsel %vm1478, %v3332, %v3320
    %v3337 = vpack.c.bf16 %v3334, %v3333
    %v3338 = vpack.c.bf16 %v3336, %v3335
    %s3339 = scalar_lea.vmem %s8, 64
    %v3340 = vld [vmem:[%s3339] sm:$0xf]
    %v3341 = vld [vmem:[%s3339 + $0x4] sm:$0xf]
    %v3342 = vld [vmem:[%s3339 + $0x8] sm:$0xf]
    %v3343 = vld [vmem:[%s3339 + $0xc] sm:$0xf]
    %v3344 = vld [vmem:[%s3339 + $0x10] sm:$0xf]
    %v3345 = vld [vmem:[%s3339 + $0x14] sm:$0xf]
    %v3346 = vld [vmem:[%s3339 + $0x18] sm:$0xf]
    %v3347 = vld [vmem:[%s3339 + $0x1c] sm:$0xf]
    %v3348 = vld [vmem:[%s3339 + $0x20] sm:$0xf]
    %v3349 = vld [vmem:[%s3339 + $0x24] sm:$0xf]
    %v3350 = vld [vmem:[%s3339 + $0x28] sm:$0xf]
    %v3351 = vld [vmem:[%s3339 + $0x2c] sm:$0xf]
    %v3352 = vld [vmem:[%s3339 + $0x30] sm:$0xf]
    %v3353 = vld [vmem:[%s3339 + $0x34] sm:$0xf]
    %v3354 = vld [vmem:[%s3339 + $0x38] sm:$0xf]
    %v3355 = vld [vmem:[%s3339 + $0x3c] sm:$0xf]
    %s3356 = scalar_lea.vmem %s9, 1
    %v3357 = vld [vmem:[%s3356] sm:$0x1]
    %v3359 = vlaneseq
    %v3360 = vshrl.u32 %v3359, 7
    %v3361 = vsub.s32 0, %v3360
    %v3362 = vrot.slane %v3357, %v3361
    %v3380 = vunpack.c.l.b16 %v3340
    %v3381 = vunpack.c.l.b16 %v3341
    %v3382 = vunpack.c.l.b16 %v3342
    %v3383 = vunpack.c.l.b16 %v3343
    %v3384 = vunpack.c.l.b16 %v3344
    %v3385 = vunpack.c.l.b16 %v3345
    %v3386 = vunpack.c.l.b16 %v3346
    %v3387 = vunpack.c.l.b16 %v3347
    %v3388 = vunpack.c.l.b16 %v3348
    %v3389 = vunpack.c.l.b16 %v3349
    %v3390 = vunpack.c.l.b16 %v3350
    %v3391 = vunpack.c.l.b16 %v3351
    %v3392 = vunpack.c.l.b16 %v3352
    %v3393 = vunpack.c.l.b16 %v3353
    %v3394 = vunpack.c.l.b16 %v3354
    %v3395 = vunpack.c.l.b16 %v3355
    %v3396 = vpack.c.b16 %v3381, %v3380
    %v3397 = vpack.c.b16 %v3383, %v3382
    %v3398 = vpack.c.b16 %v3385, %v3384
    %v3399 = vpack.c.b16 %v3387, %v3386
    %v3400 = vpack.c.b16 %v3389, %v3388
    %v3401 = vpack.c.b16 %v3391, %v3390
    %v3402 = vpack.c.b16 %v3393, %v3392
    %v3403 = vpack.c.b16 %v3395, %v3394
    %3412 = vmatprep.subr.bf16.mxu0 0
    %3413 = vmatpush1.bf16.msra.mxu0 %v3396
    %3414 = vmatprep.subr.bf16.mxu0 0
    %3415 = vmatpush1.bf16.msra.mxu0 %v3397
    %3416 = vmatprep.subr.bf16.mxu0 0
    %3417 = vmatpush1.bf16.msra.mxu0 %v3398
    %3418 = vmatprep.subr.bf16.mxu0 0
    %3419 = vmatpush1.bf16.msra.mxu0 %v3399
    %3420 = vmatprep.subr.bf16.mxu0 0
    %3421 = vmatpush1.bf16.msra.mxu0 %v3400
    %3422 = vmatprep.subr.bf16.mxu0 0
    %3423 = vmatpush1.bf16.msra.mxu0 %v3401
    %3424 = vmatprep.subr.bf16.mxu0 0
    %3425 = vmatpush1.bf16.msra.mxu0 %v3402
    %3426 = vmatprep.subr.bf16.mxu0 0
    %3427 = vmatpush1.bf16.msra.mxu0 %v3403
    %3428 = vmatprep.subr.bf16.mxu0 0
    %3429 = vmatpush1.bf16.msra.mxu0 0
    %3430 = vmatprep.subr.bf16.mxu0 0
    %3431 = vmatpush1.bf16.msra.mxu0 0
    %3432 = vmatprep.subr.bf16.mxu0 0
    %3433 = vmatpush1.bf16.msra.mxu0 0
    %3434 = vmatprep.subr.bf16.mxu0 0
    %3435 = vmatpush1.bf16.msra.mxu0 0
    %3436 = vmatprep.subr.bf16.mxu0 0
    %3437 = vmatpush1.bf16.msra.mxu0 0
    %3438 = vmatprep.subr.bf16.mxu0 0
    %3439 = vmatpush1.bf16.msra.mxu0 0
    %3440 = vmatprep.subr.bf16.mxu0 0
    %3441 = vmatpush1.bf16.msra.mxu0 0
    %3442 = vmatprep.subr.bf16.mxu0 0
    %3443 = vmatpush1.bf16.msra.mxu0 0
    %3444 = vmatprep.mubr.bf16.mxu0 0
    %3445 = vmatmul.mubr.bf16.gmra.mrb[0].mxu0 %v3337
    %v3446 = vpop.f32.mrb[0].mxu0
    %v3447 = vadd.f32 %v3362, %v3446
    %v3448 = vpop.f32.mrb[0].mxu0
    %v3449 = vpop.f32.mrb[0].mxu0
    %v3450 = vadd.f32 %v3362, %v3449
    %v3451 = vpop.f32.mrb[0].mxu0
    %3452 = vmatprep.mubr.bf16.mxu0 0
    %3453 = vmatmul.mubr.bf16.gmra.mrb[0].mxu0 %v3338
    %v3454 = vpop.f32.mrb[0].mxu0
    %v3455 = vadd.f32 %v3362, %v3454
    %v3456 = vpop.f32.mrb[0].mxu0
    %v3457 = vpop.f32.mrb[0].mxu0
    %v3458 = vadd.f32 %v3362, %v3457
    %v3459 = vpop.f32.mrb[0].mxu0
    %3460 = vdwg.mxu0
    %v3461 = vadd.f32 %v2098, %v3447
    %v3462 = vadd.f32 %v2099, %v3450
    %v3463 = vadd.f32 %v2100, %v3455
    %v3464 = vadd.f32 %v2101, %v3458
    %s3465 = scalar_lea.vmem %s10, 1
    %v3466 = vld [vmem:[%s3465] sm:$0x1]
    %s3467 = scalar_lea.vmem %s11, 1
    %v3468 = vld [vmem:[%s3467] sm:$0x1]
    %3469 = vadd.xlane.f32.xlu0 %v3461
    %v3470 = vpop.xlane.xlu0 %3469
    %3471 = vadd.xlane.f32.xlu0 %v3462
    %v3472 = vpop.xlane.xlu0 %3471
    %3473 = vadd.xlane.f32.xlu0 %v3463
    %v3474 = vpop.xlane.xlu0 %3473
    %3475 = vadd.xlane.f32.xlu0 %v3464
    %v3476 = vpop.xlane.xlu0 %3475
    %v3477 = vmul.f32 %v3470, %v258
    %v3478 = vmul.f32 %v3472, %v258
    %v3479 = vmul.f32 %v3474, %v258
    %v3480 = vmul.f32 %v3476, %v258
    %v3481 = vsub.f32 %v3461, %v3477
    %v3482 = vsub.f32 %v3462, %v3478
    %v3483 = vsub.f32 %v3463, %v3479
    %v3484 = vsub.f32 %v3464, %v3480
    %v3485 = vmul.f32 %v3481, %v3481
    %v3486 = vmul.f32 %v3482, %v3482
    %v3487 = vmul.f32 %v3483, %v3483
    %v3488 = vmul.f32 %v3484, %v3484
    %3489 = vadd.xlane.f32.xlu0 %v3485
    %v3490 = vpop.xlane.xlu0 %3489
    %3491 = vadd.xlane.f32.xlu0 %v3486
    %v3492 = vpop.xlane.xlu0 %3491
    %3493 = vadd.xlane.f32.xlu0 %v3487
    %v3494 = vpop.xlane.xlu0 %3493
    %3495 = vadd.xlane.f32.xlu0 %v3488
    %v3496 = vpop.xlane.xlu0 %3495
    %v3497 = vmul.f32 %v3490, %v258
    %v3498 = vmul.f32 %v3492, %v258
    %v3499 = vmul.f32 %v3494, %v258
    %v3500 = vmul.f32 %v3496, %v258
    %v3501 = vadd.f32 %v3497, 1e-06
    %v3502 = vadd.f32 %v3498, 1e-06
    %v3503 = vadd.f32 %v3499, 1e-06
    %v3504 = vadd.f32 %v3500, 1e-06
    %v3505 = vrsqrt.pop %v3501
    %v3506 = vrsqrt.pop %v3502
    %v3507 = vrsqrt.pop %v3503
    %v3508 = vrsqrt.pop %v3504
    %v3509 = vmul.f32 %v3481, %v3505
    %v3510 = vmul.f32 %v3482, %v3506
    %v3511 = vmul.f32 %v3483, %v3507
    %v3512 = vmul.f32 %v3484, %v3508
    %v3514 = vlaneseq
    %v3515 = vshrl.u32 %v3514, 7
    %v3516 = vsub.s32 0, %v3515
    %v3517 = vrot.slane %v3466, %v3516
    %v3519 = vmul.f32 %v3509, %v3517
    %v3520 = vmul.f32 %v3510, %v3517
    %v3521 = vmul.f32 %v3511, %v3517
    %v3522 = vmul.f32 %v3512, %v3517
    %v3524 = vlaneseq
    %v3525 = vshrl.u32 %v3524, 7
    %v3526 = vsub.s32 0, %v3525
    %v3527 = vrot.slane %v3468, %v3526
    %v3529 = vadd.f32 %v3519, %v3527
    %v3530 = vadd.f32 %v3520, %v3527
    %v3531 = vadd.f32 %v3521, %v3527
    %v3532 = vadd.f32 %v3522, %v3527
    %v3533 = vpack.c.bf16 %v3530, %v3529
    %v3534 = vpack.c.bf16 %v3532, %v3531
    %s3535 = scalar_lea.vmem %s12, 128
    %v3536 = vld [vmem:[%s3535] sm:$0xff]
    %v3537 = vld [vmem:[%s3535 + $0x8] sm:$0xff]
    %v3538 = vld [vmem:[%s3535 + $0x10] sm:$0xff]
    %v3539 = vld [vmem:[%s3535 + $0x18] sm:$0xff]
    %v3540 = vld [vmem:[%s3535 + $0x20] sm:$0xff]
    %v3541 = vld [vmem:[%s3535 + $0x28] sm:$0xff]
    %v3542 = vld [vmem:[%s3535 + $0x30] sm:$0xff]
    %v3543 = vld [vmem:[%s3535 + $0x38] sm:$0xff]
    %v3544 = vld [vmem:[%s3535 + $0x40] sm:$0xff]
    %v3545 = vld [vmem:[%s3535 + $0x48] sm:$0xff]
    %v3546 = vld [vmem:[%s3535 + $0x50] sm:$0xff]
    %v3547 = vld [vmem:[%s3535 + $0x58] sm:$0xff]
    %v3548 = vld [vmem:[%s3535 + $0x60] sm:$0xff]
    %v3549 = vld [vmem:[%s3535 + $0x68] sm:$0xff]
    %v3550 = vld [vmem:[%s3535 + $0x70] sm:$0xff]
    %v3551 = vld [vmem:[%s3535 + $0x78] sm:$0xff]
    %s3552 = scalar_lea.vmem %s13, 2
    %v3553 = vld [vmem:[%s3552] sm:$0x3]
    %v3555 = vlaneseq
    %v3556 = vshrl.u32 %v3555, 7
    %v3557 = vsub.s32 0, %v3556
    %v3558 = vrot.slane %v3553, %v3557
    %v3559 = vlaneseq
    %v3560 = vshrl.u32 %v3559, 7
    %v3561 = vsub.s32 1, %v3560
    %v3562 = vrot.slane %v3553, %v3561
    %v3581 = vunpack.c.l.b16 %v3536
    %v3582 = vunpack.c.h.b16 %v3536
    %v3583 = vunpack.c.l.b16 %v3537
    %v3584 = vunpack.c.h.b16 %v3537
    %v3585 = vunpack.c.l.b16 %v3538
    %v3586 = vunpack.c.h.b16 %v3538
    %v3587 = vunpack.c.l.b16 %v3539
    %v3588 = vunpack.c.h.b16 %v3539
    %v3589 = vunpack.c.l.b16 %v3540
    %v3590 = vunpack.c.h.b16 %v3540
    %v3591 = vunpack.c.l.b16 %v3541
    %v3592 = vunpack.c.h.b16 %v3541
    %v3593 = vunpack.c.l.b16 %v3542
    %v3594 = vunpack.c.h.b16 %v3542
    %v3595 = vunpack.c.l.b16 %v3543
    %v3596 = vunpack.c.h.b16 %v3543
    %v3597 = vunpack.c.l.b16 %v3544
    %v3598 = vunpack.c.h.b16 %v3544
    %v3599 = vunpack.c.l.b16 %v3545
    %v3600 = vunpack.c.h.b16 %v3545
    %v3601 = vunpack.c.l.b16 %v3546
    %v3602 = vunpack.c.h.b16 %v3546
    %v3603 = vunpack.c.l.b16 %v3547
    %v3604 = vunpack.c.h.b16 %v3547
    %v3605 = vunpack.c.l.b16 %v3548
    %v3606 = vunpack.c.h.b16 %v3548
    %v3607 = vunpack.c.l.b16 %v3549
    %v3608 = vunpack.c.h.b16 %v3549
    %v3609 = vunpack.c.l.b16 %v3550
    %v3610 = vunpack.c.h.b16 %v3550
    %v3611 = vunpack.c.l.b16 %v3551
    %v3612 = vunpack.c.h.b16 %v3551
    %v3613 = vpack.c.b16 %v3583, %v3581
    %v3614 = vpack.c.b16 %v3584, %v3582
    %v3615 = vpack.c.b16 %v3587, %v3585
    %v3616 = vpack.c.b16 %v3588, %v3586
    %v3617 = vpack.c.b16 %v3591, %v3589
    %v3618 = vpack.c.b16 %v3592, %v3590
    %v3619 = vpack.c.b16 %v3595, %v3593
    %v3620 = vpack.c.b16 %v3596, %v3594
    %v3621 = vpack.c.b16 %v3599, %v3597
    %v3622 = vpack.c.b16 %v3600, %v3598
    %v3623 = vpack.c.b16 %v3603, %v3601
    %v3624 = vpack.c.b16 %v3604, %v3602
    %v3625 = vpack.c.b16 %v3607, %v3605
    %v3626 = vpack.c.b16 %v3608, %v3606
    %v3627 = vpack.c.b16 %v3611, %v3609
    %v3628 = vpack.c.b16 %v3612, %v3610
    %3645 = vmatprep.subr.bf16.mxu0 %v3614
    %3646 = vmatpush1.bf16.msra.mxu0 %v3613
    %3647 = vmatprep.subr.bf16.mxu0 %v3616
    %3648 = vmatpush1.bf16.msra.mxu0 %v3615
    %3649 = vmatprep.subr.bf16.mxu0 %v3618
    %3650 = vmatpush1.bf16.msra.mxu0 %v3617
    %3651 = vmatprep.subr.bf16.mxu0 %v3620
    %3652 = vmatpush1.bf16.msra.mxu0 %v3619
    %3653 = vmatprep.subr.bf16.mxu0 %v3622
    %3654 = vmatpush1.bf16.msra.mxu0 %v3621
    %3655 = vmatprep.subr.bf16.mxu0 %v3624
    %3656 = vmatpush1.bf16.msra.mxu0 %v3623
    %3657 = vmatprep.subr.bf16.mxu0 %v3626
    %3658 = vmatpush1.bf16.msra.mxu0 %v3625
    %3659 = vmatprep.subr.bf16.mxu0 %v3628
    %3660 = vmatpush1.bf16.msra.mxu0 %v3627
    %3661 = vmatprep.subr.bf16.mxu0 0
    %3662 = vmatpush1.bf16.msra.mxu0 0
    %3663 = vmatprep.subr.bf16.mxu0 0
    %3664 = vmatpush1.bf16.msra.mxu0 0
    %3665 = vmatprep.subr.bf16.mxu0 0
    %3666 = vmatpush1.bf16.msra.mxu0 0
    %3667 = vmatprep.subr.bf16.mxu0 0
    %3668 = vmatpush1.bf16.msra.mxu0 0
    %3669 = vmatprep.subr.bf16.mxu0 0
    %3670 = vmatpush1.bf16.msra.mxu0 0
    %3671 = vmatprep.subr.bf16.mxu0 0
    %3672 = vmatpush1.bf16.msra.mxu0 0
    %3673 = vmatprep.subr.bf16.mxu0 0
    %3674 = vmatpush1.bf16.msra.mxu0 0
    %3675 = vmatprep.subr.bf16.mxu0 0
    %3676 = vmatpush1.bf16.msra.mxu0 0
    %3677 = vmatprep.mubr.bf16.mxu0 0
    %3678 = vmatmul.mubr.bf16.gmra.mrb[0].mxu0 %v3533
    %v3679 = vpop.f32.mrb[0].mxu0
    %v3680 = vadd.f32 %v3558, %v3679
    %v3681 = vpop.f32.mrb[0].mxu0
    %v3682 = vadd.f32 %v3562, %v3681
    %v3683 = vpop.f32.mrb[0].mxu0
    %v3684 = vadd.f32 %v3558, %v3683
    %v3685 = vpop.f32.mrb[0].mxu0
    %v3686 = vadd.f32 %v3562, %v3685
    %3687 = vmatprep.mubr.bf16.mxu0 0
    %3688 = vmatmul.mubr.bf16.gmra.mrb[0].mxu0 %v3534
    %v3689 = vpop.f32.mrb[0].mxu0
    %v3690 = vadd.f32 %v3558, %v3689
    %v3691 = vpop.f32.mrb[0].mxu0
    %v3692 = vadd.f32 %v3562, %v3691
    %v3693 = vpop.f32.mrb[0].mxu0
    %v3694 = vadd.f32 %v3558, %v3693
    %v3695 = vpop.f32.mrb[0].mxu0
    %v3696 = vadd.f32 %v3562, %v3695
    %3697 = vdwg.mxu0
    %v3698 = vmul.f32 %v3680, %v3680
    %v3699 = vmul.f32 %v3682, %v3682
    %v3700 = vmul.f32 %v3684, %v3684
    %v3701 = vmul.f32 %v3686, %v3686
    %v3702 = vmul.f32 %v3690, %v3690
    %v3703 = vmul.f32 %v3692, %v3692
    %v3704 = vmul.f32 %v3694, %v3694
    %v3705 = vmul.f32 %v3696, %v3696
    %v3706 = vmul.f32 %v3680, %v3698
    %v3707 = vmul.f32 %v3682, %v3699
    %v3708 = vmul.f32 %v3684, %v3700
    %v3709 = vmul.f32 %v3686, %v3701
    %v3710 = vmul.f32 %v3690, %v3702
    %v3711 = vmul.f32 %v3692, %v3703
    %v3712 = vmul.f32 %v3694, %v3704
    %v3713 = vmul.f32 %v3696, %v3705
    %v3714 = vmul.f32 %v3706, 0.044715
    %v3715 = vmul.f32 %v3707, 0.044715
    %v3716 = vmul.f32 %v3708, 0.044715
    %v3717 = vmul.f32 %v3709, 0.044715
    %v3718 = vmul.f32 %v3710, 0.044715
    %v3719 = vmul.f32 %v3711, 0.044715
    %v3720 = vmul.f32 %v3712, 0.044715
    %v3721 = vmul.f32 %v3713, 0.044715
    %v3722 = vadd.f32 %v3680, %v3714
    %v3723 = vadd.f32 %v3682, %v3715
    %v3724 = vadd.f32 %v3684, %v3716
    %v3725 = vadd.f32 %v3686, %v3717
    %v3726 = vadd.f32 %v3690, %v3718
    %v3727 = vadd.f32 %v3692, %v3719
    %v3728 = vadd.f32 %v3694, %v3720
    %v3729 = vadd.f32 %v3696, %v3721
    %v3730 = vmul.f32 %v3722, 0.7978846
    %v3731 = vmul.f32 %v3723, 0.7978846
    %v3732 = vmul.f32 %v3724, 0.7978846
    %v3733 = vmul.f32 %v3725, 0.7978846
    %v3734 = vmul.f32 %v3726, 0.7978846
    %v3735 = vmul.f32 %v3727, 0.7978846
    %v3736 = vmul.f32 %v3728, 0.7978846
    %v3737 = vmul.f32 %v3729, 0.7978846
    %v3738 = vtanh.pop %v3730
    %v3739 = vtanh.pop %v3731
    %v3740 = vtanh.pop %v3732
    %v3741 = vtanh.pop %v3733
    %v3742 = vtanh.pop %v3734
    %v3743 = vtanh.pop %v3735
    %v3744 = vtanh.pop %v3736
    %v3745 = vtanh.pop %v3737
    %v3746 = vadd.f32 %v3738, 1.0
    %v3747 = vadd.f32 %v3739, 1.0
    %v3748 = vadd.f32 %v3740, 1.0
    %v3749 = vadd.f32 %v3741, 1.0
    %v3750 = vadd.f32 %v3742, 1.0
    %v3751 = vadd.f32 %v3743, 1.0
    %v3752 = vadd.f32 %v3744, 1.0
    %v3753 = vadd.f32 %v3745, 1.0
    %v3754 = vmul.f32 %v3746, 0.5
    %v3755 = vmul.f32 %v3747, 0.5
    %v3756 = vmul.f32 %v3748, 0.5
    %v3757 = vmul.f32 %v3749, 0.5
    %v3758 = vmul.f32 %v3750, 0.5
    %v3759 = vmul.f32 %v3751, 0.5
    %v3760 = vmul.f32 %v3752, 0.5
    %v3761 = vmul.f32 %v3753, 0.5
    %v3762 = vmul.f32 %v3680, %v3754
    %v3763 = vmul.f32 %v3682, %v3755
    %v3764 = vmul.f32 %v3684, %v3756
    %v3765 = vmul.f32 %v3686, %v3757
    %v3766 = vmul.f32 %v3690, %v3758
    %v3767 = vmul.f32 %v3692, %v3759
    %v3768 = vmul.f32 %v3694, %v3760
    %v3769 = vmul.f32 %v3696, %v3761
    %v3770 = vpack.c.bf16 %v3764, %v3762
    %v3771 = vpack.c.bf16 %v3765, %v3763
    %v3772 = vpack.c.bf16 %v3768, %v3766
    %v3773 = vpack.c.bf16 %v3769, %v3767
    %s3774 = scalar_lea.vmem %s14, 128
    %v3775 = vld [vmem:[%s3774] sm:$0xf]
    %v3776 = vld [vmem:[%s3774 + $0x4] sm:$0xf]
    %v3777 = vld [vmem:[%s3774 + $0x8] sm:$0xf]
    %v3778 = vld [vmem:[%s3774 + $0xc] sm:$0xf]
    %v3779 = vld [vmem:[%s3774 + $0x10] sm:$0xf]
    %v3780 = vld [vmem:[%s3774 + $0x14] sm:$0xf]
    %v3781 = vld [vmem:[%s3774 + $0x18] sm:$0xf]
    %v3782 = vld [vmem:[%s3774 + $0x1c] sm:$0xf]
    %v3783 = vld [vmem:[%s3774 + $0x20] sm:$0xf]
    %v3784 = vld [vmem:[%s3774 + $0x24] sm:$0xf]
    %v3785 = vld [vmem:[%s3774 + $0x28] sm:$0xf]
    %v3786 = vld [vmem:[%s3774 + $0x2c] sm:$0xf]
    %v3787 = vld [vmem:[%s3774 + $0x30] sm:$0xf]
    %v3788 = vld [vmem:[%s3774 + $0x34] sm:$0xf]
    %v3789 = vld [vmem:[%s3774 + $0x38] sm:$0xf]
    %v3790 = vld [vmem:[%s3774 + $0x3c] sm:$0xf]
    %v3791 = vld [vmem:[%s3774 + $0x40] sm:$0xf]
    %v3792 = vld [vmem:[%s3774 + $0x44] sm:$0xf]
    %v3793 = vld [vmem:[%s3774 + $0x48] sm:$0xf]
    %v3794 = vld [vmem:[%s3774 + $0x4c] sm:$0xf]
    %v3795 = vld [vmem:[%s3774 + $0x50] sm:$0xf]
    %v3796 = vld [vmem:[%s3774 + $0x54] sm:$0xf]
    %v3797 = vld [vmem:[%s3774 + $0x58] sm:$0xf]
    %v3798 = vld [vmem:[%s3774 + $0x5c] sm:$0xf]
    %v3799 = vld [vmem:[%s3774 + $0x60] sm:$0xf]
    %v3800 = vld [vmem:[%s3774 + $0x64] sm:$0xf]
    %v3801 = vld [vmem:[%s3774 + $0x68] sm:$0xf]
    %v3802 = vld [vmem:[%s3774 + $0x6c] sm:$0xf]
    %v3803 = vld [vmem:[%s3774 + $0x70] sm:$0xf]
    %v3804 = vld [vmem:[%s3774 + $0x74] sm:$0xf]
    %v3805 = vld [vmem:[%s3774 + $0x78] sm:$0xf]
    %v3806 = vld [vmem:[%s3774 + $0x7c] sm:$0xf]
    %s3807 = scalar_lea.vmem %s15, 1
    %v3808 = vld [vmem:[%s3807] sm:$0x1]
    %v3810 = vlaneseq
    %v3811 = vshrl.u32 %v3810, 7
    %v3812 = vsub.s32 0, %v3811
    %v3813 = vrot.slane %v3808, %v3812
    %v3847 = vunpack.c.l.b16 %v3775
    %v3848 = vunpack.c.l.b16 %v3776
    %v3849 = vunpack.c.l.b16 %v3777
    %v3850 = vunpack.c.l.b16 %v3778
    %v3851 = vunpack.c.l.b16 %v3779
    %v3852 = vunpack.c.l.b16 %v3780
    %v3853 = vunpack.c.l.b16 %v3781
    %v3854 = vunpack.c.l.b16 %v3782
    %v3855 = vunpack.c.l.b16 %v3783
    %v3856 = vunpack.c.l.b16 %v3784
    %v3857 = vunpack.c.l.b16 %v3785
    %v3858 = vunpack.c.l.b16 %v3786
    %v3859 = vunpack.c.l.b16 %v3787
    %v3860 = vunpack.c.l.b16 %v3788
    %v3861 = vunpack.c.l.b16 %v3789
    %v3862 = vunpack.c.l.b16 %v3790
    %v3863 = vunpack.c.l.b16 %v3791
    %v3864 = vunpack.c.l.b16 %v3792
    %v3865 = vunpack.c.l.b16 %v3793
    %v3866 = vunpack.c.l.b16 %v3794
    %v3867 = vunpack.c.l.b16 %v3795
    %v3868 = vunpack.c.l.b16 %v3796
    %v3869 = vunpack.c.l.b16 %v3797
    %v3870 = vunpack.c.l.b16 %v3798
    %v3871 = vunpack.c.l.b16 %v3799
    %v3872 = vunpack.c.l.b16 %v3800
    %v3873 = vunpack.c.l.b16 %v3801
    %v3874 = vunpack.c.l.b16 %v3802
    %v3875 = vunpack.c.l.b16 %v3803
    %v3876 = vunpack.c.l.b16 %v3804
    %v3877 = vunpack.c.l.b16 %v3805
    %v3878 = vunpack.c.l.b16 %v3806
    %v3879 = vpack.c.b16 %v3848, %v3847
    %v3880 = vpack.c.b16 %v3850, %v3849
    %v3881 = vpack.c.b16 %v3852, %v3851
    %v3882 = vpack.c.b16 %v3854, %v3853
    %v3883 = vpack.c.b16 %v3856, %v3855
    %v3884 = vpack.c.b16 %v3858, %v3857
    %v3885 = vpack.c.b16 %v3860, %v3859
    %v3886 = vpack.c.b16 %v3862, %v3861
    %v3887 = vpack.c.b16 %v3864, %v3863
    %v3888 = vpack.c.b16 %v3866, %v3865
    %v3889 = vpack.c.b16 %v3868, %v3867
    %v3890 = vpack.c.b16 %v3870, %v3869
    %v3891 = vpack.c.b16 %v3872, %v3871
    %v3892 = vpack.c.b16 %v3874, %v3873
    %v3893 = vpack.c.b16 %v3876, %v3875
    %v3894 = vpack.c.b16 %v3878, %v3877
    %3911 = vmatprep.subr.bf16.mxu0 0
    %3912 = vmatpush1.bf16.msra.mxu0 %v3879
    %3913 = vmatprep.subr.bf16.mxu0 0
    %3914 = vmatpush1.bf16.msra.mxu0 %v3880
    %3915 = vmatprep.subr.bf16.mxu0 0
    %3916 = vmatpush1.bf16.msra.mxu0 %v3881
    %3917 = vmatprep.subr.bf16.mxu0 0
    %3918 = vmatpush1.bf16.msra.mxu0 %v3882
    %3919 = vmatprep.subr.bf16.mxu0 0
    %3920 = vmatpush1.bf16.msra.mxu0 %v3883
    %3921 = vmatprep.subr.bf16.mxu0 0
    %3922 = vmatpush1.bf16.msra.mxu0 %v3884
    %3923 = vmatprep.subr.bf16.mxu0 0
    %3924 = vmatpush1.bf16.msra.mxu0 %v3885
    %3925 = vmatprep.subr.bf16.mxu0 0
    %3926 = vmatpush1.bf16.msra.mxu0 %v3886
    %3927 = vmatprep.subr.bf16.mxu0 0
    %3928 = vmatpush1.bf16.msra.mxu0 %v3887
    %3929 = vmatprep.subr.bf16.mxu0 0
    %3930 = vmatpush1.bf16.msra.mxu0 %v3888
    %3931 = vmatprep.subr.bf16.mxu0 0
    %3932 = vmatpush1.bf16.msra.mxu0 %v3889
    %3933 = vmatprep.subr.bf16.mxu0 0
    %3934 = vmatpush1.bf16.msra.mxu0 %v3890
    %3935 = vmatprep.subr.bf16.mxu0 0
    %3936 = vmatpush1.bf16.msra.mxu0 %v3891
    %3937 = vmatprep.subr.bf16.mxu0 0
    %3938 = vmatpush1.bf16.msra.mxu0 %v3892
    %3939 = vmatprep.subr.bf16.mxu0 0
    %3940 = vmatpush1.bf16.msra.mxu0 %v3893
    %3941 = vmatprep.subr.bf16.mxu0 0
    %3942 = vmatpush1.bf16.msra.mxu0 %v3894
    %3943 = vmatprep.mubr.bf16.mxu0 %v3771
    %3944 = vmatmul.mubr.bf16.gmra.mrb[0].mxu0 %v3770
    %v3945 = vpop.f32.mrb[0].mxu0
    %v3946 = vadd.f32 %v3813, %v3945
    %v3947 = vpop.f32.mrb[0].mxu0
    %v3948 = vpop.f32.mrb[0].mxu0
    %v3949 = vadd.f32 %v3813, %v3948
    %v3950 = vpop.f32.mrb[0].mxu0
    %3951 = vmatprep.mubr.bf16.mxu0 %v3773
    %3952 = vmatmul.mubr.bf16.gmra.mrb[0].mxu0 %v3772
    %v3953 = vpop.f32.mrb[0].mxu0
    %v3954 = vadd.f32 %v3813, %v3953
    %v3955 = vpop.f32.mrb[0].mxu0
    %v3956 = vpop.f32.mrb[0].mxu0
    %v3957 = vadd.f32 %v3813, %v3956
    %v3958 = vpop.f32.mrb[0].mxu0
    %3959 = vdwg.mxu0
    %v3960 = vadd.f32 %v3461, %v3946
    %v3961 = vadd.f32 %v3462, %v3949
    %v3962 = vadd.f32 %v3463, %v3954
    %v3963 = vadd.f32 %v3464, %v3957
    %v3964 = vld [vmem:[%s16] sm:$0x1]
    %v3965 = vld [vmem:[%s17] sm:$0x1]
    %3966 = vadd.xlane.f32.xlu0 %v3960
    %v3967 = vpop.xlane.xlu0 %3966
    %3968 = vadd.xlane.f32.xlu0 %v3961
    %v3969 = vpop.xlane.xlu0 %3968
    %3970 = vadd.xlane.f32.xlu0 %v3962
    %v3971 = vpop.xlane.xlu0 %3970
    %3972 = vadd.xlane.f32.xlu0 %v3963
    %v3973 = vpop.xlane.xlu0 %3972
    %v3974 = vmul.f32 %v3967, %v258
    %v3975 = vmul.f32 %v3969, %v258
    %v3976 = vmul.f32 %v3971, %v258
    %v3977 = vmul.f32 %v3973, %v258
    %v3978 = vsub.f32 %v3960, %v3974
    %v3979 = vsub.f32 %v3961, %v3975
    %v3980 = vsub.f32 %v3962, %v3976
    %v3981 = vsub.f32 %v3963, %v3977
    %v3982 = vmul.f32 %v3978, %v3978
    %v3983 = vmul.f32 %v3979, %v3979
    %v3984 = vmul.f32 %v3980, %v3980
    %v3985 = vmul.f32 %v3981, %v3981
    %3986 = vadd.xlane.f32.xlu0 %v3982
    %v3987 = vpop.xlane.xlu0 %3986
    %3988 = vadd.xlane.f32.xlu0 %v3983
    %v3989 = vpop.xlane.xlu0 %3988
    %3990 = vadd.xlane.f32.xlu0 %v3984
    %v3991 = vpop.xlane.xlu0 %3990
    %3992 = vadd.xlane.f32.xlu0 %v3985
    %v3993 = vpop.xlane.xlu0 %3992
    %v3994 = vmul.f32 %v3987, %v258
    %v3995 = vmul.f32 %v3989, %v258
    %v3996 = vmul.f32 %v3991, %v258
    %v3997 = vmul.f32 %v3993, %v258
    %v3998 = vadd.f32 %v3994, 1e-06
    %v3999 = vadd.f32 %v3995, 1e-06
    %v4000 = vadd.f32 %v3996, 1e-06
    %v4001 = vadd.f32 %v3997, 1e-06
    %v4002 = vrsqrt.pop %v3998
    %v4003 = vrsqrt.pop %v3999
    %v4004 = vrsqrt.pop %v4000
    %v4005 = vrsqrt.pop %v4001
    %v4006 = vmul.f32 %v3978, %v4002
    %v4007 = vmul.f32 %v3979, %v4003
    %v4008 = vmul.f32 %v3980, %v4004
    %v4009 = vmul.f32 %v3981, %v4005
    %v4011 = vlaneseq
    %v4012 = vshrl.u32 %v4011, 7
    %v4013 = vsub.s32 0, %v4012
    %v4014 = vrot.slane %v3964, %v4013
    %v4016 = vmul.f32 %v4006, %v4014
    %v4017 = vmul.f32 %v4007, %v4014
    %v4018 = vmul.f32 %v4008, %v4014
    %v4019 = vmul.f32 %v4009, %v4014
    %v4021 = vlaneseq
    %v4022 = vshrl.u32 %v4021, 7
    %v4023 = vsub.s32 0, %v4022
    %v4024 = vrot.slane %v3965, %v4023
    %v4026 = vadd.f32 %v4016, %v4024
    %v4027 = vadd.f32 %v4017, %v4024
    %v4028 = vadd.f32 %v4018, %v4024
    %v4029 = vadd.f32 %v4019, %v4024
    %4030 = vst [vmem:[#allocation2] sm:$0xff] %v4026
    %4031 = vst [vmem:[#allocation2 + $0x8] sm:$0xff] %v4027
    %4032 = vst [vmem:[#allocation2 + $0x10] sm:$0xff] %v4028
    %4033 = vst [vmem:[#allocation2 + $0x18] sm:$0xff] %v4029
    // Predicated region
    $region74: #{siglip_vision_transformer.1} parent=1 // pred_check
      _
    $region75: #{siglip_vision_transformer.1} parent=1 // pred_check_branch
      %4035 = sbr.rel (0) target = $region77
    $region76: #{siglip_vision_transformer.1} parent=1 // pred_region
      %s4037 = ssub.s32 512, 512
      %4038 = vsyncadd [#allocation3], %s4037
      %s4039 = sshll.u32 [#allocation2], 4
      %s4040 = int_to_ptr.vmem [resolvable:$true] %s4039
      %4045 = dma.vmem_to_hbm [thread:$0]  %s4040, 512, %s18, [#allocation3], 128, 128, 8
    $region77: #{siglip_vision_transformer.1} parent=1 // pred_fallthru
      _
    // Predicated region
    $region78: #{siglip_vision_transformer.1} parent=1 // pred_check
      _
    $region79: #{siglip_vision_transformer.1} parent=1 // pred_check_branch
      %4047 = sbr.rel (0) target = $region81
    $region80: #{siglip_vision_transformer.1} parent=1 // pred_region
      %4048 = dma.done [#allocation3], 512
    $region81: #{siglip_vision_transformer.1} parent=1 // pred_fallthru
      _
    %4049 = vsyncpa [#allocation3], 1

</llo_original>
